<compile_context>
chip_gen: v7x
topology: tpu7x:2x2x1
jax: 0.10.0
libtpu: 0.0.40
codegen_flags: <defaults>
</compile_context>

<pallas_src>
import jax
import jax.numpy as jnp
from jax import lax
from jax.experimental import pallas as pl
from jax.experimental.pallas import tpu as pltpu

KH = KW = 3  # 3x3 "same" convolution


def _conv3x3_l1_kernel(xpad_ref, gt_ref, w_ref, b_ref, out_ref, loss_ref):
    """Single-invocation kernel (no grid; everything resident in VMEM/SMEM).

    xpad_ref : (B, Cin, H+2, W+2)  zero-padded input, VMEM (NCHW as-is + halo)
    gt_ref   : (B, Cout, H, W)     ground truth, VMEM (NCHW as-is)
    w_ref    : (9*Cin*Cout,)       conv weights, SMEM scalars,
                                   flat index = ((kh*3+kw)*Cin + ci)*Cout + co
    b_ref    : (Cout,)             conv bias, SMEM scalars
    out_ref  : (B, Cout, H, W)     conv output, VMEM (native NCHW)
    loss_ref : (1, 1)              mean L1 loss, VMEM
    """
    B, Cin, Hp, Wp = xpad_ref.shape
    H = Hp - (KH - 1)
    W = Wp - (KW - 1)
    Cout = out_ref.shape[1]

    # f32 accumulators, one per output channel.  VPU broadcast-FMA conv: the
    # MXU would be <2% occupied at Cout=4 / K=36, so stay off it entirely.
    accs = [jnp.zeros((B, 1, H, W), dtype=jnp.float32) for _ in range(Cout)]

    # In-kernel im2col: 9*Cin shifted windows of the padded input (static
    # slices, unrolled at trace time); each tap is reused for all Cout.
    for kh in range(KH):
        for kw in range(KW):
            for ci in range(Cin):
                tap = xpad_ref[:, ci:ci + 1, kh:kh + H, kw:kw + W].astype(jnp.float32)
                base = ((kh * KW + kw) * Cin + ci) * Cout
                for co in range(Cout):
                    accs[co] = accs[co] + w_ref[base + co] * tap

    # Bias, store in native NCHW (no wrapper-side transpose needed), and
    # accumulate per-channel partial L1 sums.
    l1 = jnp.float32(0.0)
    for co in range(Cout):
        out_co = (accs[co] + b_ref[co]).astype(out_ref.dtype)
        out_ref[:, co:co + 1, :, :] = out_co
        diff = out_co.astype(jnp.float32) - gt_ref[:, co:co + 1, :, :].astype(jnp.float32)
        l1 = l1 + jnp.sum(jnp.abs(diff))

    inv_total = 1.0 / float(B * Cout * H * W)
    loss_ref[...] = jnp.zeros((1, 1), jnp.float32) + l1 * inv_total


def conv_l1_forward(img_nchw, gt_nchw, weight, bias):
    """img_nchw, gt_nchw: (B, C, H, W) f32.  weight: (3,3,Cin,Cout) HWIO.  bias: (Cout,)."""
    B, C, H, W = img_nchw.shape
    Cout = weight.shape[-1]

    # Only wrapper-side data op: zero-pad H/W by 1 for the 3x3 "same" halo.
    # (Pass the padded input once; no 9x im2col expansion through HBM.)
    xpad = jnp.pad(img_nchw, ((0, 0), (0, 0), (1, 1), (1, 1)))

    # Scalars for SMEM: flat weight order ((kh*3+kw)*Cin+ci)*Cout+co, bias as-is.
    w_flat = weight.reshape(-1).astype(jnp.float32)
    b = bias.astype(jnp.float32)

    out_nchw, loss = pl.pallas_call(
        _conv3x3_l1_kernel,
        out_shape=(
            jax.ShapeDtypeStruct((B, Cout, H, W), img_nchw.dtype),
            jax.ShapeDtypeStruct((1, 1), jnp.float32),
        ),
        in_specs=[
            pl.BlockSpec(memory_space=pltpu.MemorySpace.VMEM),   # padded input
            pl.BlockSpec(memory_space=pltpu.MemorySpace.VMEM),   # ground truth (NCHW)
            pl.BlockSpec(memory_space=pltpu.MemorySpace.SMEM),   # conv weights (scalars)
            pl.BlockSpec(memory_space=pltpu.MemorySpace.SMEM),   # conv bias (scalars)
        ],
        out_specs=(
            pl.BlockSpec(memory_space=pltpu.MemorySpace.VMEM),   # conv output (NCHW)
            pl.BlockSpec(memory_space=pltpu.MemorySpace.VMEM),   # loss (1,1)
        ),
    )(xpad, gt_nchw, w_flat, b)

    # Model.forward() returns only the loss; the NCHW conv output is returned
    # too (no post-processing needed) purely for correctness checking.
    return loss[0, 0], out_nchw


def _reference(img_nchw, gt_nchw, weight, bias):
    """Plain-JAX reference for correctness checking."""
    out = lax.conv_general_dilated(
        img_nchw, weight, window_strides=(1, 1), padding="SAME",
        dimension_numbers=("NCHW", "HWIO", "NCHW"))
    out = out + bias.reshape(1, -1, 1, 1)
    loss = jnp.mean(jnp.abs(out - gt_nchw))
    return loss, out


if __name__ == "__main__":
    key = jax.random.PRNGKey(0)
    k_img, k_gt, k_w, k_b = jax.random.split(key, 4)

    B, C, H, W = 2, 4, 16, 16

    img = jax.random.normal(k_img, (B, C, H, W), dtype=jnp.float32)
    img_gt = jax.random.normal(k_gt, (B, C, H, W), dtype=jnp.float32)

    # weights_init_normal: conv weights ~ N(0, 0.02), bias = 0
    weight = 0.02 * jax.random.normal(k_w, (3, 3, C, C), dtype=jnp.float32)
    bias = jnp.zeros((C,), dtype=jnp.float32)

    loss, out = jax.jit(conv_l1_forward)(img, img_gt, weight, bias)
    jax.block_until_ready(loss)
    jax.block_until_ready(out)

    ref_loss, ref_out = _reference(img, img_gt, weight, bias)
    assert jnp.allclose(out, ref_out, atol=1e-4, rtol=1e-4), "conv mismatch"
    assert jnp.allclose(loss, ref_loss, atol=1e-5, rtol=1e-5), "loss mismatch"

    print("KERNEL_OK")
</pallas_src>

<mosaic_0001>
module attributes {stable_mosaic.version = 11 : i64} {
  func.func @_conv3x3_l1_kernel(%arg0: memref<2x4x18x18xf32, #tpu.memory_space<vmem>>, %arg1: memref<2x4x16x16xf32, #tpu.memory_space<vmem>>, %arg2: memref<144xf32, #tpu.memory_space<smem>>, %arg3: memref<4xf32, #tpu.memory_space<smem>>, %arg4: memref<2x4x16x16xf32, #tpu.memory_space<vmem>>, %arg5: memref<1x1xf32, #tpu.memory_space<vmem>>) attributes {dimension_semantics = [], scalar_prefetch = 0 : i64, scratch_operands = 0 : i64, tpu.core_type = #tpu.core_type<tc>} {
    %cst = arith.constant 0.000000e+00 : f32
    %0 = vector.broadcast %cst : f32 to vector<2x1x16x16xf32>
    %cst_0 = arith.constant 0.000000e+00 : f32
    %1 = vector.broadcast %cst_0 : f32 to vector<2x1x16x16xf32>
    %cst_1 = arith.constant 0.000000e+00 : f32
    %2 = vector.broadcast %cst_1 : f32 to vector<2x1x16x16xf32>
    %cst_2 = arith.constant 0.000000e+00 : f32
    %3 = vector.broadcast %cst_2 : f32 to vector<2x1x16x16xf32>
    %c0 = arith.constant 0 : index
    %c0_3 = arith.constant 0 : index
    %c0_4 = arith.constant 0 : index
    %c0_5 = arith.constant 0 : index
    %4 = vector.load %arg0[%c0, %c0_3, %c0_4, %c0_5] : memref<2x4x18x18xf32, #tpu.memory_space<vmem>>, vector<2x1x16x16xf32>
    %c0_6 = arith.constant 0 : index
    %5 = memref.load %arg2[%c0_6] : memref<144xf32, #tpu.memory_space<smem>>
    %6 = vector.broadcast %5 : f32 to vector<2x1x16x16xf32>
    %7 = arith.mulf %6, %4 : vector<2x1x16x16xf32>
    %8 = arith.addf %0, %7 : vector<2x1x16x16xf32>
    %c1 = arith.constant 1 : index
    %9 = memref.load %arg2[%c1] : memref<144xf32, #tpu.memory_space<smem>>
    %10 = vector.broadcast %9 : f32 to vector<2x1x16x16xf32>
    %11 = arith.mulf %10, %4 : vector<2x1x16x16xf32>
    %12 = arith.addf %1, %11 : vector<2x1x16x16xf32>
    %c2 = arith.constant 2 : index
    %13 = memref.load %arg2[%c2] : memref<144xf32, #tpu.memory_space<smem>>
    %14 = vector.broadcast %13 : f32 to vector<2x1x16x16xf32>
    %15 = arith.mulf %14, %4 : vector<2x1x16x16xf32>
    %16 = arith.addf %2, %15 : vector<2x1x16x16xf32>
    %c3 = arith.constant 3 : index
    %17 = memref.load %arg2[%c3] : memref<144xf32, #tpu.memory_space<smem>>
    %18 = vector.broadcast %17 : f32 to vector<2x1x16x16xf32>
    %19 = arith.mulf %18, %4 : vector<2x1x16x16xf32>
    %20 = arith.addf %3, %19 : vector<2x1x16x16xf32>
    %c0_7 = arith.constant 0 : index
    %c1_8 = arith.constant 1 : index
    %c0_9 = arith.constant 0 : index
    %c0_10 = arith.constant 0 : index
    %21 = vector.load %arg0[%c0_7, %c1_8, %c0_9, %c0_10] : memref<2x4x18x18xf32, #tpu.memory_space<vmem>>, vector<2x1x16x16xf32>
    %c4 = arith.constant 4 : index
    %22 = memref.load %arg2[%c4] : memref<144xf32, #tpu.memory_space<smem>>
    %23 = vector.broadcast %22 : f32 to vector<2x1x16x16xf32>
    %24 = arith.mulf %23, %21 : vector<2x1x16x16xf32>
    %25 = arith.addf %8, %24 : vector<2x1x16x16xf32>
    %c5 = arith.constant 5 : index
    %26 = memref.load %arg2[%c5] : memref<144xf32, #tpu.memory_space<smem>>
    %27 = vector.broadcast %26 : f32 to vector<2x1x16x16xf32>
    %28 = arith.mulf %27, %21 : vector<2x1x16x16xf32>
    %29 = arith.addf %12, %28 : vector<2x1x16x16xf32>
    %c6 = arith.constant 6 : index
    %30 = memref.load %arg2[%c6] : memref<144xf32, #tpu.memory_space<smem>>
    %31 = vector.broadcast %30 : f32 to vector<2x1x16x16xf32>
    %32 = arith.mulf %31, %21 : vector<2x1x16x16xf32>
    %33 = arith.addf %16, %32 : vector<2x1x16x16xf32>
    %c7 = arith.constant 7 : index
    %34 = memref.load %arg2[%c7] : memref<144xf32, #tpu.memory_space<smem>>
    %35 = vector.broadcast %34 : f32 to vector<2x1x16x16xf32>
    %36 = arith.mulf %35, %21 : vector<2x1x16x16xf32>
    %37 = arith.addf %20, %36 : vector<2x1x16x16xf32>
    %c0_11 = arith.constant 0 : index
    %c2_12 = arith.constant 2 : index
    %c0_13 = arith.constant 0 : index
    %c0_14 = arith.constant 0 : index
    %38 = vector.load %arg0[%c0_11, %c2_12, %c0_13, %c0_14] : memref<2x4x18x18xf32, #tpu.memory_space<vmem>>, vector<2x1x16x16xf32>
    %c8 = arith.constant 8 : index
    %39 = memref.load %arg2[%c8] : memref<144xf32, #tpu.memory_space<smem>>
    %40 = vector.broadcast %39 : f32 to vector<2x1x16x16xf32>
    %41 = arith.mulf %40, %38 : vector<2x1x16x16xf32>
    %42 = arith.addf %25, %41 : vector<2x1x16x16xf32>
    %c9 = arith.constant 9 : index
    %43 = memref.load %arg2[%c9] : memref<144xf32, #tpu.memory_space<smem>>
    %44 = vector.broadcast %43 : f32 to vector<2x1x16x16xf32>
    %45 = arith.mulf %44, %38 : vector<2x1x16x16xf32>
    %46 = arith.addf %29, %45 : vector<2x1x16x16xf32>
    %c10 = arith.constant 10 : index
    %47 = memref.load %arg2[%c10] : memref<144xf32, #tpu.memory_space<smem>>
    %48 = vector.broadcast %47 : f32 to vector<2x1x16x16xf32>
    %49 = arith.mulf %48, %38 : vector<2x1x16x16xf32>
    %50 = arith.addf %33, %49 : vector<2x1x16x16xf32>
    %c11 = arith.constant 11 : index
    %51 = memref.load %arg2[%c11] : memref<144xf32, #tpu.memory_space<smem>>
    %52 = vector.broadcast %51 : f32 to vector<2x1x16x16xf32>
    %53 = arith.mulf %52, %38 : vector<2x1x16x16xf32>
    %54 = arith.addf %37, %53 : vector<2x1x16x16xf32>
    %c0_15 = arith.constant 0 : index
    %c3_16 = arith.constant 3 : index
    %c0_17 = arith.constant 0 : index
    %c0_18 = arith.constant 0 : index
    %55 = vector.load %arg0[%c0_15, %c3_16, %c0_17, %c0_18] : memref<2x4x18x18xf32, #tpu.memory_space<vmem>>, vector<2x1x16x16xf32>
    %c12 = arith.constant 12 : index
    %56 = memref.load %arg2[%c12] : memref<144xf32, #tpu.memory_space<smem>>
    %57 = vector.broadcast %56 : f32 to vector<2x1x16x16xf32>
    %58 = arith.mulf %57, %55 : vector<2x1x16x16xf32>
    %59 = arith.addf %42, %58 : vector<2x1x16x16xf32>
    %c13 = arith.constant 13 : index
    %60 = memref.load %arg2[%c13] : memref<144xf32, #tpu.memory_space<smem>>
    %61 = vector.broadcast %60 : f32 to vector<2x1x16x16xf32>
    %62 = arith.mulf %61, %55 : vector<2x1x16x16xf32>
    %63 = arith.addf %46, %62 : vector<2x1x16x16xf32>
    %c14 = arith.constant 14 : index
    %64 = memref.load %arg2[%c14] : memref<144xf32, #tpu.memory_space<smem>>
    %65 = vector.broadcast %64 : f32 to vector<2x1x16x16xf32>
    %66 = arith.mulf %65, %55 : vector<2x1x16x16xf32>
    %67 = arith.addf %50, %66 : vector<2x1x16x16xf32>
    %c15 = arith.constant 15 : index
    %68 = memref.load %arg2[%c15] : memref<144xf32, #tpu.memory_space<smem>>
    %69 = vector.broadcast %68 : f32 to vector<2x1x16x16xf32>
    %70 = arith.mulf %69, %55 : vector<2x1x16x16xf32>
    %71 = arith.addf %54, %70 : vector<2x1x16x16xf32>
    %c0_19 = arith.constant 0 : index
    %c0_20 = arith.constant 0 : index
    %c0_21 = arith.constant 0 : index
    %c1_22 = arith.constant 1 : index
    %72 = vector.load %arg0[%c0_19, %c0_20, %c0_21, %c1_22] : memref<2x4x18x18xf32, #tpu.memory_space<vmem>>, vector<2x1x16x16xf32>
    %c16 = arith.constant 16 : index
    %73 = memref.load %arg2[%c16] : memref<144xf32, #tpu.memory_space<smem>>
    %74 = vector.broadcast %73 : f32 to vector<2x1x16x16xf32>
    %75 = arith.mulf %74, %72 : vector<2x1x16x16xf32>
    %76 = arith.addf %59, %75 : vector<2x1x16x16xf32>
    %c17 = arith.constant 17 : index
    %77 = memref.load %arg2[%c17] : memref<144xf32, #tpu.memory_space<smem>>
    %78 = vector.broadcast %77 : f32 to vector<2x1x16x16xf32>
    %79 = arith.mulf %78, %72 : vector<2x1x16x16xf32>
    %80 = arith.addf %63, %79 : vector<2x1x16x16xf32>
    %c18 = arith.constant 18 : index
    %81 = memref.load %arg2[%c18] : memref<144xf32, #tpu.memory_space<smem>>
    %82 = vector.broadcast %81 : f32 to vector<2x1x16x16xf32>
    %83 = arith.mulf %82, %72 : vector<2x1x16x16xf32>
    %84 = arith.addf %67, %83 : vector<2x1x16x16xf32>
    %c19 = arith.constant 19 : index
    %85 = memref.load %arg2[%c19] : memref<144xf32, #tpu.memory_space<smem>>
    %86 = vector.broadcast %85 : f32 to vector<2x1x16x16xf32>
    %87 = arith.mulf %86, %72 : vector<2x1x16x16xf32>
    %88 = arith.addf %71, %87 : vector<2x1x16x16xf32>
    %c0_23 = arith.constant 0 : index
    %c1_24 = arith.constant 1 : index
    %c0_25 = arith.constant 0 : index
    %c1_26 = arith.constant 1 : index
    %89 = vector.load %arg0[%c0_23, %c1_24, %c0_25, %c1_26] : memref<2x4x18x18xf32, #tpu.memory_space<vmem>>, vector<2x1x16x16xf32>
    %c20 = arith.constant 20 : index
    %90 = memref.load %arg2[%c20] : memref<144xf32, #tpu.memory_space<smem>>
    %91 = vector.broadcast %90 : f32 to vector<2x1x16x16xf32>
    %92 = arith.mulf %91, %89 : vector<2x1x16x16xf32>
    %93 = arith.addf %76, %92 : vector<2x1x16x16xf32>
    %c21 = arith.constant 21 : index
    %94 = memref.load %arg2[%c21] : memref<144xf32, #tpu.memory_space<smem>>
    %95 = vector.broadcast %94 : f32 to vector<2x1x16x16xf32>
    %96 = arith.mulf %95, %89 : vector<2x1x16x16xf32>
    %97 = arith.addf %80, %96 : vector<2x1x16x16xf32>
    %c22 = arith.constant 22 : index
    %98 = memref.load %arg2[%c22] : memref<144xf32, #tpu.memory_space<smem>>
    %99 = vector.broadcast %98 : f32 to vector<2x1x16x16xf32>
    %100 = arith.mulf %99, %89 : vector<2x1x16x16xf32>
    %101 = arith.addf %84, %100 : vector<2x1x16x16xf32>
    %c23 = arith.constant 23 : index
    %102 = memref.load %arg2[%c23] : memref<144xf32, #tpu.memory_space<smem>>
    %103 = vector.broadcast %102 : f32 to vector<2x1x16x16xf32>
    %104 = arith.mulf %103, %89 : vector<2x1x16x16xf32>
    %105 = arith.addf %88, %104 : vector<2x1x16x16xf32>
    %c0_27 = arith.constant 0 : index
    %c2_28 = arith.constant 2 : index
    %c0_29 = arith.constant 0 : index
    %c1_30 = arith.constant 1 : index
    %106 = vector.load %arg0[%c0_27, %c2_28, %c0_29, %c1_30] : memref<2x4x18x18xf32, #tpu.memory_space<vmem>>, vector<2x1x16x16xf32>
    %c24 = arith.constant 24 : index
    %107 = memref.load %arg2[%c24] : memref<144xf32, #tpu.memory_space<smem>>
    %108 = vector.broadcast %107 : f32 to vector<2x1x16x16xf32>
    %109 = arith.mulf %108, %106 : vector<2x1x16x16xf32>
    %110 = arith.addf %93, %109 : vector<2x1x16x16xf32>
    %c25 = arith.constant 25 : index
    %111 = memref.load %arg2[%c25] : memref<144xf32, #tpu.memory_space<smem>>
    %112 = vector.broadcast %111 : f32 to vector<2x1x16x16xf32>
    %113 = arith.mulf %112, %106 : vector<2x1x16x16xf32>
    %114 = arith.addf %97, %113 : vector<2x1x16x16xf32>
    %c26 = arith.constant 26 : index
    %115 = memref.load %arg2[%c26] : memref<144xf32, #tpu.memory_space<smem>>
    %116 = vector.broadcast %115 : f32 to vector<2x1x16x16xf32>
    %117 = arith.mulf %116, %106 : vector<2x1x16x16xf32>
    %118 = arith.addf %101, %117 : vector<2x1x16x16xf32>
    %c27 = arith.constant 27 : index
    %119 = memref.load %arg2[%c27] : memref<144xf32, #tpu.memory_space<smem>>
    %120 = vector.broadcast %119 : f32 to vector<2x1x16x16xf32>
    %121 = arith.mulf %120, %106 : vector<2x1x16x16xf32>
    %122 = arith.addf %105, %121 : vector<2x1x16x16xf32>
    %c0_31 = arith.constant 0 : index
    %c3_32 = arith.constant 3 : index
    %c0_33 = arith.constant 0 : index
    %c1_34 = arith.constant 1 : index
    %123 = vector.load %arg0[%c0_31, %c3_32, %c0_33, %c1_34] : memref<2x4x18x18xf32, #tpu.memory_space<vmem>>, vector<2x1x16x16xf32>
    %c28 = arith.constant 28 : index
    %124 = memref.load %arg2[%c28] : memref<144xf32, #tpu.memory_space<smem>>
    %125 = vector.broadcast %124 : f32 to vector<2x1x16x16xf32>
    %126 = arith.mulf %125, %123 : vector<2x1x16x16xf32>
    %127 = arith.addf %110, %126 : vector<2x1x16x16xf32>
    %c29 = arith.constant 29 : index
    %128 = memref.load %arg2[%c29] : memref<144xf32, #tpu.memory_space<smem>>
    %129 = vector.broadcast %128 : f32 to vector<2x1x16x16xf32>
    %130 = arith.mulf %129, %123 : vector<2x1x16x16xf32>
    %131 = arith.addf %114, %130 : vector<2x1x16x16xf32>
    %c30 = arith.constant 30 : index
    %132 = memref.load %arg2[%c30] : memref<144xf32, #tpu.memory_space<smem>>
    %133 = vector.broadcast %132 : f32 to vector<2x1x16x16xf32>
    %134 = arith.mulf %133, %123 : vector<2x1x16x16xf32>
    %135 = arith.addf %118, %134 : vector<2x1x16x16xf32>
    %c31 = arith.constant 31 : index
    %136 = memref.load %arg2[%c31] : memref<144xf32, #tpu.memory_space<smem>>
    %137 = vector.broadcast %136 : f32 to vector<2x1x16x16xf32>
    %138 = arith.mulf %137, %123 : vector<2x1x16x16xf32>
    %139 = arith.addf %122, %138 : vector<2x1x16x16xf32>
    %c0_35 = arith.constant 0 : index
    %c0_36 = arith.constant 0 : index
    %c0_37 = arith.constant 0 : index
    %c2_38 = arith.constant 2 : index
    %140 = vector.load %arg0[%c0_35, %c0_36, %c0_37, %c2_38] : memref<2x4x18x18xf32, #tpu.memory_space<vmem>>, vector<2x1x16x16xf32>
    %c32 = arith.constant 32 : index
    %141 = memref.load %arg2[%c32] : memref<144xf32, #tpu.memory_space<smem>>
    %142 = vector.broadcast %141 : f32 to vector<2x1x16x16xf32>
    %143 = arith.mulf %142, %140 : vector<2x1x16x16xf32>
    %144 = arith.addf %127, %143 : vector<2x1x16x16xf32>
    %c33 = arith.constant 33 : index
    %145 = memref.load %arg2[%c33] : memref<144xf32, #tpu.memory_space<smem>>
    %146 = vector.broadcast %145 : f32 to vector<2x1x16x16xf32>
    %147 = arith.mulf %146, %140 : vector<2x1x16x16xf32>
    %148 = arith.addf %131, %147 : vector<2x1x16x16xf32>
    %c34 = arith.constant 34 : index
    %149 = memref.load %arg2[%c34] : memref<144xf32, #tpu.memory_space<smem>>
    %150 = vector.broadcast %149 : f32 to vector<2x1x16x16xf32>
    %151 = arith.mulf %150, %140 : vector<2x1x16x16xf32>
    %152 = arith.addf %135, %151 : vector<2x1x16x16xf32>
    %c35 = arith.constant 35 : index
    %153 = memref.load %arg2[%c35] : memref<144xf32, #tpu.memory_space<smem>>
    %154 = vector.broadcast %153 : f32 to vector<2x1x16x16xf32>
    %155 = arith.mulf %154, %140 : vector<2x1x16x16xf32>
    %156 = arith.addf %139, %155 : vector<2x1x16x16xf32>
    %c0_39 = arith.constant 0 : index
    %c1_40 = arith.constant 1 : index
    %c0_41 = arith.constant 0 : index
    %c2_42 = arith.constant 2 : index
    %157 = vector.load %arg0[%c0_39, %c1_40, %c0_41, %c2_42] : memref<2x4x18x18xf32, #tpu.memory_space<vmem>>, vector<2x1x16x16xf32>
    %c36 = arith.constant 36 : index
    %158 = memref.load %arg2[%c36] : memref<144xf32, #tpu.memory_space<smem>>
    %159 = vector.broadcast %158 : f32 to vector<2x1x16x16xf32>
    %160 = arith.mulf %159, %157 : vector<2x1x16x16xf32>
    %161 = arith.addf %144, %160 : vector<2x1x16x16xf32>
    %c37 = arith.constant 37 : index
    %162 = memref.load %arg2[%c37] : memref<144xf32, #tpu.memory_space<smem>>
    %163 = vector.broadcast %162 : f32 to vector<2x1x16x16xf32>
    %164 = arith.mulf %163, %157 : vector<2x1x16x16xf32>
    %165 = arith.addf %148, %164 : vector<2x1x16x16xf32>
    %c38 = arith.constant 38 : index
    %166 = memref.load %arg2[%c38] : memref<144xf32, #tpu.memory_space<smem>>
    %167 = vector.broadcast %166 : f32 to vector<2x1x16x16xf32>
    %168 = arith.mulf %167, %157 : vector<2x1x16x16xf32>
    %169 = arith.addf %152, %168 : vector<2x1x16x16xf32>
    %c39 = arith.constant 39 : index
    %170 = memref.load %arg2[%c39] : memref<144xf32, #tpu.memory_space<smem>>
    %171 = vector.broadcast %170 : f32 to vector<2x1x16x16xf32>
    %172 = arith.mulf %171, %157 : vector<2x1x16x16xf32>
    %173 = arith.addf %156, %172 : vector<2x1x16x16xf32>
    %c0_43 = arith.constant 0 : index
    %c2_44 = arith.constant 2 : index
    %c0_45 = arith.constant 0 : index
    %c2_46 = arith.constant 2 : index
    %174 = vector.load %arg0[%c0_43, %c2_44, %c0_45, %c2_46] : memref<2x4x18x18xf32, #tpu.memory_space<vmem>>, vector<2x1x16x16xf32>
    %c40 = arith.constant 40 : index
    %175 = memref.load %arg2[%c40] : memref<144xf32, #tpu.memory_space<smem>>
    %176 = vector.broadcast %175 : f32 to vector<2x1x16x16xf32>
    %177 = arith.mulf %176, %174 : vector<2x1x16x16xf32>
    %178 = arith.addf %161, %177 : vector<2x1x16x16xf32>
    %c41 = arith.constant 41 : index
    %179 = memref.load %arg2[%c41] : memref<144xf32, #tpu.memory_space<smem>>
    %180 = vector.broadcast %179 : f32 to vector<2x1x16x16xf32>
    %181 = arith.mulf %180, %174 : vector<2x1x16x16xf32>
    %182 = arith.addf %165, %181 : vector<2x1x16x16xf32>
    %c42 = arith.constant 42 : index
    %183 = memref.load %arg2[%c42] : memref<144xf32, #tpu.memory_space<smem>>
    %184 = vector.broadcast %183 : f32 to vector<2x1x16x16xf32>
    %185 = arith.mulf %184, %174 : vector<2x1x16x16xf32>
    %186 = arith.addf %169, %185 : vector<2x1x16x16xf32>
    %c43 = arith.constant 43 : index
    %187 = memref.load %arg2[%c43] : memref<144xf32, #tpu.memory_space<smem>>
    %188 = vector.broadcast %187 : f32 to vector<2x1x16x16xf32>
    %189 = arith.mulf %188, %174 : vector<2x1x16x16xf32>
    %190 = arith.addf %173, %189 : vector<2x1x16x16xf32>
    %c0_47 = arith.constant 0 : index
    %c3_48 = arith.constant 3 : index
    %c0_49 = arith.constant 0 : index
    %c2_50 = arith.constant 2 : index
    %191 = vector.load %arg0[%c0_47, %c3_48, %c0_49, %c2_50] : memref<2x4x18x18xf32, #tpu.memory_space<vmem>>, vector<2x1x16x16xf32>
    %c44 = arith.constant 44 : index
    %192 = memref.load %arg2[%c44] : memref<144xf32, #tpu.memory_space<smem>>
    %193 = vector.broadcast %192 : f32 to vector<2x1x16x16xf32>
    %194 = arith.mulf %193, %191 : vector<2x1x16x16xf32>
    %195 = arith.addf %178, %194 : vector<2x1x16x16xf32>
    %c45 = arith.constant 45 : index
    %196 = memref.load %arg2[%c45] : memref<144xf32, #tpu.memory_space<smem>>
    %197 = vector.broadcast %196 : f32 to vector<2x1x16x16xf32>
    %198 = arith.mulf %197, %191 : vector<2x1x16x16xf32>
    %199 = arith.addf %182, %198 : vector<2x1x16x16xf32>
    %c46 = arith.constant 46 : index
    %200 = memref.load %arg2[%c46] : memref<144xf32, #tpu.memory_space<smem>>
    %201 = vector.broadcast %200 : f32 to vector<2x1x16x16xf32>
    %202 = arith.mulf %201, %191 : vector<2x1x16x16xf32>
    %203 = arith.addf %186, %202 : vector<2x1x16x16xf32>
    %c47 = arith.constant 47 : index
    %204 = memref.load %arg2[%c47] : memref<144xf32, #tpu.memory_space<smem>>
    %205 = vector.broadcast %204 : f32 to vector<2x1x16x16xf32>
    %206 = arith.mulf %205, %191 : vector<2x1x16x16xf32>
    %207 = arith.addf %190, %206 : vector<2x1x16x16xf32>
    %c0_51 = arith.constant 0 : index
    %c0_52 = arith.constant 0 : index
    %c1_53 = arith.constant 1 : index
    %c0_54 = arith.constant 0 : index
    %208 = vector.load %arg0[%c0_51, %c0_52, %c1_53, %c0_54] : memref<2x4x18x18xf32, #tpu.memory_space<vmem>>, vector<2x1x16x16xf32>
    %c48 = arith.constant 48 : index
    %209 = memref.load %arg2[%c48] : memref<144xf32, #tpu.memory_space<smem>>
    %210 = vector.broadcast %209 : f32 to vector<2x1x16x16xf32>
    %211 = arith.mulf %210, %208 : vector<2x1x16x16xf32>
    %212 = arith.addf %195, %211 : vector<2x1x16x16xf32>
    %c49 = arith.constant 49 : index
    %213 = memref.load %arg2[%c49] : memref<144xf32, #tpu.memory_space<smem>>
    %214 = vector.broadcast %213 : f32 to vector<2x1x16x16xf32>
    %215 = arith.mulf %214, %208 : vector<2x1x16x16xf32>
    %216 = arith.addf %199, %215 : vector<2x1x16x16xf32>
    %c50 = arith.constant 50 : index
    %217 = memref.load %arg2[%c50] : memref<144xf32, #tpu.memory_space<smem>>
    %218 = vector.broadcast %217 : f32 to vector<2x1x16x16xf32>
    %219 = arith.mulf %218, %208 : vector<2x1x16x16xf32>
    %220 = arith.addf %203, %219 : vector<2x1x16x16xf32>
    %c51 = arith.constant 51 : index
    %221 = memref.load %arg2[%c51] : memref<144xf32, #tpu.memory_space<smem>>
    %222 = vector.broadcast %221 : f32 to vector<2x1x16x16xf32>
    %223 = arith.mulf %222, %208 : vector<2x1x16x16xf32>
    %224 = arith.addf %207, %223 : vector<2x1x16x16xf32>
    %c0_55 = arith.constant 0 : index
    %c1_56 = arith.constant 1 : index
    %c1_57 = arith.constant 1 : index
    %c0_58 = arith.constant 0 : index
    %225 = vector.load %arg0[%c0_55, %c1_56, %c1_57, %c0_58] : memref<2x4x18x18xf32, #tpu.memory_space<vmem>>, vector<2x1x16x16xf32>
    %c52 = arith.constant 52 : index
    %226 = memref.load %arg2[%c52] : memref<144xf32, #tpu.memory_space<smem>>
    %227 = vector.broadcast %226 : f32 to vector<2x1x16x16xf32>
    %228 = arith.mulf %227, %225 : vector<2x1x16x16xf32>
    %229 = arith.addf %212, %228 : vector<2x1x16x16xf32>
    %c53 = arith.constant 53 : index
    %230 = memref.load %arg2[%c53] : memref<144xf32, #tpu.memory_space<smem>>
    %231 = vector.broadcast %230 : f32 to vector<2x1x16x16xf32>
    %232 = arith.mulf %231, %225 : vector<2x1x16x16xf32>
    %233 = arith.addf %216, %232 : vector<2x1x16x16xf32>
    %c54 = arith.constant 54 : index
    %234 = memref.load %arg2[%c54] : memref<144xf32, #tpu.memory_space<smem>>
    %235 = vector.broadcast %234 : f32 to vector<2x1x16x16xf32>
    %236 = arith.mulf %235, %225 : vector<2x1x16x16xf32>
    %237 = arith.addf %220, %236 : vector<2x1x16x16xf32>
    %c55 = arith.constant 55 : index
    %238 = memref.load %arg2[%c55] : memref<144xf32, #tpu.memory_space<smem>>
    %239 = vector.broadcast %238 : f32 to vector<2x1x16x16xf32>
    %240 = arith.mulf %239, %225 : vector<2x1x16x16xf32>
    %241 = arith.addf %224, %240 : vector<2x1x16x16xf32>
    %c0_59 = arith.constant 0 : index
    %c2_60 = arith.constant 2 : index
    %c1_61 = arith.constant 1 : index
    %c0_62 = arith.constant 0 : index
    %242 = vector.load %arg0[%c0_59, %c2_60, %c1_61, %c0_62] : memref<2x4x18x18xf32, #tpu.memory_space<vmem>>, vector<2x1x16x16xf32>
    %c56 = arith.constant 56 : index
    %243 = memref.load %arg2[%c56] : memref<144xf32, #tpu.memory_space<smem>>
    %244 = vector.broadcast %243 : f32 to vector<2x1x16x16xf32>
    %245 = arith.mulf %244, %242 : vector<2x1x16x16xf32>
    %246 = arith.addf %229, %245 : vector<2x1x16x16xf32>
    %c57 = arith.constant 57 : index
    %247 = memref.load %arg2[%c57] : memref<144xf32, #tpu.memory_space<smem>>
    %248 = vector.broadcast %247 : f32 to vector<2x1x16x16xf32>
    %249 = arith.mulf %248, %242 : vector<2x1x16x16xf32>
    %250 = arith.addf %233, %249 : vector<2x1x16x16xf32>
    %c58 = arith.constant 58 : index
    %251 = memref.load %arg2[%c58] : memref<144xf32, #tpu.memory_space<smem>>
    %252 = vector.broadcast %251 : f32 to vector<2x1x16x16xf32>
    %253 = arith.mulf %252, %242 : vector<2x1x16x16xf32>
    %254 = arith.addf %237, %253 : vector<2x1x16x16xf32>
    %c59 = arith.constant 59 : index
    %255 = memref.load %arg2[%c59] : memref<144xf32, #tpu.memory_space<smem>>
    %256 = vector.broadcast %255 : f32 to vector<2x1x16x16xf32>
    %257 = arith.mulf %256, %242 : vector<2x1x16x16xf32>
    %258 = arith.addf %241, %257 : vector<2x1x16x16xf32>
    %c0_63 = arith.constant 0 : index
    %c3_64 = arith.constant 3 : index
    %c1_65 = arith.constant 1 : index
    %c0_66 = arith.constant 0 : index
    %259 = vector.load %arg0[%c0_63, %c3_64, %c1_65, %c0_66] : memref<2x4x18x18xf32, #tpu.memory_space<vmem>>, vector<2x1x16x16xf32>
    %c60 = arith.constant 60 : index
    %260 = memref.load %arg2[%c60] : memref<144xf32, #tpu.memory_space<smem>>
    %261 = vector.broadcast %260 : f32 to vector<2x1x16x16xf32>
    %262 = arith.mulf %261, %259 : vector<2x1x16x16xf32>
    %263 = arith.addf %246, %262 : vector<2x1x16x16xf32>
    %c61 = arith.constant 61 : index
    %264 = memref.load %arg2[%c61] : memref<144xf32, #tpu.memory_space<smem>>
    %265 = vector.broadcast %264 : f32 to vector<2x1x16x16xf32>
    %266 = arith.mulf %265, %259 : vector<2x1x16x16xf32>
    %267 = arith.addf %250, %266 : vector<2x1x16x16xf32>
    %c62 = arith.constant 62 : index
    %268 = memref.load %arg2[%c62] : memref<144xf32, #tpu.memory_space<smem>>
    %269 = vector.broadcast %268 : f32 to vector<2x1x16x16xf32>
    %270 = arith.mulf %269, %259 : vector<2x1x16x16xf32>
    %271 = arith.addf %254, %270 : vector<2x1x16x16xf32>
    %c63 = arith.constant 63 : index
    %272 = memref.load %arg2[%c63] : memref<144xf32, #tpu.memory_space<smem>>
    %273 = vector.broadcast %272 : f32 to vector<2x1x16x16xf32>
    %274 = arith.mulf %273, %259 : vector<2x1x16x16xf32>
    %275 = arith.addf %258, %274 : vector<2x1x16x16xf32>
    %c0_67 = arith.constant 0 : index
    %c0_68 = arith.constant 0 : index
    %c1_69 = arith.constant 1 : index
    %c1_70 = arith.constant 1 : index
    %276 = vector.load %arg0[%c0_67, %c0_68, %c1_69, %c1_70] : memref<2x4x18x18xf32, #tpu.memory_space<vmem>>, vector<2x1x16x16xf32>
    %c64 = arith.constant 64 : index
    %277 = memref.load %arg2[%c64] : memref<144xf32, #tpu.memory_space<smem>>
    %278 = vector.broadcast %277 : f32 to vector<2x1x16x16xf32>
    %279 = arith.mulf %278, %276 : vector<2x1x16x16xf32>
    %280 = arith.addf %263, %279 : vector<2x1x16x16xf32>
    %c65 = arith.constant 65 : index
    %281 = memref.load %arg2[%c65] : memref<144xf32, #tpu.memory_space<smem>>
    %282 = vector.broadcast %281 : f32 to vector<2x1x16x16xf32>
    %283 = arith.mulf %282, %276 : vector<2x1x16x16xf32>
    %284 = arith.addf %267, %283 : vector<2x1x16x16xf32>
    %c66 = arith.constant 66 : index
    %285 = memref.load %arg2[%c66] : memref<144xf32, #tpu.memory_space<smem>>
    %286 = vector.broadcast %285 : f32 to vector<2x1x16x16xf32>
    %287 = arith.mulf %286, %276 : vector<2x1x16x16xf32>
    %288 = arith.addf %271, %287 : vector<2x1x16x16xf32>
    %c67 = arith.constant 67 : index
    %289 = memref.load %arg2[%c67] : memref<144xf32, #tpu.memory_space<smem>>
    %290 = vector.broadcast %289 : f32 to vector<2x1x16x16xf32>
    %291 = arith.mulf %290, %276 : vector<2x1x16x16xf32>
    %292 = arith.addf %275, %291 : vector<2x1x16x16xf32>
    %c0_71 = arith.constant 0 : index
    %c1_72 = arith.constant 1 : index
    %c1_73 = arith.constant 1 : index
    %c1_74 = arith.constant 1 : index
    %293 = vector.load %arg0[%c0_71, %c1_72, %c1_73, %c1_74] : memref<2x4x18x18xf32, #tpu.memory_space<vmem>>, vector<2x1x16x16xf32>
    %c68 = arith.constant 68 : index
    %294 = memref.load %arg2[%c68] : memref<144xf32, #tpu.memory_space<smem>>
    %295 = vector.broadcast %294 : f32 to vector<2x1x16x16xf32>
    %296 = arith.mulf %295, %293 : vector<2x1x16x16xf32>
    %297 = arith.addf %280, %296 : vector<2x1x16x16xf32>
    %c69 = arith.constant 69 : index
    %298 = memref.load %arg2[%c69] : memref<144xf32, #tpu.memory_space<smem>>
    %299 = vector.broadcast %298 : f32 to vector<2x1x16x16xf32>
    %300 = arith.mulf %299, %293 : vector<2x1x16x16xf32>
    %301 = arith.addf %284, %300 : vector<2x1x16x16xf32>
    %c70 = arith.constant 70 : index
    %302 = memref.load %arg2[%c70] : memref<144xf32, #tpu.memory_space<smem>>
    %303 = vector.broadcast %302 : f32 to vector<2x1x16x16xf32>
    %304 = arith.mulf %303, %293 : vector<2x1x16x16xf32>
    %305 = arith.addf %288, %304 : vector<2x1x16x16xf32>
    %c71 = arith.constant 71 : index
    %306 = memref.load %arg2[%c71] : memref<144xf32, #tpu.memory_space<smem>>
    %307 = vector.broadcast %306 : f32 to vector<2x1x16x16xf32>
    %308 = arith.mulf %307, %293 : vector<2x1x16x16xf32>
    %309 = arith.addf %292, %308 : vector<2x1x16x16xf32>
    %c0_75 = arith.constant 0 : index
    %c2_76 = arith.constant 2 : index
    %c1_77 = arith.constant 1 : index
    %c1_78 = arith.constant 1 : index
    %310 = vector.load %arg0[%c0_75, %c2_76, %c1_77, %c1_78] : memref<2x4x18x18xf32, #tpu.memory_space<vmem>>, vector<2x1x16x16xf32>
    %c72 = arith.constant 72 : index
    %311 = memref.load %arg2[%c72] : memref<144xf32, #tpu.memory_space<smem>>
    %312 = vector.broadcast %311 : f32 to vector<2x1x16x16xf32>
    %313 = arith.mulf %312, %310 : vector<2x1x16x16xf32>
    %314 = arith.addf %297, %313 : vector<2x1x16x16xf32>
    %c73 = arith.constant 73 : index
    %315 = memref.load %arg2[%c73] : memref<144xf32, #tpu.memory_space<smem>>
    %316 = vector.broadcast %315 : f32 to vector<2x1x16x16xf32>
    %317 = arith.mulf %316, %310 : vector<2x1x16x16xf32>
    %318 = arith.addf %301, %317 : vector<2x1x16x16xf32>
    %c74 = arith.constant 74 : index
    %319 = memref.load %arg2[%c74] : memref<144xf32, #tpu.memory_space<smem>>
    %320 = vector.broadcast %319 : f32 to vector<2x1x16x16xf32>
    %321 = arith.mulf %320, %310 : vector<2x1x16x16xf32>
    %322 = arith.addf %305, %321 : vector<2x1x16x16xf32>
    %c75 = arith.constant 75 : index
    %323 = memref.load %arg2[%c75] : memref<144xf32, #tpu.memory_space<smem>>
    %324 = vector.broadcast %323 : f32 to vector<2x1x16x16xf32>
    %325 = arith.mulf %324, %310 : vector<2x1x16x16xf32>
    %326 = arith.addf %309, %325 : vector<2x1x16x16xf32>
    %c0_79 = arith.constant 0 : index
    %c3_80 = arith.constant 3 : index
    %c1_81 = arith.constant 1 : index
    %c1_82 = arith.constant 1 : index
    %327 = vector.load %arg0[%c0_79, %c3_80, %c1_81, %c1_82] : memref<2x4x18x18xf32, #tpu.memory_space<vmem>>, vector<2x1x16x16xf32>
    %c76 = arith.constant 76 : index
    %328 = memref.load %arg2[%c76] : memref<144xf32, #tpu.memory_space<smem>>
    %329 = vector.broadcast %328 : f32 to vector<2x1x16x16xf32>
    %330 = arith.mulf %329, %327 : vector<2x1x16x16xf32>
    %331 = arith.addf %314, %330 : vector<2x1x16x16xf32>
    %c77 = arith.constant 77 : index
    %332 = memref.load %arg2[%c77] : memref<144xf32, #tpu.memory_space<smem>>
    %333 = vector.broadcast %332 : f32 to vector<2x1x16x16xf32>
    %334 = arith.mulf %333, %327 : vector<2x1x16x16xf32>
    %335 = arith.addf %318, %334 : vector<2x1x16x16xf32>
    %c78 = arith.constant 78 : index
    %336 = memref.load %arg2[%c78] : memref<144xf32, #tpu.memory_space<smem>>
    %337 = vector.broadcast %336 : f32 to vector<2x1x16x16xf32>
    %338 = arith.mulf %337, %327 : vector<2x1x16x16xf32>
    %339 = arith.addf %322, %338 : vector<2x1x16x16xf32>
    %c79 = arith.constant 79 : index
    %340 = memref.load %arg2[%c79] : memref<144xf32, #tpu.memory_space<smem>>
    %341 = vector.broadcast %340 : f32 to vector<2x1x16x16xf32>
    %342 = arith.mulf %341, %327 : vector<2x1x16x16xf32>
    %343 = arith.addf %326, %342 : vector<2x1x16x16xf32>
    %c0_83 = arith.constant 0 : index
    %c0_84 = arith.constant 0 : index
    %c1_85 = arith.constant 1 : index
    %c2_86 = arith.constant 2 : index
    %344 = vector.load %arg0[%c0_83, %c0_84, %c1_85, %c2_86] : memref<2x4x18x18xf32, #tpu.memory_space<vmem>>, vector<2x1x16x16xf32>
    %c80 = arith.constant 80 : index
    %345 = memref.load %arg2[%c80] : memref<144xf32, #tpu.memory_space<smem>>
    %346 = vector.broadcast %345 : f32 to vector<2x1x16x16xf32>
    %347 = arith.mulf %346, %344 : vector<2x1x16x16xf32>
    %348 = arith.addf %331, %347 : vector<2x1x16x16xf32>
    %c81 = arith.constant 81 : index
    %349 = memref.load %arg2[%c81] : memref<144xf32, #tpu.memory_space<smem>>
    %350 = vector.broadcast %349 : f32 to vector<2x1x16x16xf32>
    %351 = arith.mulf %350, %344 : vector<2x1x16x16xf32>
    %352 = arith.addf %335, %351 : vector<2x1x16x16xf32>
    %c82 = arith.constant 82 : index
    %353 = memref.load %arg2[%c82] : memref<144xf32, #tpu.memory_space<smem>>
    %354 = vector.broadcast %353 : f32 to vector<2x1x16x16xf32>
    %355 = arith.mulf %354, %344 : vector<2x1x16x16xf32>
    %356 = arith.addf %339, %355 : vector<2x1x16x16xf32>
    %c83 = arith.constant 83 : index
    %357 = memref.load %arg2[%c83] : memref<144xf32, #tpu.memory_space<smem>>
    %358 = vector.broadcast %357 : f32 to vector<2x1x16x16xf32>
    %359 = arith.mulf %358, %344 : vector<2x1x16x16xf32>
    %360 = arith.addf %343, %359 : vector<2x1x16x16xf32>
    %c0_87 = arith.constant 0 : index
    %c1_88 = arith.constant 1 : index
    %c1_89 = arith.constant 1 : index
    %c2_90 = arith.constant 2 : index
    %361 = vector.load %arg0[%c0_87, %c1_88, %c1_89, %c2_90] : memref<2x4x18x18xf32, #tpu.memory_space<vmem>>, vector<2x1x16x16xf32>
    %c84 = arith.constant 84 : index
    %362 = memref.load %arg2[%c84] : memref<144xf32, #tpu.memory_space<smem>>
    %363 = vector.broadcast %362 : f32 to vector<2x1x16x16xf32>
    %364 = arith.mulf %363, %361 : vector<2x1x16x16xf32>
    %365 = arith.addf %348, %364 : vector<2x1x16x16xf32>
    %c85 = arith.constant 85 : index
    %366 = memref.load %arg2[%c85] : memref<144xf32, #tpu.memory_space<smem>>
    %367 = vector.broadcast %366 : f32 to vector<2x1x16x16xf32>
    %368 = arith.mulf %367, %361 : vector<2x1x16x16xf32>
    %369 = arith.addf %352, %368 : vector<2x1x16x16xf32>
    %c86 = arith.constant 86 : index
    %370 = memref.load %arg2[%c86] : memref<144xf32, #tpu.memory_space<smem>>
    %371 = vector.broadcast %370 : f32 to vector<2x1x16x16xf32>
    %372 = arith.mulf %371, %361 : vector<2x1x16x16xf32>
    %373 = arith.addf %356, %372 : vector<2x1x16x16xf32>
    %c87 = arith.constant 87 : index
    %374 = memref.load %arg2[%c87] : memref<144xf32, #tpu.memory_space<smem>>
    %375 = vector.broadcast %374 : f32 to vector<2x1x16x16xf32>
    %376 = arith.mulf %375, %361 : vector<2x1x16x16xf32>
    %377 = arith.addf %360, %376 : vector<2x1x16x16xf32>
    %c0_91 = arith.constant 0 : index
    %c2_92 = arith.constant 2 : index
    %c1_93 = arith.constant 1 : index
    %c2_94 = arith.constant 2 : index
    %378 = vector.load %arg0[%c0_91, %c2_92, %c1_93, %c2_94] : memref<2x4x18x18xf32, #tpu.memory_space<vmem>>, vector<2x1x16x16xf32>
    %c88 = arith.constant 88 : index
    %379 = memref.load %arg2[%c88] : memref<144xf32, #tpu.memory_space<smem>>
    %380 = vector.broadcast %379 : f32 to vector<2x1x16x16xf32>
    %381 = arith.mulf %380, %378 : vector<2x1x16x16xf32>
    %382 = arith.addf %365, %381 : vector<2x1x16x16xf32>
    %c89 = arith.constant 89 : index
    %383 = memref.load %arg2[%c89] : memref<144xf32, #tpu.memory_space<smem>>
    %384 = vector.broadcast %383 : f32 to vector<2x1x16x16xf32>
    %385 = arith.mulf %384, %378 : vector<2x1x16x16xf32>
    %386 = arith.addf %369, %385 : vector<2x1x16x16xf32>
    %c90 = arith.constant 90 : index
    %387 = memref.load %arg2[%c90] : memref<144xf32, #tpu.memory_space<smem>>
    %388 = vector.broadcast %387 : f32 to vector<2x1x16x16xf32>
    %389 = arith.mulf %388, %378 : vector<2x1x16x16xf32>
    %390 = arith.addf %373, %389 : vector<2x1x16x16xf32>
    %c91 = arith.constant 91 : index
    %391 = memref.load %arg2[%c91] : memref<144xf32, #tpu.memory_space<smem>>
    %392 = vector.broadcast %391 : f32 to vector<2x1x16x16xf32>
    %393 = arith.mulf %392, %378 : vector<2x1x16x16xf32>
    %394 = arith.addf %377, %393 : vector<2x1x16x16xf32>
    %c0_95 = arith.constant 0 : index
    %c3_96 = arith.constant 3 : index
    %c1_97 = arith.constant 1 : index
    %c2_98 = arith.constant 2 : index
    %395 = vector.load %arg0[%c0_95, %c3_96, %c1_97, %c2_98] : memref<2x4x18x18xf32, #tpu.memory_space<vmem>>, vector<2x1x16x16xf32>
    %c92 = arith.constant 92 : index
    %396 = memref.load %arg2[%c92] : memref<144xf32, #tpu.memory_space<smem>>
    %397 = vector.broadcast %396 : f32 to vector<2x1x16x16xf32>
    %398 = arith.mulf %397, %395 : vector<2x1x16x16xf32>
    %399 = arith.addf %382, %398 : vector<2x1x16x16xf32>
    %c93 = arith.constant 93 : index
    %400 = memref.load %arg2[%c93] : memref<144xf32, #tpu.memory_space<smem>>
    %401 = vector.broadcast %400 : f32 to vector<2x1x16x16xf32>
    %402 = arith.mulf %401, %395 : vector<2x1x16x16xf32>
    %403 = arith.addf %386, %402 : vector<2x1x16x16xf32>
    %c94 = arith.constant 94 : index
    %404 = memref.load %arg2[%c94] : memref<144xf32, #tpu.memory_space<smem>>
    %405 = vector.broadcast %404 : f32 to vector<2x1x16x16xf32>
    %406 = arith.mulf %405, %395 : vector<2x1x16x16xf32>
    %407 = arith.addf %390, %406 : vector<2x1x16x16xf32>
    %c95 = arith.constant 95 : index
    %408 = memref.load %arg2[%c95] : memref<144xf32, #tpu.memory_space<smem>>
    %409 = vector.broadcast %408 : f32 to vector<2x1x16x16xf32>
    %410 = arith.mulf %409, %395 : vector<2x1x16x16xf32>
    %411 = arith.addf %394, %410 : vector<2x1x16x16xf32>
    %c0_99 = arith.constant 0 : index
    %c0_100 = arith.constant 0 : index
    %c2_101 = arith.constant 2 : index
    %c0_102 = arith.constant 0 : index
    %412 = vector.load %arg0[%c0_99, %c0_100, %c2_101, %c0_102] : memref<2x4x18x18xf32, #tpu.memory_space<vmem>>, vector<2x1x16x16xf32>
    %c96 = arith.constant 96 : index
    %413 = memref.load %arg2[%c96] : memref<144xf32, #tpu.memory_space<smem>>
    %414 = vector.broadcast %413 : f32 to vector<2x1x16x16xf32>
    %415 = arith.mulf %414, %412 : vector<2x1x16x16xf32>
    %416 = arith.addf %399, %415 : vector<2x1x16x16xf32>
    %c97 = arith.constant 97 : index
    %417 = memref.load %arg2[%c97] : memref<144xf32, #tpu.memory_space<smem>>
    %418 = vector.broadcast %417 : f32 to vector<2x1x16x16xf32>
    %419 = arith.mulf %418, %412 : vector<2x1x16x16xf32>
    %420 = arith.addf %403, %419 : vector<2x1x16x16xf32>
    %c98 = arith.constant 98 : index
    %421 = memref.load %arg2[%c98] : memref<144xf32, #tpu.memory_space<smem>>
    %422 = vector.broadcast %421 : f32 to vector<2x1x16x16xf32>
    %423 = arith.mulf %422, %412 : vector<2x1x16x16xf32>
    %424 = arith.addf %407, %423 : vector<2x1x16x16xf32>
    %c99 = arith.constant 99 : index
    %425 = memref.load %arg2[%c99] : memref<144xf32, #tpu.memory_space<smem>>
    %426 = vector.broadcast %425 : f32 to vector<2x1x16x16xf32>
    %427 = arith.mulf %426, %412 : vector<2x1x16x16xf32>
    %428 = arith.addf %411, %427 : vector<2x1x16x16xf32>
    %c0_103 = arith.constant 0 : index
    %c1_104 = arith.constant 1 : index
    %c2_105 = arith.constant 2 : index
    %c0_106 = arith.constant 0 : index
    %429 = vector.load %arg0[%c0_103, %c1_104, %c2_105, %c0_106] : memref<2x4x18x18xf32, #tpu.memory_space<vmem>>, vector<2x1x16x16xf32>
    %c100 = arith.constant 100 : index
    %430 = memref.load %arg2[%c100] : memref<144xf32, #tpu.memory_space<smem>>
    %431 = vector.broadcast %430 : f32 to vector<2x1x16x16xf32>
    %432 = arith.mulf %431, %429 : vector<2x1x16x16xf32>
    %433 = arith.addf %416, %432 : vector<2x1x16x16xf32>
    %c101 = arith.constant 101 : index
    %434 = memref.load %arg2[%c101] : memref<144xf32, #tpu.memory_space<smem>>
    %435 = vector.broadcast %434 : f32 to vector<2x1x16x16xf32>
    %436 = arith.mulf %435, %429 : vector<2x1x16x16xf32>
    %437 = arith.addf %420, %436 : vector<2x1x16x16xf32>
    %c102 = arith.constant 102 : index
    %438 = memref.load %arg2[%c102] : memref<144xf32, #tpu.memory_space<smem>>
    %439 = vector.broadcast %438 : f32 to vector<2x1x16x16xf32>
    %440 = arith.mulf %439, %429 : vector<2x1x16x16xf32>
    %441 = arith.addf %424, %440 : vector<2x1x16x16xf32>
    %c103 = arith.constant 103 : index
    %442 = memref.load %arg2[%c103] : memref<144xf32, #tpu.memory_space<smem>>
    %443 = vector.broadcast %442 : f32 to vector<2x1x16x16xf32>
    %444 = arith.mulf %443, %429 : vector<2x1x16x16xf32>
    %445 = arith.addf %428, %444 : vector<2x1x16x16xf32>
    %c0_107 = arith.constant 0 : index
    %c2_108 = arith.constant 2 : index
    %c2_109 = arith.constant 2 : index
    %c0_110 = arith.constant 0 : index
    %446 = vector.load %arg0[%c0_107, %c2_108, %c2_109, %c0_110] : memref<2x4x18x18xf32, #tpu.memory_space<vmem>>, vector<2x1x16x16xf32>
    %c104 = arith.constant 104 : index
    %447 = memref.load %arg2[%c104] : memref<144xf32, #tpu.memory_space<smem>>
    %448 = vector.broadcast %447 : f32 to vector<2x1x16x16xf32>
    %449 = arith.mulf %448, %446 : vector<2x1x16x16xf32>
    %450 = arith.addf %433, %449 : vector<2x1x16x16xf32>
    %c105 = arith.constant 105 : index
    %451 = memref.load %arg2[%c105] : memref<144xf32, #tpu.memory_space<smem>>
    %452 = vector.broadcast %451 : f32 to vector<2x1x16x16xf32>
    %453 = arith.mulf %452, %446 : vector<2x1x16x16xf32>
    %454 = arith.addf %437, %453 : vector<2x1x16x16xf32>
    %c106 = arith.constant 106 : index
    %455 = memref.load %arg2[%c106] : memref<144xf32, #tpu.memory_space<smem>>
    %456 = vector.broadcast %455 : f32 to vector<2x1x16x16xf32>
    %457 = arith.mulf %456, %446 : vector<2x1x16x16xf32>
    %458 = arith.addf %441, %457 : vector<2x1x16x16xf32>
    %c107 = arith.constant 107 : index
    %459 = memref.load %arg2[%c107] : memref<144xf32, #tpu.memory_space<smem>>
    %460 = vector.broadcast %459 : f32 to vector<2x1x16x16xf32>
    %461 = arith.mulf %460, %446 : vector<2x1x16x16xf32>
    %462 = arith.addf %445, %461 : vector<2x1x16x16xf32>
    %c0_111 = arith.constant 0 : index
    %c3_112 = arith.constant 3 : index
    %c2_113 = arith.constant 2 : index
    %c0_114 = arith.constant 0 : index
    %463 = vector.load %arg0[%c0_111, %c3_112, %c2_113, %c0_114] : memref<2x4x18x18xf32, #tpu.memory_space<vmem>>, vector<2x1x16x16xf32>
    %c108 = arith.constant 108 : index
    %464 = memref.load %arg2[%c108] : memref<144xf32, #tpu.memory_space<smem>>
    %465 = vector.broadcast %464 : f32 to vector<2x1x16x16xf32>
    %466 = arith.mulf %465, %463 : vector<2x1x16x16xf32>
    %467 = arith.addf %450, %466 : vector<2x1x16x16xf32>
    %c109 = arith.constant 109 : index
    %468 = memref.load %arg2[%c109] : memref<144xf32, #tpu.memory_space<smem>>
    %469 = vector.broadcast %468 : f32 to vector<2x1x16x16xf32>
    %470 = arith.mulf %469, %463 : vector<2x1x16x16xf32>
    %471 = arith.addf %454, %470 : vector<2x1x16x16xf32>
    %c110 = arith.constant 110 : index
    %472 = memref.load %arg2[%c110] : memref<144xf32, #tpu.memory_space<smem>>
    %473 = vector.broadcast %472 : f32 to vector<2x1x16x16xf32>
    %474 = arith.mulf %473, %463 : vector<2x1x16x16xf32>
    %475 = arith.addf %458, %474 : vector<2x1x16x16xf32>
    %c111 = arith.constant 111 : index
    %476 = memref.load %arg2[%c111] : memref<144xf32, #tpu.memory_space<smem>>
    %477 = vector.broadcast %476 : f32 to vector<2x1x16x16xf32>
    %478 = arith.mulf %477, %463 : vector<2x1x16x16xf32>
    %479 = arith.addf %462, %478 : vector<2x1x16x16xf32>
    %c0_115 = arith.constant 0 : index
    %c0_116 = arith.constant 0 : index
    %c2_117 = arith.constant 2 : index
    %c1_118 = arith.constant 1 : index
    %480 = vector.load %arg0[%c0_115, %c0_116, %c2_117, %c1_118] : memref<2x4x18x18xf32, #tpu.memory_space<vmem>>, vector<2x1x16x16xf32>
    %c112 = arith.constant 112 : index
    %481 = memref.load %arg2[%c112] : memref<144xf32, #tpu.memory_space<smem>>
    %482 = vector.broadcast %481 : f32 to vector<2x1x16x16xf32>
    %483 = arith.mulf %482, %480 : vector<2x1x16x16xf32>
    %484 = arith.addf %467, %483 : vector<2x1x16x16xf32>
    %c113 = arith.constant 113 : index
    %485 = memref.load %arg2[%c113] : memref<144xf32, #tpu.memory_space<smem>>
    %486 = vector.broadcast %485 : f32 to vector<2x1x16x16xf32>
    %487 = arith.mulf %486, %480 : vector<2x1x16x16xf32>
    %488 = arith.addf %471, %487 : vector<2x1x16x16xf32>
    %c114 = arith.constant 114 : index
    %489 = memref.load %arg2[%c114] : memref<144xf32, #tpu.memory_space<smem>>
    %490 = vector.broadcast %489 : f32 to vector<2x1x16x16xf32>
    %491 = arith.mulf %490, %480 : vector<2x1x16x16xf32>
    %492 = arith.addf %475, %491 : vector<2x1x16x16xf32>
    %c115 = arith.constant 115 : index
    %493 = memref.load %arg2[%c115] : memref<144xf32, #tpu.memory_space<smem>>
    %494 = vector.broadcast %493 : f32 to vector<2x1x16x16xf32>
    %495 = arith.mulf %494, %480 : vector<2x1x16x16xf32>
    %496 = arith.addf %479, %495 : vector<2x1x16x16xf32>
    %c0_119 = arith.constant 0 : index
    %c1_120 = arith.constant 1 : index
    %c2_121 = arith.constant 2 : index
    %c1_122 = arith.constant 1 : index
    %497 = vector.load %arg0[%c0_119, %c1_120, %c2_121, %c1_122] : memref<2x4x18x18xf32, #tpu.memory_space<vmem>>, vector<2x1x16x16xf32>
    %c116 = arith.constant 116 : index
    %498 = memref.load %arg2[%c116] : memref<144xf32, #tpu.memory_space<smem>>
    %499 = vector.broadcast %498 : f32 to vector<2x1x16x16xf32>
    %500 = arith.mulf %499, %497 : vector<2x1x16x16xf32>
    %501 = arith.addf %484, %500 : vector<2x1x16x16xf32>
    %c117 = arith.constant 117 : index
    %502 = memref.load %arg2[%c117] : memref<144xf32, #tpu.memory_space<smem>>
    %503 = vector.broadcast %502 : f32 to vector<2x1x16x16xf32>
    %504 = arith.mulf %503, %497 : vector<2x1x16x16xf32>
    %505 = arith.addf %488, %504 : vector<2x1x16x16xf32>
    %c118 = arith.constant 118 : index
    %506 = memref.load %arg2[%c118] : memref<144xf32, #tpu.memory_space<smem>>
    %507 = vector.broadcast %506 : f32 to vector<2x1x16x16xf32>
    %508 = arith.mulf %507, %497 : vector<2x1x16x16xf32>
    %509 = arith.addf %492, %508 : vector<2x1x16x16xf32>
    %c119 = arith.constant 119 : index
    %510 = memref.load %arg2[%c119] : memref<144xf32, #tpu.memory_space<smem>>
    %511 = vector.broadcast %510 : f32 to vector<2x1x16x16xf32>
    %512 = arith.mulf %511, %497 : vector<2x1x16x16xf32>
    %513 = arith.addf %496, %512 : vector<2x1x16x16xf32>
    %c0_123 = arith.constant 0 : index
    %c2_124 = arith.constant 2 : index
    %c2_125 = arith.constant 2 : index
    %c1_126 = arith.constant 1 : index
    %514 = vector.load %arg0[%c0_123, %c2_124, %c2_125, %c1_126] : memref<2x4x18x18xf32, #tpu.memory_space<vmem>>, vector<2x1x16x16xf32>
    %c120 = arith.constant 120 : index
    %515 = memref.load %arg2[%c120] : memref<144xf32, #tpu.memory_space<smem>>
    %516 = vector.broadcast %515 : f32 to vector<2x1x16x16xf32>
    %517 = arith.mulf %516, %514 : vector<2x1x16x16xf32>
    %518 = arith.addf %501, %517 : vector<2x1x16x16xf32>
    %c121 = arith.constant 121 : index
    %519 = memref.load %arg2[%c121] : memref<144xf32, #tpu.memory_space<smem>>
    %520 = vector.broadcast %519 : f32 to vector<2x1x16x16xf32>
    %521 = arith.mulf %520, %514 : vector<2x1x16x16xf32>
    %522 = arith.addf %505, %521 : vector<2x1x16x16xf32>
    %c122 = arith.constant 122 : index
    %523 = memref.load %arg2[%c122] : memref<144xf32, #tpu.memory_space<smem>>
    %524 = vector.broadcast %523 : f32 to vector<2x1x16x16xf32>
    %525 = arith.mulf %524, %514 : vector<2x1x16x16xf32>
    %526 = arith.addf %509, %525 : vector<2x1x16x16xf32>
    %c123 = arith.constant 123 : index
    %527 = memref.load %arg2[%c123] : memref<144xf32, #tpu.memory_space<smem>>
    %528 = vector.broadcast %527 : f32 to vector<2x1x16x16xf32>
    %529 = arith.mulf %528, %514 : vector<2x1x16x16xf32>
    %530 = arith.addf %513, %529 : vector<2x1x16x16xf32>
    %c0_127 = arith.constant 0 : index
    %c3_128 = arith.constant 3 : index
    %c2_129 = arith.constant 2 : index
    %c1_130 = arith.constant 1 : index
    %531 = vector.load %arg0[%c0_127, %c3_128, %c2_129, %c1_130] : memref<2x4x18x18xf32, #tpu.memory_space<vmem>>, vector<2x1x16x16xf32>
    %c124 = arith.constant 124 : index
    %532 = memref.load %arg2[%c124] : memref<144xf32, #tpu.memory_space<smem>>
    %533 = vector.broadcast %532 : f32 to vector<2x1x16x16xf32>
    %534 = arith.mulf %533, %531 : vector<2x1x16x16xf32>
    %535 = arith.addf %518, %534 : vector<2x1x16x16xf32>
    %c125 = arith.constant 125 : index
    %536 = memref.load %arg2[%c125] : memref<144xf32, #tpu.memory_space<smem>>
    %537 = vector.broadcast %536 : f32 to vector<2x1x16x16xf32>
    %538 = arith.mulf %537, %531 : vector<2x1x16x16xf32>
    %539 = arith.addf %522, %538 : vector<2x1x16x16xf32>
    %c126 = arith.constant 126 : index
    %540 = memref.load %arg2[%c126] : memref<144xf32, #tpu.memory_space<smem>>
    %541 = vector.broadcast %540 : f32 to vector<2x1x16x16xf32>
    %542 = arith.mulf %541, %531 : vector<2x1x16x16xf32>
    %543 = arith.addf %526, %542 : vector<2x1x16x16xf32>
    %c127 = arith.constant 127 : index
    %544 = memref.load %arg2[%c127] : memref<144xf32, #tpu.memory_space<smem>>
    %545 = vector.broadcast %544 : f32 to vector<2x1x16x16xf32>
    %546 = arith.mulf %545, %531 : vector<2x1x16x16xf32>
    %547 = arith.addf %530, %546 : vector<2x1x16x16xf32>
    %c0_131 = arith.constant 0 : index
    %c0_132 = arith.constant 0 : index
    %c2_133 = arith.constant 2 : index
    %c2_134 = arith.constant 2 : index
    %548 = vector.load %arg0[%c0_131, %c0_132, %c2_133, %c2_134] : memref<2x4x18x18xf32, #tpu.memory_space<vmem>>, vector<2x1x16x16xf32>
    %c128 = arith.constant 128 : index
    %549 = memref.load %arg2[%c128] : memref<144xf32, #tpu.memory_space<smem>>
    %550 = vector.broadcast %549 : f32 to vector<2x1x16x16xf32>
    %551 = arith.mulf %550, %548 : vector<2x1x16x16xf32>
    %552 = arith.addf %535, %551 : vector<2x1x16x16xf32>
    %c129 = arith.constant 129 : index
    %553 = memref.load %arg2[%c129] : memref<144xf32, #tpu.memory_space<smem>>
    %554 = vector.broadcast %553 : f32 to vector<2x1x16x16xf32>
    %555 = arith.mulf %554, %548 : vector<2x1x16x16xf32>
    %556 = arith.addf %539, %555 : vector<2x1x16x16xf32>
    %c130 = arith.constant 130 : index
    %557 = memref.load %arg2[%c130] : memref<144xf32, #tpu.memory_space<smem>>
    %558 = vector.broadcast %557 : f32 to vector<2x1x16x16xf32>
    %559 = arith.mulf %558, %548 : vector<2x1x16x16xf32>
    %560 = arith.addf %543, %559 : vector<2x1x16x16xf32>
    %c131 = arith.constant 131 : index
    %561 = memref.load %arg2[%c131] : memref<144xf32, #tpu.memory_space<smem>>
    %562 = vector.broadcast %561 : f32 to vector<2x1x16x16xf32>
    %563 = arith.mulf %562, %548 : vector<2x1x16x16xf32>
    %564 = arith.addf %547, %563 : vector<2x1x16x16xf32>
    %c0_135 = arith.constant 0 : index
    %c1_136 = arith.constant 1 : index
    %c2_137 = arith.constant 2 : index
    %c2_138 = arith.constant 2 : index
    %565 = vector.load %arg0[%c0_135, %c1_136, %c2_137, %c2_138] : memref<2x4x18x18xf32, #tpu.memory_space<vmem>>, vector<2x1x16x16xf32>
    %c132 = arith.constant 132 : index
    %566 = memref.load %arg2[%c132] : memref<144xf32, #tpu.memory_space<smem>>
    %567 = vector.broadcast %566 : f32 to vector<2x1x16x16xf32>
    %568 = arith.mulf %567, %565 : vector<2x1x16x16xf32>
    %569 = arith.addf %552, %568 : vector<2x1x16x16xf32>
    %c133 = arith.constant 133 : index
    %570 = memref.load %arg2[%c133] : memref<144xf32, #tpu.memory_space<smem>>
    %571 = vector.broadcast %570 : f32 to vector<2x1x16x16xf32>
    %572 = arith.mulf %571, %565 : vector<2x1x16x16xf32>
    %573 = arith.addf %556, %572 : vector<2x1x16x16xf32>
    %c134 = arith.constant 134 : index
    %574 = memref.load %arg2[%c134] : memref<144xf32, #tpu.memory_space<smem>>
    %575 = vector.broadcast %574 : f32 to vector<2x1x16x16xf32>
    %576 = arith.mulf %575, %565 : vector<2x1x16x16xf32>
    %577 = arith.addf %560, %576 : vector<2x1x16x16xf32>
    %c135 = arith.constant 135 : index
    %578 = memref.load %arg2[%c135] : memref<144xf32, #tpu.memory_space<smem>>
    %579 = vector.broadcast %578 : f32 to vector<2x1x16x16xf32>
    %580 = arith.mulf %579, %565 : vector<2x1x16x16xf32>
    %581 = arith.addf %564, %580 : vector<2x1x16x16xf32>
    %c0_139 = arith.constant 0 : index
    %c2_140 = arith.constant 2 : index
    %c2_141 = arith.constant 2 : index
    %c2_142 = arith.constant 2 : index
    %582 = vector.load %arg0[%c0_139, %c2_140, %c2_141, %c2_142] : memref<2x4x18x18xf32, #tpu.memory_space<vmem>>, vector<2x1x16x16xf32>
    %c136 = arith.constant 136 : index
    %583 = memref.load %arg2[%c136] : memref<144xf32, #tpu.memory_space<smem>>
    %584 = vector.broadcast %583 : f32 to vector<2x1x16x16xf32>
    %585 = arith.mulf %584, %582 : vector<2x1x16x16xf32>
    %586 = arith.addf %569, %585 : vector<2x1x16x16xf32>
    %c137 = arith.constant 137 : index
    %587 = memref.load %arg2[%c137] : memref<144xf32, #tpu.memory_space<smem>>
    %588 = vector.broadcast %587 : f32 to vector<2x1x16x16xf32>
    %589 = arith.mulf %588, %582 : vector<2x1x16x16xf32>
    %590 = arith.addf %573, %589 : vector<2x1x16x16xf32>
    %c138 = arith.constant 138 : index
    %591 = memref.load %arg2[%c138] : memref<144xf32, #tpu.memory_space<smem>>
    %592 = vector.broadcast %591 : f32 to vector<2x1x16x16xf32>
    %593 = arith.mulf %592, %582 : vector<2x1x16x16xf32>
    %594 = arith.addf %577, %593 : vector<2x1x16x16xf32>
    %c139 = arith.constant 139 : index
    %595 = memref.load %arg2[%c139] : memref<144xf32, #tpu.memory_space<smem>>
    %596 = vector.broadcast %595 : f32 to vector<2x1x16x16xf32>
    %597 = arith.mulf %596, %582 : vector<2x1x16x16xf32>
    %598 = arith.addf %581, %597 : vector<2x1x16x16xf32>
    %c0_143 = arith.constant 0 : index
    %c3_144 = arith.constant 3 : index
    %c2_145 = arith.constant 2 : index
    %c2_146 = arith.constant 2 : index
    %599 = vector.load %arg0[%c0_143, %c3_144, %c2_145, %c2_146] : memref<2x4x18x18xf32, #tpu.memory_space<vmem>>, vector<2x1x16x16xf32>
    %c140 = arith.constant 140 : index
    %600 = memref.load %arg2[%c140] : memref<144xf32, #tpu.memory_space<smem>>
    %601 = vector.broadcast %600 : f32 to vector<2x1x16x16xf32>
    %602 = arith.mulf %601, %599 : vector<2x1x16x16xf32>
    %603 = arith.addf %586, %602 : vector<2x1x16x16xf32>
    %c141 = arith.constant 141 : index
    %604 = memref.load %arg2[%c141] : memref<144xf32, #tpu.memory_space<smem>>
    %605 = vector.broadcast %604 : f32 to vector<2x1x16x16xf32>
    %606 = arith.mulf %605, %599 : vector<2x1x16x16xf32>
    %607 = arith.addf %590, %606 : vector<2x1x16x16xf32>
    %c142 = arith.constant 142 : index
    %608 = memref.load %arg2[%c142] : memref<144xf32, #tpu.memory_space<smem>>
    %609 = vector.broadcast %608 : f32 to vector<2x1x16x16xf32>
    %610 = arith.mulf %609, %599 : vector<2x1x16x16xf32>
    %611 = arith.addf %594, %610 : vector<2x1x16x16xf32>
    %c143 = arith.constant 143 : index
    %612 = memref.load %arg2[%c143] : memref<144xf32, #tpu.memory_space<smem>>
    %613 = vector.broadcast %612 : f32 to vector<2x1x16x16xf32>
    %614 = arith.mulf %613, %599 : vector<2x1x16x16xf32>
    %615 = arith.addf %598, %614 : vector<2x1x16x16xf32>
    %c0_147 = arith.constant 0 : index
    %616 = memref.load %arg3[%c0_147] : memref<4xf32, #tpu.memory_space<smem>>
    %617 = vector.broadcast %616 : f32 to vector<2x1x16x16xf32>
    %618 = arith.addf %603, %617 : vector<2x1x16x16xf32>
    %c0_148 = arith.constant 0 : index
    %c0_149 = arith.constant 0 : index
    %c0_150 = arith.constant 0 : index
    %c0_151 = arith.constant 0 : index
    %619 = vector.load %arg4[%c0_148, %c0_149, %c0_150, %c0_151] : memref<2x4x16x16xf32, #tpu.memory_space<vmem>>, vector<2x1x16x16xf32>
    tpu.vector_store %arg4[%c0_148, %c0_149, %c0_150, %c0_151], %618 {strides = array<i32>} : memref<2x4x16x16xf32, #tpu.memory_space<vmem>>, vector<2x1x16x16xf32>,
    %c0_152 = arith.constant 0 : index
    %c0_153 = arith.constant 0 : index
    %c0_154 = arith.constant 0 : index
    %c0_155 = arith.constant 0 : index
    %620 = vector.load %arg1[%c0_152, %c0_153, %c0_154, %c0_155] : memref<2x4x16x16xf32, #tpu.memory_space<vmem>>, vector<2x1x16x16xf32>
    %621 = arith.subf %618, %620 : vector<2x1x16x16xf32>
    %622 = math.absf %621 : vector<2x1x16x16xf32>
    %623 = vector.shape_cast %622 : vector<2x1x16x16xf32> to vector<1x2x1x16x16xf32>
    %cst_156 = arith.constant dense<0.000000e+00> : vector<1xf32>
    %624 = vector.multi_reduction <add>, %623, %cst_156 [1, 2, 3, 4] : vector<1x2x1x16x16xf32> to vector<1xf32>
    %625 = vector.shape_cast %624 : vector<1xf32> to vector<1x1x1x1x1xf32>
    %626 = vector.extract %625[0, 0, 0, 0, 0] : f32 from vector<1x1x1x1x1xf32>
    %cst_157 = arith.constant 0.000000e+00 : f32
    %627 = arith.addf %cst_157, %626 : f32
    %c1_158 = arith.constant 1 : index
    %628 = memref.load %arg3[%c1_158] : memref<4xf32, #tpu.memory_space<smem>>
    %629 = vector.broadcast %628 : f32 to vector<2x1x16x16xf32>
    %630 = arith.addf %607, %629 : vector<2x1x16x16xf32>
    %c0_159 = arith.constant 0 : index
    %c1_160 = arith.constant 1 : index
    %c0_161 = arith.constant 0 : index
    %c0_162 = arith.constant 0 : index
    %631 = vector.load %arg4[%c0_159, %c1_160, %c0_161, %c0_162] : memref<2x4x16x16xf32, #tpu.memory_space<vmem>>, vector<2x1x16x16xf32>
    tpu.vector_store %arg4[%c0_159, %c1_160, %c0_161, %c0_162], %630 {strides = array<i32>} : memref<2x4x16x16xf32, #tpu.memory_space<vmem>>, vector<2x1x16x16xf32>,
    %c0_163 = arith.constant 0 : index
    %c1_164 = arith.constant 1 : index
    %c0_165 = arith.constant 0 : index
    %c0_166 = arith.constant 0 : index
    %632 = vector.load %arg1[%c0_163, %c1_164, %c0_165, %c0_166] : memref<2x4x16x16xf32, #tpu.memory_space<vmem>>, vector<2x1x16x16xf32>
    %633 = arith.subf %630, %632 : vector<2x1x16x16xf32>
    %634 = math.absf %633 : vector<2x1x16x16xf32>
    %635 = vector.shape_cast %634 : vector<2x1x16x16xf32> to vector<1x2x1x16x16xf32>
    %cst_167 = arith.constant dense<0.000000e+00> : vector<1xf32>
    %636 = vector.multi_reduction <add>, %635, %cst_167 [1, 2, 3, 4] : vector<1x2x1x16x16xf32> to vector<1xf32>
    %637 = vector.shape_cast %636 : vector<1xf32> to vector<1x1x1x1x1xf32>
    %638 = vector.extract %637[0, 0, 0, 0, 0] : f32 from vector<1x1x1x1x1xf32>
    %639 = arith.addf %627, %638 : f32
    %c2_168 = arith.constant 2 : index
    %640 = memref.load %arg3[%c2_168] : memref<4xf32, #tpu.memory_space<smem>>
    %641 = vector.broadcast %640 : f32 to vector<2x1x16x16xf32>
    %642 = arith.addf %611, %641 : vector<2x1x16x16xf32>
    %c0_169 = arith.constant 0 : index
    %c2_170 = arith.constant 2 : index
    %c0_171 = arith.constant 0 : index
    %c0_172 = arith.constant 0 : index
    %643 = vector.load %arg4[%c0_169, %c2_170, %c0_171, %c0_172] : memref<2x4x16x16xf32, #tpu.memory_space<vmem>>, vector<2x1x16x16xf32>
    tpu.vector_store %arg4[%c0_169, %c2_170, %c0_171, %c0_172], %642 {strides = array<i32>} : memref<2x4x16x16xf32, #tpu.memory_space<vmem>>, vector<2x1x16x16xf32>,
    %c0_173 = arith.constant 0 : index
    %c2_174 = arith.constant 2 : index
    %c0_175 = arith.constant 0 : index
    %c0_176 = arith.constant 0 : index
    %644 = vector.load %arg1[%c0_173, %c2_174, %c0_175, %c0_176] : memref<2x4x16x16xf32, #tpu.memory_space<vmem>>, vector<2x1x16x16xf32>
    %645 = arith.subf %642, %644 : vector<2x1x16x16xf32>
    %646 = math.absf %645 : vector<2x1x16x16xf32>
    %647 = vector.shape_cast %646 : vector<2x1x16x16xf32> to vector<1x2x1x16x16xf32>
    %cst_177 = arith.constant dense<0.000000e+00> : vector<1xf32>
    %648 = vector.multi_reduction <add>, %647, %cst_177 [1, 2, 3, 4] : vector<1x2x1x16x16xf32> to vector<1xf32>
    %649 = vector.shape_cast %648 : vector<1xf32> to vector<1x1x1x1x1xf32>
    %650 = vector.extract %649[0, 0, 0, 0, 0] : f32 from vector<1x1x1x1x1xf32>
    %651 = arith.addf %639, %650 : f32
    %c3_178 = arith.constant 3 : index
    %652 = memref.load %arg3[%c3_178] : memref<4xf32, #tpu.memory_space<smem>>
    %653 = vector.broadcast %652 : f32 to vector<2x1x16x16xf32>
    %654 = arith.addf %615, %653 : vector<2x1x16x16xf32>
    %c0_179 = arith.constant 0 : index
    %c3_180 = arith.constant 3 : index
    %c0_181 = arith.constant 0 : index
    %c0_182 = arith.constant 0 : index
    %655 = vector.load %arg4[%c0_179, %c3_180, %c0_181, %c0_182] : memref<2x4x16x16xf32, #tpu.memory_space<vmem>>, vector<2x1x16x16xf32>
    tpu.vector_store %arg4[%c0_179, %c3_180, %c0_181, %c0_182], %654 {strides = array<i32>} : memref<2x4x16x16xf32, #tpu.memory_space<vmem>>, vector<2x1x16x16xf32>,
    %c0_183 = arith.constant 0 : index
    %c3_184 = arith.constant 3 : index
    %c0_185 = arith.constant 0 : index
    %c0_186 = arith.constant 0 : index
    %656 = vector.load %arg1[%c0_183, %c3_184, %c0_185, %c0_186] : memref<2x4x16x16xf32, #tpu.memory_space<vmem>>, vector<2x1x16x16xf32>
    %657 = arith.subf %654, %656 : vector<2x1x16x16xf32>
    %658 = math.absf %657 : vector<2x1x16x16xf32>
    %659 = vector.shape_cast %658 : vector<2x1x16x16xf32> to vector<1x2x1x16x16xf32>
    %cst_187 = arith.constant dense<0.000000e+00> : vector<1xf32>
    %660 = vector.multi_reduction <add>, %659, %cst_187 [1, 2, 3, 4] : vector<1x2x1x16x16xf32> to vector<1xf32>
    %661 = vector.shape_cast %660 : vector<1xf32> to vector<1x1x1x1x1xf32>
    %662 = vector.extract %661[0, 0, 0, 0, 0] : f32 from vector<1x1x1x1x1xf32>
    %663 = arith.addf %651, %662 : f32
    %cst_188 = arith.constant 0.000000e+00 : f32
    %664 = vector.broadcast %cst_188 : f32 to vector<1x1xf32>
    %cst_189 = arith.constant 4.8828125E-4 : f32
    %665 = arith.mulf %663, %cst_189 : f32
    %666 = vector.broadcast %665 : f32 to vector<1x1xf32>
    %667 = arith.addf %664, %666 : vector<1x1xf32>
    %c0_190 = arith.constant 0 : index
    %c0_191 = arith.constant 0 : index
    %668 = vector.load %arg5[%c0_190, %c0_191] : memref<1x1xf32, #tpu.memory_space<vmem>>, vector<1x1xf32>
    tpu.vector_store %arg5[%c0_190, %c0_191], %667 {strides = array<i32>} : memref<1x1xf32, #tpu.memory_space<vmem>>, vector<1x1xf32>,
    return
  }
}

</mosaic_0001>

<llo_original>
// kernel: conv_l1_forward.1
$region0: #{conv_l1_forward.1}
  #allocation0 [shape = 'u32[]', space=smem, size = 0x4, offset = 0x4, fixed_abs, tag = 'smem constant byte address 0x4 - core index']
  #allocation1 [shape = 'u32[144,128]{1,0:T(1,128)}', space=vmem, size = 0x12000, scoped, tag = 'internal scratch']
  %s0 = inlined_call_operand.vmem [shape: f32[2,4,18,18], index: 0, kind: input, shape index: {}]
  %s1 = inlined_call_operand.vmem [shape: f32[2,4,16,16], index: 1, kind: input, shape index: {}]
  %s2 = inlined_call_operand.vmem [shape: f32[144], index: 2, kind: input, shape index: {}]
  %s3 = inlined_call_operand.vmem [shape: f32[4], index: 3, kind: input, shape index: {}]
  %s4 = inlined_call_operand.hbm [shape: f32[2,4,16,16], index: 4, kind: output, shape index: {0}]
  %s5 = inlined_call_operand.hbm [shape: f32[1,1], index: 5, kind: output, shape index: {1}]
  %6 = xla_tuple %s4, %s5
  %s7 = sld [smem:[#allocation0]]
  $region42: #{conv_l1_forward.1} parent=0
    _
  %s9 = ssub.s32 1, %s7
  %s10 = scalar_select 0, %s9, %s7
  $region1: #{conv_l1_forward.1} parent=0
    #allocation2 [shape = 'u8[1024]{0}', space=smem, size = 0x400, scoped, tag = 'input window, operand 2, single buffered']
    #allocation3 [shape = 's32[1]{0}', space=sflag, size = 0x4, scoped, tag = 'scoped memory for conv_l1_forward.1']
    #allocation4 [shape = 's32[1]{0}', space=sflag, size = 0x4, scoped, tag = 'scoped memory for conv_l1_forward.1']
    #allocation5 [shape = 'u8[512]{0}', space=smem, size = 0x200, scoped, tag = 'input window, operand 3, single buffered']
    #allocation6 [shape = 's32[1]{0}', space=sflag, size = 0x4, scoped, tag = 'scoped memory for conv_l1_forward.1']
    #allocation7 [shape = 'u8[65536]{0}', space=vmem, size = 0x10000, scoped, tag = 'output window, operand 0, single buffered']
    #allocation8 [shape = 'u8[512]{0}', space=vmem, size = 0x400, scoped, tag = 'output window, operand 1, single buffered']
    #allocation9 [shape = 's32[1]{0}', space=sflag, size = 0x4, scoped, tag = 'scoped memory for conv_l1_forward.1']
    %11 = vsyncpa [#allocation4], 0
    %12 = vsyncpa [#allocation6], 0
    %13 = vsyncpa [#allocation3], 0
    %14 = vsyncpa [#allocation9], 0
    // Predicated region
    $region2: #{conv_l1_forward.1} parent=1 // pred_check
      _
    $region3: #{conv_l1_forward.1} parent=1 // pred_check_branch
      %16 = sbr.rel (0) target = $region5
    $region4: #{conv_l1_forward.1} parent=1 // pred_region
      _
    $region5: #{conv_l1_forward.1} parent=1 // pred_fallthru
      _
    // Predicated region
    $region6: #{conv_l1_forward.1} parent=1 // pred_check
      _
    $region7: #{conv_l1_forward.1} parent=1 // pred_check_branch
      %18 = sbr.rel (0) target = $region9
    $region8: #{conv_l1_forward.1} parent=1 // pred_region
      _
    $region9: #{conv_l1_forward.1} parent=1 // pred_fallthru
      _
    // Predicated region
    $region10: #{conv_l1_forward.1} parent=1 // pred_check
      _
    $region11: #{conv_l1_forward.1} parent=1 // pred_check_branch
      %20 = sbr.rel (0) target = $region13
    $region12: #{conv_l1_forward.1} parent=1 // pred_region
      %s22 = ssub.s32 32, 32
      %23 = vsyncadd [#allocation4], %s22
      %s25 = sshll.u32 %s2, 4
      %s26 = int_to_ptr.vmem [resolvable:$true] %s25
      %28 = dma.vmem_to_smem %s26, 32, [#allocation2], [#allocation4]
    $region13: #{conv_l1_forward.1} parent=1 // pred_fallthru
      _
    // Predicated region
    $region14: #{conv_l1_forward.1} parent=1 // pred_check
      _
    $region15: #{conv_l1_forward.1} parent=1 // pred_check_branch
      %30 = sbr.rel (0) target = $region17
    $region16: #{conv_l1_forward.1} parent=1 // pred_region
      %s32 = ssub.s32 16, 16
      %33 = vsyncadd [#allocation6], %s32
      %s35 = sshll.u32 %s3, 4
      %s36 = int_to_ptr.vmem [resolvable:$true] %s35
      %38 = dma.vmem_to_smem %s36, 16, [#allocation5], [#allocation6]
    $region17: #{conv_l1_forward.1} parent=1 // pred_fallthru
      _
    // Predicated region
    $region18: #{conv_l1_forward.1} parent=1 // pred_check
      _
    $region19: #{conv_l1_forward.1} parent=1 // pred_check_branch
      %40 = sbr.rel (0) target = $region21
    $region20: #{conv_l1_forward.1} parent=1 // pred_region
      %41 = dma.done [#allocation4], 32
    $region21: #{conv_l1_forward.1} parent=1 // pred_fallthru
      _
    // Predicated region
    $region22: #{conv_l1_forward.1} parent=1 // pred_check
      _
    $region23: #{conv_l1_forward.1} parent=1 // pred_check_branch
      %43 = sbr.rel (0) target = $region25
    $region24: #{conv_l1_forward.1} parent=1 // pred_region
      %44 = dma.done [#allocation6], 16
    $region25: #{conv_l1_forward.1} parent=1 // pred_fallthru
      _
    %45 = sfence
    %v46 = vld [vmem:[%s0] sm:$0xff]
    %v47 = vld [vmem:[%s0 + $0x8] sm:$0xff]
    %v48 = vld [vmem:[%s0 + $0x60] sm:$0xff]
    %v49 = vld [vmem:[%s0 + $0x68] sm:$0xff]
    %s50 = sld [smem:[#allocation2]]
    %v51 = vstv %s50
    %v52 = vmul.f32 %v51, %v46
    %v53 = vmul.f32 %v51, %v47
    %v54 = vmul.f32 %v51, %v48
    %v55 = vmul.f32 %v51, %v49
    %v56 = vadd.f32 %v52, 0.0
    %v57 = vadd.f32 %v53, 0.0
    %v58 = vadd.f32 %v54, 0.0
    %v59 = vadd.f32 %v55, 0.0
    %s60 = sld [smem:[#allocation2 + $0x1]]
    %v61 = vstv %s60
    %v62 = vmul.f32 %v61, %v46
    %v63 = vmul.f32 %v61, %v47
    %v64 = vmul.f32 %v61, %v48
    %v65 = vmul.f32 %v61, %v49
    %v66 = vadd.f32 %v62, 0.0
    %v67 = vadd.f32 %v63, 0.0
    %v68 = vadd.f32 %v64, 0.0
    %v69 = vadd.f32 %v65, 0.0
    %s70 = sld [smem:[#allocation2 + $0x2]]
    %v71 = vstv %s70
    %v72 = vmul.f32 %v71, %v46
    %v73 = vmul.f32 %v71, %v47
    %v74 = vmul.f32 %v71, %v48
    %v75 = vmul.f32 %v71, %v49
    %v76 = vadd.f32 %v72, 0.0
    %v77 = vadd.f32 %v73, 0.0
    %v78 = vadd.f32 %v74, 0.0
    %v79 = vadd.f32 %v75, 0.0
    %s80 = sld [smem:[#allocation2 + $0x3]]
    %v81 = vstv %s80
    %v82 = vmul.f32 %v81, %v46
    %v83 = vmul.f32 %v81, %v47
    %v84 = vmul.f32 %v81, %v48
    %v85 = vmul.f32 %v81, %v49
    %v86 = vadd.f32 %v82, 0.0
    %v87 = vadd.f32 %v83, 0.0
    %v88 = vadd.f32 %v84, 0.0
    %v89 = vadd.f32 %v85, 0.0
    %s90 = scalar_lea.vmem %s0, 24
    %v91 = vld [vmem:[%s90] sm:$0xff]
    %v92 = vld [vmem:[%s90 + $0x8] sm:$0xff]
    %v93 = vld [vmem:[%s90 + $0x60] sm:$0xff]
    %v94 = vld [vmem:[%s90 + $0x68] sm:$0xff]
    %s95 = sld [smem:[#allocation2 + $0x4]]
    %v96 = vstv %s95
    %v97 = vmul.f32 %v96, %v91
    %v98 = vmul.f32 %v96, %v92
    %v99 = vmul.f32 %v96, %v93
    %v100 = vmul.f32 %v96, %v94
    %v101 = vadd.f32 %v56, %v97
    %v102 = vadd.f32 %v57, %v98
    %v103 = vadd.f32 %v58, %v99
    %v104 = vadd.f32 %v59, %v100
    %s105 = sld [smem:[#allocation2 + $0x5]]
    %v106 = vstv %s105
    %v107 = vmul.f32 %v106, %v91
    %v108 = vmul.f32 %v106, %v92
    %v109 = vmul.f32 %v106, %v93
    %v110 = vmul.f32 %v106, %v94
    %v111 = vadd.f32 %v66, %v107
    %v112 = vadd.f32 %v67, %v108
    %v113 = vadd.f32 %v68, %v109
    %v114 = vadd.f32 %v69, %v110
    %s115 = sld [smem:[#allocation2 + $0x6]]
    %v116 = vstv %s115
    %v117 = vmul.f32 %v116, %v91
    %v118 = vmul.f32 %v116, %v92
    %v119 = vmul.f32 %v116, %v93
    %v120 = vmul.f32 %v116, %v94
    %v121 = vadd.f32 %v76, %v117
    %v122 = vadd.f32 %v77, %v118
    %v123 = vadd.f32 %v78, %v119
    %v124 = vadd.f32 %v79, %v120
    %s125 = sld [smem:[#allocation2 + $0x7]]
    %v126 = vstv %s125
    %v127 = vmul.f32 %v126, %v91
    %v128 = vmul.f32 %v126, %v92
    %v129 = vmul.f32 %v126, %v93
    %v130 = vmul.f32 %v126, %v94
    %v131 = vadd.f32 %v86, %v127
    %v132 = vadd.f32 %v87, %v128
    %v133 = vadd.f32 %v88, %v129
    %v134 = vadd.f32 %v89, %v130
    %s135 = scalar_lea.vmem %s0, 48
    %v136 = vld [vmem:[%s135] sm:$0xff]
    %v137 = vld [vmem:[%s135 + $0x8] sm:$0xff]
    %v138 = vld [vmem:[%s135 + $0x60] sm:$0xff]
    %v139 = vld [vmem:[%s135 + $0x68] sm:$0xff]
    %s140 = sld [smem:[#allocation2 + $0x8]]
    %v141 = vstv %s140
    %v142 = vmul.f32 %v141, %v136
    %v143 = vmul.f32 %v141, %v137
    %v144 = vmul.f32 %v141, %v138
    %v145 = vmul.f32 %v141, %v139
    %v146 = vadd.f32 %v101, %v142
    %v147 = vadd.f32 %v102, %v143
    %v148 = vadd.f32 %v103, %v144
    %v149 = vadd.f32 %v104, %v145
    %s150 = sld [smem:[#allocation2 + $0x9]]
    %v151 = vstv %s150
    %v152 = vmul.f32 %v151, %v136
    %v153 = vmul.f32 %v151, %v137
    %v154 = vmul.f32 %v151, %v138
    %v155 = vmul.f32 %v151, %v139
    %v156 = vadd.f32 %v111, %v152
    %v157 = vadd.f32 %v112, %v153
    %v158 = vadd.f32 %v113, %v154
    %v159 = vadd.f32 %v114, %v155
    %s160 = sld [smem:[#allocation2 + $0xa]]
    %v161 = vstv %s160
    %v162 = vmul.f32 %v161, %v136
    %v163 = vmul.f32 %v161, %v137
    %v164 = vmul.f32 %v161, %v138
    %v165 = vmul.f32 %v161, %v139
    %v166 = vadd.f32 %v121, %v162
    %v167 = vadd.f32 %v122, %v163
    %v168 = vadd.f32 %v123, %v164
    %v169 = vadd.f32 %v124, %v165
    %s170 = sld [smem:[#allocation2 + $0xb]]
    %v171 = vstv %s170
    %v172 = vmul.f32 %v171, %v136
    %v173 = vmul.f32 %v171, %v137
    %v174 = vmul.f32 %v171, %v138
    %v175 = vmul.f32 %v171, %v139
    %v176 = vadd.f32 %v131, %v172
    %v177 = vadd.f32 %v132, %v173
    %v178 = vadd.f32 %v133, %v174
    %v179 = vadd.f32 %v134, %v175
    %s180 = scalar_lea.vmem %s0, 72
    %v181 = vld [vmem:[%s180] sm:$0xff]
    %v182 = vld [vmem:[%s180 + $0x8] sm:$0xff]
    %v183 = vld [vmem:[%s180 + $0x60] sm:$0xff]
    %v184 = vld [vmem:[%s180 + $0x68] sm:$0xff]
    %s185 = sld [smem:[#allocation2 + $0xc]]
    %v186 = vstv %s185
    %v187 = vmul.f32 %v186, %v181
    %v188 = vmul.f32 %v186, %v182
    %v189 = vmul.f32 %v186, %v183
    %v190 = vmul.f32 %v186, %v184
    %v191 = vadd.f32 %v146, %v187
    %v192 = vadd.f32 %v147, %v188
    %v193 = vadd.f32 %v148, %v189
    %v194 = vadd.f32 %v149, %v190
    %s195 = sld [smem:[#allocation2 + $0xd]]
    %v196 = vstv %s195
    %v197 = vmul.f32 %v196, %v181
    %v198 = vmul.f32 %v196, %v182
    %v199 = vmul.f32 %v196, %v183
    %v200 = vmul.f32 %v196, %v184
    %v201 = vadd.f32 %v156, %v197
    %v202 = vadd.f32 %v157, %v198
    %v203 = vadd.f32 %v158, %v199
    %v204 = vadd.f32 %v159, %v200
    %s205 = sld [smem:[#allocation2 + $0xe]]
    %v206 = vstv %s205
    %v207 = vmul.f32 %v206, %v181
    %v208 = vmul.f32 %v206, %v182
    %v209 = vmul.f32 %v206, %v183
    %v210 = vmul.f32 %v206, %v184
    %v211 = vadd.f32 %v166, %v207
    %v212 = vadd.f32 %v167, %v208
    %v213 = vadd.f32 %v168, %v209
    %v214 = vadd.f32 %v169, %v210
    %s215 = sld [smem:[#allocation2 + $0xf]]
    %v216 = vstv %s215
    %v217 = vmul.f32 %v216, %v181
    %v218 = vmul.f32 %v216, %v182
    %v219 = vmul.f32 %v216, %v183
    %v220 = vmul.f32 %v216, %v184
    %v221 = vadd.f32 %v176, %v217
    %v222 = vadd.f32 %v177, %v218
    %v223 = vadd.f32 %v178, %v219
    %v224 = vadd.f32 %v179, %v220
    %s225 = sld [smem:[#allocation2 + $0x10]]
    %v226 = vstv %s225
    %v227 = vmul.f32 %v226, %v46
    %v228 = vmul.f32 %v226, %v47
    %v229 = vmul.f32 %v226, %v48
    %v230 = vmul.f32 %v226, %v49
    %235 = vrot.lane.b32.xlu0 %v227, 127
    %v236 = vpop.permute.xlu0 %235
    %237 = vrot.lane.b32.xlu0 %v228, 127
    %v238 = vpop.permute.xlu0 %237
    %239 = vrot.lane.b32.xlu0 %v229, 127
    %v240 = vpop.permute.xlu0 %239
    %241 = vrot.lane.b32.xlu0 %v230, 127
    %v242 = vpop.permute.xlu0 %241
    %v247 = vadd.f32 %v191, %v236
    %v248 = vadd.f32 %v192, %v238
    %v249 = vadd.f32 %v193, %v240
    %v250 = vadd.f32 %v194, %v242
    %s251 = sld [smem:[#allocation2 + $0x11]]
    %v252 = vstv %s251
    %v253 = vmul.f32 %v252, %v46
    %v254 = vmul.f32 %v252, %v47
    %v255 = vmul.f32 %v252, %v48
    %v256 = vmul.f32 %v252, %v49
    %261 = vrot.lane.b32.xlu0 %v253, 127
    %v262 = vpop.permute.xlu0 %261
    %263 = vrot.lane.b32.xlu0 %v254, 127
    %v264 = vpop.permute.xlu0 %263
    %265 = vrot.lane.b32.xlu0 %v255, 127
    %v266 = vpop.permute.xlu0 %265
    %267 = vrot.lane.b32.xlu0 %v256, 127
    %v268 = vpop.permute.xlu0 %267
    %v273 = vadd.f32 %v201, %v262
    %v274 = vadd.f32 %v202, %v264
    %v275 = vadd.f32 %v203, %v266
    %v276 = vadd.f32 %v204, %v268
    %s277 = sld [smem:[#allocation2 + $0x12]]
    %v278 = vstv %s277
    %v279 = vmul.f32 %v278, %v46
    %v280 = vmul.f32 %v278, %v47
    %v281 = vmul.f32 %v278, %v48
    %v282 = vmul.f32 %v278, %v49
    %287 = vrot.lane.b32.xlu0 %v279, 127
    %v288 = vpop.permute.xlu0 %287
    %289 = vrot.lane.b32.xlu0 %v280, 127
    %v290 = vpop.permute.xlu0 %289
    %291 = vrot.lane.b32.xlu0 %v281, 127
    %v292 = vpop.permute.xlu0 %291
    %293 = vrot.lane.b32.xlu0 %v282, 127
    %v294 = vpop.permute.xlu0 %293
    %v299 = vadd.f32 %v211, %v288
    %v300 = vadd.f32 %v212, %v290
    %v301 = vadd.f32 %v213, %v292
    %v302 = vadd.f32 %v214, %v294
    %s303 = sld [smem:[#allocation2 + $0x13]]
    %v304 = vstv %s303
    %v305 = vmul.f32 %v304, %v46
    %v306 = vmul.f32 %v304, %v47
    %v307 = vmul.f32 %v304, %v48
    %v308 = vmul.f32 %v304, %v49
    %313 = vrot.lane.b32.xlu0 %v305, 127
    %v314 = vpop.permute.xlu0 %313
    %315 = vrot.lane.b32.xlu0 %v306, 127
    %v316 = vpop.permute.xlu0 %315
    %317 = vrot.lane.b32.xlu0 %v307, 127
    %v318 = vpop.permute.xlu0 %317
    %319 = vrot.lane.b32.xlu0 %v308, 127
    %v320 = vpop.permute.xlu0 %319
    %v325 = vadd.f32 %v221, %v314
    %v326 = vadd.f32 %v222, %v316
    %v327 = vadd.f32 %v223, %v318
    %v328 = vadd.f32 %v224, %v320
    %s329 = sld [smem:[#allocation2 + $0x14]]
    %v330 = vstv %s329
    %v331 = vmul.f32 %v330, %v91
    %v332 = vmul.f32 %v330, %v92
    %v333 = vmul.f32 %v330, %v93
    %v334 = vmul.f32 %v330, %v94
    %339 = vrot.lane.b32.xlu0 %v331, 127
    %v340 = vpop.permute.xlu0 %339
    %341 = vrot.lane.b32.xlu0 %v332, 127
    %v342 = vpop.permute.xlu0 %341
    %343 = vrot.lane.b32.xlu0 %v333, 127
    %v344 = vpop.permute.xlu0 %343
    %345 = vrot.lane.b32.xlu0 %v334, 127
    %v346 = vpop.permute.xlu0 %345
    %v351 = vadd.f32 %v247, %v340
    %v352 = vadd.f32 %v248, %v342
    %v353 = vadd.f32 %v249, %v344
    %v354 = vadd.f32 %v250, %v346
    %s355 = sld [smem:[#allocation2 + $0x15]]
    %v356 = vstv %s355
    %v357 = vmul.f32 %v356, %v91
    %v358 = vmul.f32 %v356, %v92
    %v359 = vmul.f32 %v356, %v93
    %v360 = vmul.f32 %v356, %v94
    %365 = vrot.lane.b32.xlu0 %v357, 127
    %v366 = vpop.permute.xlu0 %365
    %367 = vrot.lane.b32.xlu0 %v358, 127
    %v368 = vpop.permute.xlu0 %367
    %369 = vrot.lane.b32.xlu0 %v359, 127
    %v370 = vpop.permute.xlu0 %369
    %371 = vrot.lane.b32.xlu0 %v360, 127
    %v372 = vpop.permute.xlu0 %371
    %v377 = vadd.f32 %v273, %v366
    %v378 = vadd.f32 %v274, %v368
    %v379 = vadd.f32 %v275, %v370
    %v380 = vadd.f32 %v276, %v372
    %s381 = sld [smem:[#allocation2 + $0x16]]
    %v382 = vstv %s381
    %v383 = vmul.f32 %v382, %v91
    %v384 = vmul.f32 %v382, %v92
    %v385 = vmul.f32 %v382, %v93
    %v386 = vmul.f32 %v382, %v94
    %391 = vrot.lane.b32.xlu0 %v383, 127
    %v392 = vpop.permute.xlu0 %391
    %393 = vrot.lane.b32.xlu0 %v384, 127
    %v394 = vpop.permute.xlu0 %393
    %395 = vrot.lane.b32.xlu0 %v385, 127
    %v396 = vpop.permute.xlu0 %395
    %397 = vrot.lane.b32.xlu0 %v386, 127
    %v398 = vpop.permute.xlu0 %397
    %v403 = vadd.f32 %v299, %v392
    %v404 = vadd.f32 %v300, %v394
    %v405 = vadd.f32 %v301, %v396
    %v406 = vadd.f32 %v302, %v398
    %s407 = sld [smem:[#allocation2 + $0x17]]
    %v408 = vstv %s407
    %v409 = vmul.f32 %v408, %v91
    %v410 = vmul.f32 %v408, %v92
    %v411 = vmul.f32 %v408, %v93
    %v412 = vmul.f32 %v408, %v94
    %417 = vrot.lane.b32.xlu0 %v409, 127
    %v418 = vpop.permute.xlu0 %417
    %419 = vrot.lane.b32.xlu0 %v410, 127
    %v420 = vpop.permute.xlu0 %419
    %421 = vrot.lane.b32.xlu0 %v411, 127
    %v422 = vpop.permute.xlu0 %421
    %423 = vrot.lane.b32.xlu0 %v412, 127
    %v424 = vpop.permute.xlu0 %423
    %v429 = vadd.f32 %v325, %v418
    %v430 = vadd.f32 %v326, %v420
    %v431 = vadd.f32 %v327, %v422
    %v432 = vadd.f32 %v328, %v424
    %s433 = sld [smem:[#allocation2 + $0x18]]
    %v434 = vstv %s433
    %v435 = vmul.f32 %v434, %v136
    %v436 = vmul.f32 %v434, %v137
    %v437 = vmul.f32 %v434, %v138
    %v438 = vmul.f32 %v434, %v139
    %443 = vrot.lane.b32.xlu0 %v435, 127
    %v444 = vpop.permute.xlu0 %443
    %445 = vrot.lane.b32.xlu0 %v436, 127
    %v446 = vpop.permute.xlu0 %445
    %447 = vrot.lane.b32.xlu0 %v437, 127
    %v448 = vpop.permute.xlu0 %447
    %449 = vrot.lane.b32.xlu0 %v438, 127
    %v450 = vpop.permute.xlu0 %449
    %v455 = vadd.f32 %v351, %v444
    %v456 = vadd.f32 %v352, %v446
    %v457 = vadd.f32 %v353, %v448
    %v458 = vadd.f32 %v354, %v450
    %s459 = sld [smem:[#allocation2 + $0x19]]
    %v460 = vstv %s459
    %v461 = vmul.f32 %v460, %v136
    %v462 = vmul.f32 %v460, %v137
    %v463 = vmul.f32 %v460, %v138
    %v464 = vmul.f32 %v460, %v139
    %469 = vrot.lane.b32.xlu0 %v461, 127
    %v470 = vpop.permute.xlu0 %469
    %471 = vrot.lane.b32.xlu0 %v462, 127
    %v472 = vpop.permute.xlu0 %471
    %473 = vrot.lane.b32.xlu0 %v463, 127
    %v474 = vpop.permute.xlu0 %473
    %475 = vrot.lane.b32.xlu0 %v464, 127
    %v476 = vpop.permute.xlu0 %475
    %v481 = vadd.f32 %v377, %v470
    %v482 = vadd.f32 %v378, %v472
    %v483 = vadd.f32 %v379, %v474
    %v484 = vadd.f32 %v380, %v476
    %s485 = sld [smem:[#allocation2 + $0x1a]]
    %v486 = vstv %s485
    %v487 = vmul.f32 %v486, %v136
    %v488 = vmul.f32 %v486, %v137
    %v489 = vmul.f32 %v486, %v138
    %v490 = vmul.f32 %v486, %v139
    %495 = vrot.lane.b32.xlu0 %v487, 127
    %v496 = vpop.permute.xlu0 %495
    %497 = vrot.lane.b32.xlu0 %v488, 127
    %v498 = vpop.permute.xlu0 %497
    %499 = vrot.lane.b32.xlu0 %v489, 127
    %v500 = vpop.permute.xlu0 %499
    %501 = vrot.lane.b32.xlu0 %v490, 127
    %v502 = vpop.permute.xlu0 %501
    %v507 = vadd.f32 %v403, %v496
    %v508 = vadd.f32 %v404, %v498
    %v509 = vadd.f32 %v405, %v500
    %v510 = vadd.f32 %v406, %v502
    %s511 = sld [smem:[#allocation2 + $0x1b]]
    %v512 = vstv %s511
    %v513 = vmul.f32 %v512, %v136
    %v514 = vmul.f32 %v512, %v137
    %v515 = vmul.f32 %v512, %v138
    %v516 = vmul.f32 %v512, %v139
    %521 = vrot.lane.b32.xlu0 %v513, 127
    %v522 = vpop.permute.xlu0 %521
    %523 = vrot.lane.b32.xlu0 %v514, 127
    %v524 = vpop.permute.xlu0 %523
    %525 = vrot.lane.b32.xlu0 %v515, 127
    %v526 = vpop.permute.xlu0 %525
    %527 = vrot.lane.b32.xlu0 %v516, 127
    %v528 = vpop.permute.xlu0 %527
    %v533 = vadd.f32 %v429, %v522
    %v534 = vadd.f32 %v430, %v524
    %v535 = vadd.f32 %v431, %v526
    %v536 = vadd.f32 %v432, %v528
    %s537 = sld [smem:[#allocation2 + $0x1c]]
    %v538 = vstv %s537
    %v539 = vmul.f32 %v538, %v181
    %v540 = vmul.f32 %v538, %v182
    %v541 = vmul.f32 %v538, %v183
    %v542 = vmul.f32 %v538, %v184
    %547 = vrot.lane.b32.xlu0 %v539, 127
    %v548 = vpop.permute.xlu0 %547
    %549 = vrot.lane.b32.xlu0 %v540, 127
    %v550 = vpop.permute.xlu0 %549
    %551 = vrot.lane.b32.xlu0 %v541, 127
    %v552 = vpop.permute.xlu0 %551
    %553 = vrot.lane.b32.xlu0 %v542, 127
    %v554 = vpop.permute.xlu0 %553
    %v559 = vadd.f32 %v455, %v548
    %v560 = vadd.f32 %v456, %v550
    %v561 = vadd.f32 %v457, %v552
    %v562 = vadd.f32 %v458, %v554
    %s563 = sld [smem:[#allocation2 + $0x1d]]
    %v564 = vstv %s563
    %v565 = vmul.f32 %v564, %v181
    %v566 = vmul.f32 %v564, %v182
    %v567 = vmul.f32 %v564, %v183
    %v568 = vmul.f32 %v564, %v184
    %573 = vrot.lane.b32.xlu0 %v565, 127
    %v574 = vpop.permute.xlu0 %573
    %575 = vrot.lane.b32.xlu0 %v566, 127
    %v576 = vpop.permute.xlu0 %575
    %577 = vrot.lane.b32.xlu0 %v567, 127
    %v578 = vpop.permute.xlu0 %577
    %579 = vrot.lane.b32.xlu0 %v568, 127
    %v580 = vpop.permute.xlu0 %579
    %v585 = vadd.f32 %v481, %v574
    %v586 = vadd.f32 %v482, %v576
    %v587 = vadd.f32 %v483, %v578
    %v588 = vadd.f32 %v484, %v580
    %s589 = sld [smem:[#allocation2 + $0x1e]]
    %v590 = vstv %s589
    %v591 = vmul.f32 %v590, %v181
    %v592 = vmul.f32 %v590, %v182
    %v593 = vmul.f32 %v590, %v183
    %v594 = vmul.f32 %v590, %v184
    %599 = vrot.lane.b32.xlu0 %v591, 127
    %v600 = vpop.permute.xlu0 %599
    %601 = vrot.lane.b32.xlu0 %v592, 127
    %v602 = vpop.permute.xlu0 %601
    %603 = vrot.lane.b32.xlu0 %v593, 127
    %v604 = vpop.permute.xlu0 %603
    %605 = vrot.lane.b32.xlu0 %v594, 127
    %v606 = vpop.permute.xlu0 %605
    %v611 = vadd.f32 %v507, %v600
    %v612 = vadd.f32 %v508, %v602
    %v613 = vadd.f32 %v509, %v604
    %v614 = vadd.f32 %v510, %v606
    %s615 = sld [smem:[#allocation2 + $0x1f]]
    %v616 = vstv %s615
    %v617 = vmul.f32 %v616, %v181
    %v618 = vmul.f32 %v616, %v182
    %v619 = vmul.f32 %v616, %v183
    %v620 = vmul.f32 %v616, %v184
    %625 = vrot.lane.b32.xlu0 %v617, 127
    %v626 = vpop.permute.xlu0 %625
    %627 = vrot.lane.b32.xlu0 %v618, 127
    %v628 = vpop.permute.xlu0 %627
    %629 = vrot.lane.b32.xlu0 %v619, 127
    %v630 = vpop.permute.xlu0 %629
    %631 = vrot.lane.b32.xlu0 %v620, 127
    %v632 = vpop.permute.xlu0 %631
    %v637 = vadd.f32 %v533, %v626
    %v638 = vadd.f32 %v534, %v628
    %v639 = vadd.f32 %v535, %v630
    %v640 = vadd.f32 %v536, %v632
    %s641 = sld [smem:[#allocation2 + $0x20]]
    %v642 = vstv %s641
    %v643 = vmul.f32 %v642, %v46
    %v644 = vmul.f32 %v642, %v47
    %v645 = vmul.f32 %v642, %v48
    %v646 = vmul.f32 %v642, %v49
    %651 = vrot.lane.b32.xlu0 %v643, 126
    %v652 = vpop.permute.xlu0 %651
    %653 = vrot.lane.b32.xlu0 %v644, 126
    %v654 = vpop.permute.xlu0 %653
    %655 = vrot.lane.b32.xlu0 %v645, 126
    %v656 = vpop.permute.xlu0 %655
    %657 = vrot.lane.b32.xlu0 %v646, 126
    %v658 = vpop.permute.xlu0 %657
    %v663 = vadd.f32 %v559, %v652
    %v664 = vadd.f32 %v560, %v654
    %v665 = vadd.f32 %v561, %v656
    %v666 = vadd.f32 %v562, %v658
    %s667 = sld [smem:[#allocation2 + $0x21]]
    %v668 = vstv %s667
    %v669 = vmul.f32 %v668, %v46
    %v670 = vmul.f32 %v668, %v47
    %v671 = vmul.f32 %v668, %v48
    %v672 = vmul.f32 %v668, %v49
    %677 = vrot.lane.b32.xlu0 %v669, 126
    %v678 = vpop.permute.xlu0 %677
    %679 = vrot.lane.b32.xlu0 %v670, 126
    %v680 = vpop.permute.xlu0 %679
    %681 = vrot.lane.b32.xlu0 %v671, 126
    %v682 = vpop.permute.xlu0 %681
    %683 = vrot.lane.b32.xlu0 %v672, 126
    %v684 = vpop.permute.xlu0 %683
    %v689 = vadd.f32 %v585, %v678
    %v690 = vadd.f32 %v586, %v680
    %v691 = vadd.f32 %v587, %v682
    %v692 = vadd.f32 %v588, %v684
    %s693 = sld [smem:[#allocation2 + $0x22]]
    %v694 = vstv %s693
    %v695 = vmul.f32 %v694, %v46
    %v696 = vmul.f32 %v694, %v47
    %v697 = vmul.f32 %v694, %v48
    %v698 = vmul.f32 %v694, %v49
    %703 = vrot.lane.b32.xlu0 %v695, 126
    %v704 = vpop.permute.xlu0 %703
    %705 = vrot.lane.b32.xlu0 %v696, 126
    %v706 = vpop.permute.xlu0 %705
    %707 = vrot.lane.b32.xlu0 %v697, 126
    %v708 = vpop.permute.xlu0 %707
    %709 = vrot.lane.b32.xlu0 %v698, 126
    %v710 = vpop.permute.xlu0 %709
    %v715 = vadd.f32 %v611, %v704
    %v716 = vadd.f32 %v612, %v706
    %v717 = vadd.f32 %v613, %v708
    %v718 = vadd.f32 %v614, %v710
    %s719 = sld [smem:[#allocation2 + $0x23]]
    %v720 = vstv %s719
    %v721 = vmul.f32 %v720, %v46
    %v722 = vmul.f32 %v720, %v47
    %v723 = vmul.f32 %v720, %v48
    %v724 = vmul.f32 %v720, %v49
    %729 = vrot.lane.b32.xlu0 %v721, 126
    %v730 = vpop.permute.xlu0 %729
    %731 = vrot.lane.b32.xlu0 %v722, 126
    %v732 = vpop.permute.xlu0 %731
    %733 = vrot.lane.b32.xlu0 %v723, 126
    %v734 = vpop.permute.xlu0 %733
    %735 = vrot.lane.b32.xlu0 %v724, 126
    %v736 = vpop.permute.xlu0 %735
    %v741 = vadd.f32 %v637, %v730
    %v742 = vadd.f32 %v638, %v732
    %v743 = vadd.f32 %v639, %v734
    %v744 = vadd.f32 %v640, %v736
    %s745 = sld [smem:[#allocation2 + $0x24]]
    %v746 = vstv %s745
    %v747 = vmul.f32 %v746, %v91
    %v748 = vmul.f32 %v746, %v92
    %v749 = vmul.f32 %v746, %v93
    %v750 = vmul.f32 %v746, %v94
    %755 = vrot.lane.b32.xlu0 %v747, 126
    %v756 = vpop.permute.xlu0 %755
    %757 = vrot.lane.b32.xlu0 %v748, 126
    %v758 = vpop.permute.xlu0 %757
    %759 = vrot.lane.b32.xlu0 %v749, 126
    %v760 = vpop.permute.xlu0 %759
    %761 = vrot.lane.b32.xlu0 %v750, 126
    %v762 = vpop.permute.xlu0 %761
    %v767 = vadd.f32 %v663, %v756
    %v768 = vadd.f32 %v664, %v758
    %v769 = vadd.f32 %v665, %v760
    %v770 = vadd.f32 %v666, %v762
    %s771 = sld [smem:[#allocation2 + $0x25]]
    %v772 = vstv %s771
    %v773 = vmul.f32 %v772, %v91
    %v774 = vmul.f32 %v772, %v92
    %v775 = vmul.f32 %v772, %v93
    %v776 = vmul.f32 %v772, %v94
    %781 = vrot.lane.b32.xlu0 %v773, 126
    %v782 = vpop.permute.xlu0 %781
    %783 = vrot.lane.b32.xlu0 %v774, 126
    %v784 = vpop.permute.xlu0 %783
    %785 = vrot.lane.b32.xlu0 %v775, 126
    %v786 = vpop.permute.xlu0 %785
    %787 = vrot.lane.b32.xlu0 %v776, 126
    %v788 = vpop.permute.xlu0 %787
    %v793 = vadd.f32 %v689, %v782
    %v794 = vadd.f32 %v690, %v784
    %v795 = vadd.f32 %v691, %v786
    %v796 = vadd.f32 %v692, %v788
    %s797 = sld [smem:[#allocation2 + $0x26]]
    %v798 = vstv %s797
    %v799 = vmul.f32 %v798, %v91
    %v800 = vmul.f32 %v798, %v92
    %v801 = vmul.f32 %v798, %v93
    %v802 = vmul.f32 %v798, %v94
    %807 = vrot.lane.b32.xlu0 %v799, 126
    %v808 = vpop.permute.xlu0 %807
    %809 = vrot.lane.b32.xlu0 %v800, 126
    %v810 = vpop.permute.xlu0 %809
    %811 = vrot.lane.b32.xlu0 %v801, 126
    %v812 = vpop.permute.xlu0 %811
    %813 = vrot.lane.b32.xlu0 %v802, 126
    %v814 = vpop.permute.xlu0 %813
    %v819 = vadd.f32 %v715, %v808
    %v820 = vadd.f32 %v716, %v810
    %v821 = vadd.f32 %v717, %v812
    %v822 = vadd.f32 %v718, %v814
    %s823 = sld [smem:[#allocation2 + $0x27]]
    %v824 = vstv %s823
    %v825 = vmul.f32 %v824, %v91
    %v826 = vmul.f32 %v824, %v92
    %v827 = vmul.f32 %v824, %v93
    %v828 = vmul.f32 %v824, %v94
    %833 = vrot.lane.b32.xlu0 %v825, 126
    %v834 = vpop.permute.xlu0 %833
    %835 = vrot.lane.b32.xlu0 %v826, 126
    %v836 = vpop.permute.xlu0 %835
    %837 = vrot.lane.b32.xlu0 %v827, 126
    %v838 = vpop.permute.xlu0 %837
    %839 = vrot.lane.b32.xlu0 %v828, 126
    %v840 = vpop.permute.xlu0 %839
    %v845 = vadd.f32 %v741, %v834
    %v846 = vadd.f32 %v742, %v836
    %v847 = vadd.f32 %v743, %v838
    %v848 = vadd.f32 %v744, %v840
    %s849 = sld [smem:[#allocation2 + $0x28]]
    %v850 = vstv %s849
    %v851 = vmul.f32 %v850, %v136
    %v852 = vmul.f32 %v850, %v137
    %v853 = vmul.f32 %v850, %v138
    %v854 = vmul.f32 %v850, %v139
    %859 = vrot.lane.b32.xlu0 %v851, 126
    %v860 = vpop.permute.xlu0 %859
    %861 = vrot.lane.b32.xlu0 %v852, 126
    %v862 = vpop.permute.xlu0 %861
    %863 = vrot.lane.b32.xlu0 %v853, 126
    %v864 = vpop.permute.xlu0 %863
    %865 = vrot.lane.b32.xlu0 %v854, 126
    %v866 = vpop.permute.xlu0 %865
    %v871 = vadd.f32 %v767, %v860
    %v872 = vadd.f32 %v768, %v862
    %v873 = vadd.f32 %v769, %v864
    %v874 = vadd.f32 %v770, %v866
    %s875 = sld [smem:[#allocation2 + $0x29]]
    %v876 = vstv %s875
    %v877 = vmul.f32 %v876, %v136
    %v878 = vmul.f32 %v876, %v137
    %v879 = vmul.f32 %v876, %v138
    %v880 = vmul.f32 %v876, %v139
    %885 = vrot.lane.b32.xlu0 %v877, 126
    %v886 = vpop.permute.xlu0 %885
    %887 = vrot.lane.b32.xlu0 %v878, 126
    %v888 = vpop.permute.xlu0 %887
    %889 = vrot.lane.b32.xlu0 %v879, 126
    %v890 = vpop.permute.xlu0 %889
    %891 = vrot.lane.b32.xlu0 %v880, 126
    %v892 = vpop.permute.xlu0 %891
    %v897 = vadd.f32 %v793, %v886
    %v898 = vadd.f32 %v794, %v888
    %v899 = vadd.f32 %v795, %v890
    %v900 = vadd.f32 %v796, %v892
    %s901 = sld [smem:[#allocation2 + $0x2a]]
    %v902 = vstv %s901
    %v903 = vmul.f32 %v902, %v136
    %v904 = vmul.f32 %v902, %v137
    %v905 = vmul.f32 %v902, %v138
    %v906 = vmul.f32 %v902, %v139
    %911 = vrot.lane.b32.xlu0 %v903, 126
    %v912 = vpop.permute.xlu0 %911
    %913 = vrot.lane.b32.xlu0 %v904, 126
    %v914 = vpop.permute.xlu0 %913
    %915 = vrot.lane.b32.xlu0 %v905, 126
    %v916 = vpop.permute.xlu0 %915
    %917 = vrot.lane.b32.xlu0 %v906, 126
    %v918 = vpop.permute.xlu0 %917
    %v923 = vadd.f32 %v819, %v912
    %v924 = vadd.f32 %v820, %v914
    %v925 = vadd.f32 %v821, %v916
    %v926 = vadd.f32 %v822, %v918
    %s927 = sld [smem:[#allocation2 + $0x2b]]
    %v928 = vstv %s927
    %v929 = vmul.f32 %v928, %v136
    %v930 = vmul.f32 %v928, %v137
    %v931 = vmul.f32 %v928, %v138
    %v932 = vmul.f32 %v928, %v139
    %937 = vrot.lane.b32.xlu0 %v929, 126
    %v938 = vpop.permute.xlu0 %937
    %939 = vrot.lane.b32.xlu0 %v930, 126
    %v940 = vpop.permute.xlu0 %939
    %941 = vrot.lane.b32.xlu0 %v931, 126
    %v942 = vpop.permute.xlu0 %941
    %943 = vrot.lane.b32.xlu0 %v932, 126
    %v944 = vpop.permute.xlu0 %943
    %v949 = vadd.f32 %v845, %v938
    %v950 = vadd.f32 %v846, %v940
    %v951 = vadd.f32 %v847, %v942
    %v952 = vadd.f32 %v848, %v944
    %s953 = sld [smem:[#allocation2 + $0x2c]]
    %v954 = vstv %s953
    %v955 = vmul.f32 %v954, %v181
    %v956 = vmul.f32 %v954, %v182
    %v957 = vmul.f32 %v954, %v183
    %v958 = vmul.f32 %v954, %v184
    %963 = vrot.lane.b32.xlu0 %v955, 126
    %v964 = vpop.permute.xlu0 %963
    %965 = vrot.lane.b32.xlu0 %v956, 126
    %v966 = vpop.permute.xlu0 %965
    %967 = vrot.lane.b32.xlu0 %v957, 126
    %v968 = vpop.permute.xlu0 %967
    %969 = vrot.lane.b32.xlu0 %v958, 126
    %v970 = vpop.permute.xlu0 %969
    %v975 = vadd.f32 %v871, %v964
    %v976 = vadd.f32 %v872, %v966
    %v977 = vadd.f32 %v873, %v968
    %v978 = vadd.f32 %v874, %v970
    %s979 = sld [smem:[#allocation2 + $0x2d]]
    %v980 = vstv %s979
    %v981 = vmul.f32 %v980, %v181
    %v982 = vmul.f32 %v980, %v182
    %v983 = vmul.f32 %v980, %v183
    %v984 = vmul.f32 %v980, %v184
    %989 = vrot.lane.b32.xlu0 %v981, 126
    %v990 = vpop.permute.xlu0 %989
    %991 = vrot.lane.b32.xlu0 %v982, 126
    %v992 = vpop.permute.xlu0 %991
    %993 = vrot.lane.b32.xlu0 %v983, 126
    %v994 = vpop.permute.xlu0 %993
    %995 = vrot.lane.b32.xlu0 %v984, 126
    %v996 = vpop.permute.xlu0 %995
    %v1001 = vadd.f32 %v897, %v990
    %v1002 = vadd.f32 %v898, %v992
    %v1003 = vadd.f32 %v899, %v994
    %v1004 = vadd.f32 %v900, %v996
    %s1005 = sld [smem:[#allocation2 + $0x2e]]
    %v1006 = vstv %s1005
    %v1007 = vmul.f32 %v1006, %v181
    %v1008 = vmul.f32 %v1006, %v182
    %v1009 = vmul.f32 %v1006, %v183
    %v1010 = vmul.f32 %v1006, %v184
    %1015 = vrot.lane.b32.xlu0 %v1007, 126
    %v1016 = vpop.permute.xlu0 %1015
    %1017 = vrot.lane.b32.xlu0 %v1008, 126
    %v1018 = vpop.permute.xlu0 %1017
    %1019 = vrot.lane.b32.xlu0 %v1009, 126
    %v1020 = vpop.permute.xlu0 %1019
    %1021 = vrot.lane.b32.xlu0 %v1010, 126
    %v1022 = vpop.permute.xlu0 %1021
    %v1027 = vadd.f32 %v923, %v1016
    %v1028 = vadd.f32 %v924, %v1018
    %v1029 = vadd.f32 %v925, %v1020
    %v1030 = vadd.f32 %v926, %v1022
    %s1031 = sld [smem:[#allocation2 + $0x2f]]
    %v1032 = vstv %s1031
    %v1033 = vmul.f32 %v1032, %v181
    %v1034 = vmul.f32 %v1032, %v182
    %v1035 = vmul.f32 %v1032, %v183
    %v1036 = vmul.f32 %v1032, %v184
    %1041 = vrot.lane.b32.xlu0 %v1033, 126
    %v1042 = vpop.permute.xlu0 %1041
    %1043 = vrot.lane.b32.xlu0 %v1034, 126
    %v1044 = vpop.permute.xlu0 %1043
    %1045 = vrot.lane.b32.xlu0 %v1035, 126
    %v1046 = vpop.permute.xlu0 %1045
    %1047 = vrot.lane.b32.xlu0 %v1036, 126
    %v1048 = vpop.permute.xlu0 %1047
    %v1053 = vadd.f32 %v949, %v1042
    %v1054 = vadd.f32 %v950, %v1044
    %v1055 = vadd.f32 %v951, %v1046
    %v1056 = vadd.f32 %v952, %v1048
    %v1057 = vld [vmem:[%s0 + $0x1] sm:$0xff]
    %v1058 = vld [vmem:[%s0 + $0x9] sm:$0xff]
    %v1059 = vld [vmem:[%s0 + $0x61] sm:$0xff]
    %v1060 = vld [vmem:[%s0 + $0x69] sm:$0xff]
    %s1061 = sld [smem:[#allocation2 + $0x30]]
    %v1062 = vstv %s1061
    %v1063 = vmul.f32 %v1062, %v1057
    %v1064 = vmul.f32 %v1062, %v1058
    %v1065 = vmul.f32 %v1062, %v1059
    %v1066 = vmul.f32 %v1062, %v1060
    %v1067 = vadd.f32 %v975, %v1063
    %v1068 = vadd.f32 %v976, %v1064
    %v1069 = vadd.f32 %v977, %v1065
    %v1070 = vadd.f32 %v978, %v1066
    %s1071 = sld [smem:[#allocation2 + $0x31]]
    %v1072 = vstv %s1071
    %v1073 = vmul.f32 %v1072, %v1057
    %v1074 = vmul.f32 %v1072, %v1058
    %v1075 = vmul.f32 %v1072, %v1059
    %v1076 = vmul.f32 %v1072, %v1060
    %v1077 = vadd.f32 %v1001, %v1073
    %v1078 = vadd.f32 %v1002, %v1074
    %v1079 = vadd.f32 %v1003, %v1075
    %v1080 = vadd.f32 %v1004, %v1076
    %s1081 = sld [smem:[#allocation2 + $0x32]]
    %v1082 = vstv %s1081
    %v1083 = vmul.f32 %v1082, %v1057
    %v1084 = vmul.f32 %v1082, %v1058
    %v1085 = vmul.f32 %v1082, %v1059
    %v1086 = vmul.f32 %v1082, %v1060
    %v1087 = vadd.f32 %v1027, %v1083
    %v1088 = vadd.f32 %v1028, %v1084
    %v1089 = vadd.f32 %v1029, %v1085
    %v1090 = vadd.f32 %v1030, %v1086
    %s1091 = sld [smem:[#allocation2 + $0x33]]
    %v1092 = vstv %s1091
    %v1093 = vmul.f32 %v1092, %v1057
    %v1094 = vmul.f32 %v1092, %v1058
    %v1095 = vmul.f32 %v1092, %v1059
    %v1096 = vmul.f32 %v1092, %v1060
    %v1097 = vadd.f32 %v1053, %v1093
    %v1098 = vadd.f32 %v1054, %v1094
    %v1099 = vadd.f32 %v1055, %v1095
    %v1100 = vadd.f32 %v1056, %v1096
    %v1101 = vld [vmem:[%s90 + $0x1] sm:$0xff]
    %v1102 = vld [vmem:[%s90 + $0x9] sm:$0xff]
    %v1103 = vld [vmem:[%s90 + $0x61] sm:$0xff]
    %v1104 = vld [vmem:[%s90 + $0x69] sm:$0xff]
    %s1105 = sld [smem:[#allocation2 + $0x34]]
    %v1106 = vstv %s1105
    %v1107 = vmul.f32 %v1106, %v1101
    %v1108 = vmul.f32 %v1106, %v1102
    %v1109 = vmul.f32 %v1106, %v1103
    %v1110 = vmul.f32 %v1106, %v1104
    %v1111 = vadd.f32 %v1067, %v1107
    %v1112 = vadd.f32 %v1068, %v1108
    %v1113 = vadd.f32 %v1069, %v1109
    %v1114 = vadd.f32 %v1070, %v1110
    %s1115 = sld [smem:[#allocation2 + $0x35]]
    %v1116 = vstv %s1115
    %v1117 = vmul.f32 %v1116, %v1101
    %v1118 = vmul.f32 %v1116, %v1102
    %v1119 = vmul.f32 %v1116, %v1103
    %v1120 = vmul.f32 %v1116, %v1104
    %v1121 = vadd.f32 %v1077, %v1117
    %v1122 = vadd.f32 %v1078, %v1118
    %v1123 = vadd.f32 %v1079, %v1119
    %v1124 = vadd.f32 %v1080, %v1120
    %s1125 = sld [smem:[#allocation2 + $0x36]]
    %v1126 = vstv %s1125
    %v1127 = vmul.f32 %v1126, %v1101
    %v1128 = vmul.f32 %v1126, %v1102
    %v1129 = vmul.f32 %v1126, %v1103
    %v1130 = vmul.f32 %v1126, %v1104
    %v1131 = vadd.f32 %v1087, %v1127
    %v1132 = vadd.f32 %v1088, %v1128
    %v1133 = vadd.f32 %v1089, %v1129
    %v1134 = vadd.f32 %v1090, %v1130
    %s1135 = sld [smem:[#allocation2 + $0x37]]
    %v1136 = vstv %s1135
    %v1137 = vmul.f32 %v1136, %v1101
    %v1138 = vmul.f32 %v1136, %v1102
    %v1139 = vmul.f32 %v1136, %v1103
    %v1140 = vmul.f32 %v1136, %v1104
    %v1141 = vadd.f32 %v1097, %v1137
    %v1142 = vadd.f32 %v1098, %v1138
    %v1143 = vadd.f32 %v1099, %v1139
    %v1144 = vadd.f32 %v1100, %v1140
    %v1145 = vld [vmem:[%s135 + $0x1] sm:$0xff]
    %v1146 = vld [vmem:[%s135 + $0x9] sm:$0xff]
    %v1147 = vld [vmem:[%s135 + $0x61] sm:$0xff]
    %v1148 = vld [vmem:[%s135 + $0x69] sm:$0xff]
    %s1149 = sld [smem:[#allocation2 + $0x38]]
    %v1150 = vstv %s1149
    %v1151 = vmul.f32 %v1150, %v1145
    %v1152 = vmul.f32 %v1150, %v1146
    %v1153 = vmul.f32 %v1150, %v1147
    %v1154 = vmul.f32 %v1150, %v1148
    %v1155 = vadd.f32 %v1111, %v1151
    %v1156 = vadd.f32 %v1112, %v1152
    %v1157 = vadd.f32 %v1113, %v1153
    %v1158 = vadd.f32 %v1114, %v1154
    %s1159 = sld [smem:[#allocation2 + $0x39]]
    %v1160 = vstv %s1159
    %v1161 = vmul.f32 %v1160, %v1145
    %v1162 = vmul.f32 %v1160, %v1146
    %v1163 = vmul.f32 %v1160, %v1147
    %v1164 = vmul.f32 %v1160, %v1148
    %v1165 = vadd.f32 %v1121, %v1161
    %v1166 = vadd.f32 %v1122, %v1162
    %v1167 = vadd.f32 %v1123, %v1163
    %v1168 = vadd.f32 %v1124, %v1164
    %s1169 = sld [smem:[#allocation2 + $0x3a]]
    %v1170 = vstv %s1169
    %v1171 = vmul.f32 %v1170, %v1145
    %v1172 = vmul.f32 %v1170, %v1146
    %v1173 = vmul.f32 %v1170, %v1147
    %v1174 = vmul.f32 %v1170, %v1148
    %v1175 = vadd.f32 %v1131, %v1171
    %v1176 = vadd.f32 %v1132, %v1172
    %v1177 = vadd.f32 %v1133, %v1173
    %v1178 = vadd.f32 %v1134, %v1174
    %s1179 = sld [smem:[#allocation2 + $0x3b]]
    %v1180 = vstv %s1179
    %v1181 = vmul.f32 %v1180, %v1145
    %v1182 = vmul.f32 %v1180, %v1146
    %v1183 = vmul.f32 %v1180, %v1147
    %v1184 = vmul.f32 %v1180, %v1148
    %v1185 = vadd.f32 %v1141, %v1181
    %v1186 = vadd.f32 %v1142, %v1182
    %v1187 = vadd.f32 %v1143, %v1183
    %v1188 = vadd.f32 %v1144, %v1184
    %v1189 = vld [vmem:[%s180 + $0x1] sm:$0xff]
    %v1190 = vld [vmem:[%s180 + $0x9] sm:$0xff]
    %v1191 = vld [vmem:[%s180 + $0x61] sm:$0xff]
    %v1192 = vld [vmem:[%s180 + $0x69] sm:$0xff]
    %s1193 = sld [smem:[#allocation2 + $0x3c]]
    %v1194 = vstv %s1193
    %v1195 = vmul.f32 %v1194, %v1189
    %v1196 = vmul.f32 %v1194, %v1190
    %v1197 = vmul.f32 %v1194, %v1191
    %v1198 = vmul.f32 %v1194, %v1192
    %v1199 = vadd.f32 %v1155, %v1195
    %v1200 = vadd.f32 %v1156, %v1196
    %v1201 = vadd.f32 %v1157, %v1197
    %v1202 = vadd.f32 %v1158, %v1198
    %s1203 = sld [smem:[#allocation2 + $0x3d]]
    %v1204 = vstv %s1203
    %v1205 = vmul.f32 %v1204, %v1189
    %v1206 = vmul.f32 %v1204, %v1190
    %v1207 = vmul.f32 %v1204, %v1191
    %v1208 = vmul.f32 %v1204, %v1192
    %v1209 = vadd.f32 %v1165, %v1205
    %v1210 = vadd.f32 %v1166, %v1206
    %v1211 = vadd.f32 %v1167, %v1207
    %v1212 = vadd.f32 %v1168, %v1208
    %s1213 = sld [smem:[#allocation2 + $0x3e]]
    %v1214 = vstv %s1213
    %v1215 = vmul.f32 %v1214, %v1189
    %v1216 = vmul.f32 %v1214, %v1190
    %v1217 = vmul.f32 %v1214, %v1191
    %v1218 = vmul.f32 %v1214, %v1192
    %v1219 = vadd.f32 %v1175, %v1215
    %v1220 = vadd.f32 %v1176, %v1216
    %v1221 = vadd.f32 %v1177, %v1217
    %v1222 = vadd.f32 %v1178, %v1218
    %s1223 = sld [smem:[#allocation2 + $0x3f]]
    %v1224 = vstv %s1223
    %v1225 = vmul.f32 %v1224, %v1189
    %v1226 = vmul.f32 %v1224, %v1190
    %v1227 = vmul.f32 %v1224, %v1191
    %v1228 = vmul.f32 %v1224, %v1192
    %v1229 = vadd.f32 %v1185, %v1225
    %v1230 = vadd.f32 %v1186, %v1226
    %v1231 = vadd.f32 %v1187, %v1227
    %v1232 = vadd.f32 %v1188, %v1228
    %s1233 = sld [smem:[#allocation2 + $0x40]]
    %v1234 = vstv %s1233
    %v1235 = vmul.f32 %v1234, %v1057
    %v1236 = vmul.f32 %v1234, %v1058
    %v1237 = vmul.f32 %v1234, %v1059
    %v1238 = vmul.f32 %v1234, %v1060
    %1243 = vrot.lane.b32.xlu0 %v1235, 127
    %v1244 = vpop.permute.xlu0 %1243
    %1245 = vrot.lane.b32.xlu0 %v1236, 127
    %v1246 = vpop.permute.xlu0 %1245
    %1247 = vrot.lane.b32.xlu0 %v1237, 127
    %v1248 = vpop.permute.xlu0 %1247
    %1249 = vrot.lane.b32.xlu0 %v1238, 127
    %v1250 = vpop.permute.xlu0 %1249
    %v1255 = vadd.f32 %v1199, %v1244
    %v1256 = vadd.f32 %v1200, %v1246
    %v1257 = vadd.f32 %v1201, %v1248
    %v1258 = vadd.f32 %v1202, %v1250
    %s1259 = sld [smem:[#allocation2 + $0x41]]
    %v1260 = vstv %s1259
    %v1261 = vmul.f32 %v1260, %v1057
    %v1262 = vmul.f32 %v1260, %v1058
    %v1263 = vmul.f32 %v1260, %v1059
    %v1264 = vmul.f32 %v1260, %v1060
    %1269 = vrot.lane.b32.xlu0 %v1261, 127
    %v1270 = vpop.permute.xlu0 %1269
    %1271 = vrot.lane.b32.xlu0 %v1262, 127
    %v1272 = vpop.permute.xlu0 %1271
    %1273 = vrot.lane.b32.xlu0 %v1263, 127
    %v1274 = vpop.permute.xlu0 %1273
    %1275 = vrot.lane.b32.xlu0 %v1264, 127
    %v1276 = vpop.permute.xlu0 %1275
    %v1281 = vadd.f32 %v1209, %v1270
    %v1282 = vadd.f32 %v1210, %v1272
    %v1283 = vadd.f32 %v1211, %v1274
    %v1284 = vadd.f32 %v1212, %v1276
    %s1285 = sld [smem:[#allocation2 + $0x42]]
    %v1286 = vstv %s1285
    %v1287 = vmul.f32 %v1286, %v1057
    %v1288 = vmul.f32 %v1286, %v1058
    %v1289 = vmul.f32 %v1286, %v1059
    %v1290 = vmul.f32 %v1286, %v1060
    %1295 = vrot.lane.b32.xlu0 %v1287, 127
    %v1296 = vpop.permute.xlu0 %1295
    %1297 = vrot.lane.b32.xlu0 %v1288, 127
    %v1298 = vpop.permute.xlu0 %1297
    %1299 = vrot.lane.b32.xlu0 %v1289, 127
    %v1300 = vpop.permute.xlu0 %1299
    %1301 = vrot.lane.b32.xlu0 %v1290, 127
    %v1302 = vpop.permute.xlu0 %1301
    %v1307 = vadd.f32 %v1219, %v1296
    %v1308 = vadd.f32 %v1220, %v1298
    %v1309 = vadd.f32 %v1221, %v1300
    %v1310 = vadd.f32 %v1222, %v1302
    %s1311 = sld [smem:[#allocation2 + $0x43]]
    %v1312 = vstv %s1311
    %v1313 = vmul.f32 %v1312, %v1057
    %v1314 = vmul.f32 %v1312, %v1058
    %v1315 = vmul.f32 %v1312, %v1059
    %v1316 = vmul.f32 %v1312, %v1060
    %1321 = vrot.lane.b32.xlu0 %v1313, 127
    %v1322 = vpop.permute.xlu0 %1321
    %1323 = vrot.lane.b32.xlu0 %v1314, 127
    %v1324 = vpop.permute.xlu0 %1323
    %1325 = vrot.lane.b32.xlu0 %v1315, 127
    %v1326 = vpop.permute.xlu0 %1325
    %1327 = vrot.lane.b32.xlu0 %v1316, 127
    %v1328 = vpop.permute.xlu0 %1327
    %v1333 = vadd.f32 %v1229, %v1322
    %v1334 = vadd.f32 %v1230, %v1324
    %v1335 = vadd.f32 %v1231, %v1326
    %v1336 = vadd.f32 %v1232, %v1328
    %s1337 = sld [smem:[#allocation2 + $0x44]]
    %v1338 = vstv %s1337
    %v1339 = vmul.f32 %v1338, %v1101
    %v1340 = vmul.f32 %v1338, %v1102
    %v1341 = vmul.f32 %v1338, %v1103
    %v1342 = vmul.f32 %v1338, %v1104
    %1347 = vrot.lane.b32.xlu0 %v1339, 127
    %v1348 = vpop.permute.xlu0 %1347
    %1349 = vrot.lane.b32.xlu0 %v1340, 127
    %v1350 = vpop.permute.xlu0 %1349
    %1351 = vrot.lane.b32.xlu0 %v1341, 127
    %v1352 = vpop.permute.xlu0 %1351
    %1353 = vrot.lane.b32.xlu0 %v1342, 127
    %v1354 = vpop.permute.xlu0 %1353
    %v1359 = vadd.f32 %v1255, %v1348
    %v1360 = vadd.f32 %v1256, %v1350
    %v1361 = vadd.f32 %v1257, %v1352
    %v1362 = vadd.f32 %v1258, %v1354
    %s1363 = sld [smem:[#allocation2 + $0x45]]
    %v1364 = vstv %s1363
    %v1365 = vmul.f32 %v1364, %v1101
    %v1366 = vmul.f32 %v1364, %v1102
    %v1367 = vmul.f32 %v1364, %v1103
    %v1368 = vmul.f32 %v1364, %v1104
    %1373 = vrot.lane.b32.xlu0 %v1365, 127
    %v1374 = vpop.permute.xlu0 %1373
    %1375 = vrot.lane.b32.xlu0 %v1366, 127
    %v1376 = vpop.permute.xlu0 %1375
    %1377 = vrot.lane.b32.xlu0 %v1367, 127
    %v1378 = vpop.permute.xlu0 %1377
    %1379 = vrot.lane.b32.xlu0 %v1368, 127
    %v1380 = vpop.permute.xlu0 %1379
    %v1385 = vadd.f32 %v1281, %v1374
    %v1386 = vadd.f32 %v1282, %v1376
    %v1387 = vadd.f32 %v1283, %v1378
    %v1388 = vadd.f32 %v1284, %v1380
    %s1389 = sld [smem:[#allocation2 + $0x46]]
    %v1390 = vstv %s1389
    %v1391 = vmul.f32 %v1390, %v1101
    %v1392 = vmul.f32 %v1390, %v1102
    %v1393 = vmul.f32 %v1390, %v1103
    %v1394 = vmul.f32 %v1390, %v1104
    %1399 = vrot.lane.b32.xlu0 %v1391, 127
    %v1400 = vpop.permute.xlu0 %1399
    %1401 = vrot.lane.b32.xlu0 %v1392, 127
    %v1402 = vpop.permute.xlu0 %1401
    %1403 = vrot.lane.b32.xlu0 %v1393, 127
    %v1404 = vpop.permute.xlu0 %1403
    %1405 = vrot.lane.b32.xlu0 %v1394, 127
    %v1406 = vpop.permute.xlu0 %1405
    %v1411 = vadd.f32 %v1307, %v1400
    %v1412 = vadd.f32 %v1308, %v1402
    %v1413 = vadd.f32 %v1309, %v1404
    %v1414 = vadd.f32 %v1310, %v1406
    %s1415 = sld [smem:[#allocation2 + $0x47]]
    %v1416 = vstv %s1415
    %v1417 = vmul.f32 %v1416, %v1101
    %v1418 = vmul.f32 %v1416, %v1102
    %v1419 = vmul.f32 %v1416, %v1103
    %v1420 = vmul.f32 %v1416, %v1104
    %1425 = vrot.lane.b32.xlu0 %v1417, 127
    %v1426 = vpop.permute.xlu0 %1425
    %1427 = vrot.lane.b32.xlu0 %v1418, 127
    %v1428 = vpop.permute.xlu0 %1427
    %1429 = vrot.lane.b32.xlu0 %v1419, 127
    %v1430 = vpop.permute.xlu0 %1429
    %1431 = vrot.lane.b32.xlu0 %v1420, 127
    %v1432 = vpop.permute.xlu0 %1431
    %v1437 = vadd.f32 %v1333, %v1426
    %v1438 = vadd.f32 %v1334, %v1428
    %v1439 = vadd.f32 %v1335, %v1430
    %v1440 = vadd.f32 %v1336, %v1432
    %s1441 = sld [smem:[#allocation2 + $0x48]]
    %v1442 = vstv %s1441
    %v1443 = vmul.f32 %v1442, %v1145
    %v1444 = vmul.f32 %v1442, %v1146
    %v1445 = vmul.f32 %v1442, %v1147
    %v1446 = vmul.f32 %v1442, %v1148
    %1451 = vrot.lane.b32.xlu0 %v1443, 127
    %v1452 = vpop.permute.xlu0 %1451
    %1453 = vrot.lane.b32.xlu0 %v1444, 127
    %v1454 = vpop.permute.xlu0 %1453
    %1455 = vrot.lane.b32.xlu0 %v1445, 127
    %v1456 = vpop.permute.xlu0 %1455
    %1457 = vrot.lane.b32.xlu0 %v1446, 127
    %v1458 = vpop.permute.xlu0 %1457
    %v1463 = vadd.f32 %v1359, %v1452
    %v1464 = vadd.f32 %v1360, %v1454
    %v1465 = vadd.f32 %v1361, %v1456
    %v1466 = vadd.f32 %v1362, %v1458
    %s1467 = sld [smem:[#allocation2 + $0x49]]
    %v1468 = vstv %s1467
    %v1469 = vmul.f32 %v1468, %v1145
    %v1470 = vmul.f32 %v1468, %v1146
    %v1471 = vmul.f32 %v1468, %v1147
    %v1472 = vmul.f32 %v1468, %v1148
    %1477 = vrot.lane.b32.xlu0 %v1469, 127
    %v1478 = vpop.permute.xlu0 %1477
    %1479 = vrot.lane.b32.xlu0 %v1470, 127
    %v1480 = vpop.permute.xlu0 %1479
    %1481 = vrot.lane.b32.xlu0 %v1471, 127
    %v1482 = vpop.permute.xlu0 %1481
    %1483 = vrot.lane.b32.xlu0 %v1472, 127
    %v1484 = vpop.permute.xlu0 %1483
    %v1489 = vadd.f32 %v1385, %v1478
    %v1490 = vadd.f32 %v1386, %v1480
    %v1491 = vadd.f32 %v1387, %v1482
    %v1492 = vadd.f32 %v1388, %v1484
    %s1493 = sld [smem:[#allocation2 + $0x4a]]
    %v1494 = vstv %s1493
    %v1495 = vmul.f32 %v1494, %v1145
    %v1496 = vmul.f32 %v1494, %v1146
    %v1497 = vmul.f32 %v1494, %v1147
    %v1498 = vmul.f32 %v1494, %v1148
    %1503 = vrot.lane.b32.xlu0 %v1495, 127
    %v1504 = vpop.permute.xlu0 %1503
    %1505 = vrot.lane.b32.xlu0 %v1496, 127
    %v1506 = vpop.permute.xlu0 %1505
    %1507 = vrot.lane.b32.xlu0 %v1497, 127
    %v1508 = vpop.permute.xlu0 %1507
    %1509 = vrot.lane.b32.xlu0 %v1498, 127
    %v1510 = vpop.permute.xlu0 %1509
    %v1515 = vadd.f32 %v1411, %v1504
    %v1516 = vadd.f32 %v1412, %v1506
    %v1517 = vadd.f32 %v1413, %v1508
    %v1518 = vadd.f32 %v1414, %v1510
    %s1519 = sld [smem:[#allocation2 + $0x4b]]
    %v1520 = vstv %s1519
    %v1521 = vmul.f32 %v1520, %v1145
    %v1522 = vmul.f32 %v1520, %v1146
    %v1523 = vmul.f32 %v1520, %v1147
    %v1524 = vmul.f32 %v1520, %v1148
    %1529 = vrot.lane.b32.xlu0 %v1521, 127
    %v1530 = vpop.permute.xlu0 %1529
    %1531 = vrot.lane.b32.xlu0 %v1522, 127
    %v1532 = vpop.permute.xlu0 %1531
    %1533 = vrot.lane.b32.xlu0 %v1523, 127
    %v1534 = vpop.permute.xlu0 %1533
    %1535 = vrot.lane.b32.xlu0 %v1524, 127
    %v1536 = vpop.permute.xlu0 %1535
    %v1541 = vadd.f32 %v1437, %v1530
    %v1542 = vadd.f32 %v1438, %v1532
    %v1543 = vadd.f32 %v1439, %v1534
    %v1544 = vadd.f32 %v1440, %v1536
    %s1545 = sld [smem:[#allocation2 + $0x4c]]
    %v1546 = vstv %s1545
    %v1547 = vmul.f32 %v1546, %v1189
    %v1548 = vmul.f32 %v1546, %v1190
    %v1549 = vmul.f32 %v1546, %v1191
    %v1550 = vmul.f32 %v1546, %v1192
    %1555 = vrot.lane.b32.xlu0 %v1547, 127
    %v1556 = vpop.permute.xlu0 %1555
    %1557 = vrot.lane.b32.xlu0 %v1548, 127
    %v1558 = vpop.permute.xlu0 %1557
    %1559 = vrot.lane.b32.xlu0 %v1549, 127
    %v1560 = vpop.permute.xlu0 %1559
    %1561 = vrot.lane.b32.xlu0 %v1550, 127
    %v1562 = vpop.permute.xlu0 %1561
    %v1567 = vadd.f32 %v1463, %v1556
    %v1568 = vadd.f32 %v1464, %v1558
    %v1569 = vadd.f32 %v1465, %v1560
    %v1570 = vadd.f32 %v1466, %v1562
    %s1571 = sld [smem:[#allocation2 + $0x4d]]
    %v1572 = vstv %s1571
    %v1573 = vmul.f32 %v1572, %v1189
    %v1574 = vmul.f32 %v1572, %v1190
    %v1575 = vmul.f32 %v1572, %v1191
    %v1576 = vmul.f32 %v1572, %v1192
    %1581 = vrot.lane.b32.xlu0 %v1573, 127
    %v1582 = vpop.permute.xlu0 %1581
    %1583 = vrot.lane.b32.xlu0 %v1574, 127
    %v1584 = vpop.permute.xlu0 %1583
    %1585 = vrot.lane.b32.xlu0 %v1575, 127
    %v1586 = vpop.permute.xlu0 %1585
    %1587 = vrot.lane.b32.xlu0 %v1576, 127
    %v1588 = vpop.permute.xlu0 %1587
    %v1593 = vadd.f32 %v1489, %v1582
    %v1594 = vadd.f32 %v1490, %v1584
    %v1595 = vadd.f32 %v1491, %v1586
    %v1596 = vadd.f32 %v1492, %v1588
    %s1597 = sld [smem:[#allocation2 + $0x4e]]
    %v1598 = vstv %s1597
    %v1599 = vmul.f32 %v1598, %v1189
    %v1600 = vmul.f32 %v1598, %v1190
    %v1601 = vmul.f32 %v1598, %v1191
    %v1602 = vmul.f32 %v1598, %v1192
    %1607 = vrot.lane.b32.xlu0 %v1599, 127
    %v1608 = vpop.permute.xlu0 %1607
    %1609 = vrot.lane.b32.xlu0 %v1600, 127
    %v1610 = vpop.permute.xlu0 %1609
    %1611 = vrot.lane.b32.xlu0 %v1601, 127
    %v1612 = vpop.permute.xlu0 %1611
    %1613 = vrot.lane.b32.xlu0 %v1602, 127
    %v1614 = vpop.permute.xlu0 %1613
    %v1619 = vadd.f32 %v1515, %v1608
    %v1620 = vadd.f32 %v1516, %v1610
    %v1621 = vadd.f32 %v1517, %v1612
    %v1622 = vadd.f32 %v1518, %v1614
    %s1623 = sld [smem:[#allocation2 + $0x4f]]
    %v1624 = vstv %s1623
    %v1625 = vmul.f32 %v1624, %v1189
    %v1626 = vmul.f32 %v1624, %v1190
    %v1627 = vmul.f32 %v1624, %v1191
    %v1628 = vmul.f32 %v1624, %v1192
    %1633 = vrot.lane.b32.xlu0 %v1625, 127
    %v1634 = vpop.permute.xlu0 %1633
    %1635 = vrot.lane.b32.xlu0 %v1626, 127
    %v1636 = vpop.permute.xlu0 %1635
    %1637 = vrot.lane.b32.xlu0 %v1627, 127
    %v1638 = vpop.permute.xlu0 %1637
    %1639 = vrot.lane.b32.xlu0 %v1628, 127
    %v1640 = vpop.permute.xlu0 %1639
    %v1645 = vadd.f32 %v1541, %v1634
    %v1646 = vadd.f32 %v1542, %v1636
    %v1647 = vadd.f32 %v1543, %v1638
    %v1648 = vadd.f32 %v1544, %v1640
    %s1649 = sld [smem:[#allocation2 + $0x50]]
    %v1650 = vstv %s1649
    %v1651 = vmul.f32 %v1650, %v1057
    %v1652 = vmul.f32 %v1650, %v1058
    %v1653 = vmul.f32 %v1650, %v1059
    %v1654 = vmul.f32 %v1650, %v1060
    %1659 = vrot.lane.b32.xlu0 %v1651, 126
    %v1660 = vpop.permute.xlu0 %1659
    %1661 = vrot.lane.b32.xlu0 %v1652, 126
    %v1662 = vpop.permute.xlu0 %1661
    %1663 = vrot.lane.b32.xlu0 %v1653, 126
    %v1664 = vpop.permute.xlu0 %1663
    %1665 = vrot.lane.b32.xlu0 %v1654, 126
    %v1666 = vpop.permute.xlu0 %1665
    %v1671 = vadd.f32 %v1567, %v1660
    %v1672 = vadd.f32 %v1568, %v1662
    %v1673 = vadd.f32 %v1569, %v1664
    %v1674 = vadd.f32 %v1570, %v1666
    %s1675 = sld [smem:[#allocation2 + $0x51]]
    %v1676 = vstv %s1675
    %v1677 = vmul.f32 %v1676, %v1057
    %v1678 = vmul.f32 %v1676, %v1058
    %v1679 = vmul.f32 %v1676, %v1059
    %v1680 = vmul.f32 %v1676, %v1060
    %1685 = vrot.lane.b32.xlu0 %v1677, 126
    %v1686 = vpop.permute.xlu0 %1685
    %1687 = vrot.lane.b32.xlu0 %v1678, 126
    %v1688 = vpop.permute.xlu0 %1687
    %1689 = vrot.lane.b32.xlu0 %v1679, 126
    %v1690 = vpop.permute.xlu0 %1689
    %1691 = vrot.lane.b32.xlu0 %v1680, 126
    %v1692 = vpop.permute.xlu0 %1691
    %v1697 = vadd.f32 %v1593, %v1686
    %v1698 = vadd.f32 %v1594, %v1688
    %v1699 = vadd.f32 %v1595, %v1690
    %v1700 = vadd.f32 %v1596, %v1692
    %s1701 = sld [smem:[#allocation2 + $0x52]]
    %v1702 = vstv %s1701
    %v1703 = vmul.f32 %v1702, %v1057
    %v1704 = vmul.f32 %v1702, %v1058
    %v1705 = vmul.f32 %v1702, %v1059
    %v1706 = vmul.f32 %v1702, %v1060
    %1711 = vrot.lane.b32.xlu0 %v1703, 126
    %v1712 = vpop.permute.xlu0 %1711
    %1713 = vrot.lane.b32.xlu0 %v1704, 126
    %v1714 = vpop.permute.xlu0 %1713
    %1715 = vrot.lane.b32.xlu0 %v1705, 126
    %v1716 = vpop.permute.xlu0 %1715
    %1717 = vrot.lane.b32.xlu0 %v1706, 126
    %v1718 = vpop.permute.xlu0 %1717
    %v1723 = vadd.f32 %v1619, %v1712
    %v1724 = vadd.f32 %v1620, %v1714
    %v1725 = vadd.f32 %v1621, %v1716
    %v1726 = vadd.f32 %v1622, %v1718
    %s1727 = sld [smem:[#allocation2 + $0x53]]
    %v1728 = vstv %s1727
    %v1729 = vmul.f32 %v1728, %v1057
    %v1730 = vmul.f32 %v1728, %v1058
    %v1731 = vmul.f32 %v1728, %v1059
    %v1732 = vmul.f32 %v1728, %v1060
    %1737 = vrot.lane.b32.xlu0 %v1729, 126
    %v1738 = vpop.permute.xlu0 %1737
    %1739 = vrot.lane.b32.xlu0 %v1730, 126
    %v1740 = vpop.permute.xlu0 %1739
    %1741 = vrot.lane.b32.xlu0 %v1731, 126
    %v1742 = vpop.permute.xlu0 %1741
    %1743 = vrot.lane.b32.xlu0 %v1732, 126
    %v1744 = vpop.permute.xlu0 %1743
    %v1749 = vadd.f32 %v1645, %v1738
    %v1750 = vadd.f32 %v1646, %v1740
    %v1751 = vadd.f32 %v1647, %v1742
    %v1752 = vadd.f32 %v1648, %v1744
    %s1753 = sld [smem:[#allocation2 + $0x54]]
    %v1754 = vstv %s1753
    %v1755 = vmul.f32 %v1754, %v1101
    %v1756 = vmul.f32 %v1754, %v1102
    %v1757 = vmul.f32 %v1754, %v1103
    %v1758 = vmul.f32 %v1754, %v1104
    %1763 = vrot.lane.b32.xlu0 %v1755, 126
    %v1764 = vpop.permute.xlu0 %1763
    %1765 = vrot.lane.b32.xlu0 %v1756, 126
    %v1766 = vpop.permute.xlu0 %1765
    %1767 = vrot.lane.b32.xlu0 %v1757, 126
    %v1768 = vpop.permute.xlu0 %1767
    %1769 = vrot.lane.b32.xlu0 %v1758, 126
    %v1770 = vpop.permute.xlu0 %1769
    %v1775 = vadd.f32 %v1671, %v1764
    %v1776 = vadd.f32 %v1672, %v1766
    %v1777 = vadd.f32 %v1673, %v1768
    %v1778 = vadd.f32 %v1674, %v1770
    %s1779 = sld [smem:[#allocation2 + $0x55]]
    %v1780 = vstv %s1779
    %v1781 = vmul.f32 %v1780, %v1101
    %v1782 = vmul.f32 %v1780, %v1102
    %v1783 = vmul.f32 %v1780, %v1103
    %v1784 = vmul.f32 %v1780, %v1104
    %1789 = vrot.lane.b32.xlu0 %v1781, 126
    %v1790 = vpop.permute.xlu0 %1789
    %1791 = vrot.lane.b32.xlu0 %v1782, 126
    %v1792 = vpop.permute.xlu0 %1791
    %1793 = vrot.lane.b32.xlu0 %v1783, 126
    %v1794 = vpop.permute.xlu0 %1793
    %1795 = vrot.lane.b32.xlu0 %v1784, 126
    %v1796 = vpop.permute.xlu0 %1795
    %v1801 = vadd.f32 %v1697, %v1790
    %v1802 = vadd.f32 %v1698, %v1792
    %v1803 = vadd.f32 %v1699, %v1794
    %v1804 = vadd.f32 %v1700, %v1796
    %s1805 = sld [smem:[#allocation2 + $0x56]]
    %v1806 = vstv %s1805
    %v1807 = vmul.f32 %v1806, %v1101
    %v1808 = vmul.f32 %v1806, %v1102
    %v1809 = vmul.f32 %v1806, %v1103
    %v1810 = vmul.f32 %v1806, %v1104
    %1815 = vrot.lane.b32.xlu0 %v1807, 126
    %v1816 = vpop.permute.xlu0 %1815
    %1817 = vrot.lane.b32.xlu0 %v1808, 126
    %v1818 = vpop.permute.xlu0 %1817
    %1819 = vrot.lane.b32.xlu0 %v1809, 126
    %v1820 = vpop.permute.xlu0 %1819
    %1821 = vrot.lane.b32.xlu0 %v1810, 126
    %v1822 = vpop.permute.xlu0 %1821
    %v1827 = vadd.f32 %v1723, %v1816
    %v1828 = vadd.f32 %v1724, %v1818
    %v1829 = vadd.f32 %v1725, %v1820
    %v1830 = vadd.f32 %v1726, %v1822
    %s1831 = sld [smem:[#allocation2 + $0x57]]
    %v1832 = vstv %s1831
    %v1833 = vmul.f32 %v1832, %v1101
    %v1834 = vmul.f32 %v1832, %v1102
    %v1835 = vmul.f32 %v1832, %v1103
    %v1836 = vmul.f32 %v1832, %v1104
    %1841 = vrot.lane.b32.xlu0 %v1833, 126
    %v1842 = vpop.permute.xlu0 %1841
    %1843 = vrot.lane.b32.xlu0 %v1834, 126
    %v1844 = vpop.permute.xlu0 %1843
    %1845 = vrot.lane.b32.xlu0 %v1835, 126
    %v1846 = vpop.permute.xlu0 %1845
    %1847 = vrot.lane.b32.xlu0 %v1836, 126
    %v1848 = vpop.permute.xlu0 %1847
    %v1853 = vadd.f32 %v1749, %v1842
    %v1854 = vadd.f32 %v1750, %v1844
    %v1855 = vadd.f32 %v1751, %v1846
    %v1856 = vadd.f32 %v1752, %v1848
    %s1857 = sld [smem:[#allocation2 + $0x58]]
    %v1858 = vstv %s1857
    %v1859 = vmul.f32 %v1858, %v1145
    %v1860 = vmul.f32 %v1858, %v1146
    %v1861 = vmul.f32 %v1858, %v1147
    %v1862 = vmul.f32 %v1858, %v1148
    %1867 = vrot.lane.b32.xlu0 %v1859, 126
    %v1868 = vpop.permute.xlu0 %1867
    %1869 = vrot.lane.b32.xlu0 %v1860, 126
    %v1870 = vpop.permute.xlu0 %1869
    %1871 = vrot.lane.b32.xlu0 %v1861, 126
    %v1872 = vpop.permute.xlu0 %1871
    %1873 = vrot.lane.b32.xlu0 %v1862, 126
    %v1874 = vpop.permute.xlu0 %1873
    %v1879 = vadd.f32 %v1775, %v1868
    %v1880 = vadd.f32 %v1776, %v1870
    %v1881 = vadd.f32 %v1777, %v1872
    %v1882 = vadd.f32 %v1778, %v1874
    %s1883 = sld [smem:[#allocation2 + $0x59]]
    %v1884 = vstv %s1883
    %v1885 = vmul.f32 %v1884, %v1145
    %v1886 = vmul.f32 %v1884, %v1146
    %v1887 = vmul.f32 %v1884, %v1147
    %v1888 = vmul.f32 %v1884, %v1148
    %1893 = vrot.lane.b32.xlu0 %v1885, 126
    %v1894 = vpop.permute.xlu0 %1893
    %1895 = vrot.lane.b32.xlu0 %v1886, 126
    %v1896 = vpop.permute.xlu0 %1895
    %1897 = vrot.lane.b32.xlu0 %v1887, 126
    %v1898 = vpop.permute.xlu0 %1897
    %1899 = vrot.lane.b32.xlu0 %v1888, 126
    %v1900 = vpop.permute.xlu0 %1899
    %v1905 = vadd.f32 %v1801, %v1894
    %v1906 = vadd.f32 %v1802, %v1896
    %v1907 = vadd.f32 %v1803, %v1898
    %v1908 = vadd.f32 %v1804, %v1900
    %s1909 = sld [smem:[#allocation2 + $0x5a]]
    %v1910 = vstv %s1909
    %v1911 = vmul.f32 %v1910, %v1145
    %v1912 = vmul.f32 %v1910, %v1146
    %v1913 = vmul.f32 %v1910, %v1147
    %v1914 = vmul.f32 %v1910, %v1148
    %1919 = vrot.lane.b32.xlu0 %v1911, 126
    %v1920 = vpop.permute.xlu0 %1919
    %1921 = vrot.lane.b32.xlu0 %v1912, 126
    %v1922 = vpop.permute.xlu0 %1921
    %1923 = vrot.lane.b32.xlu0 %v1913, 126
    %v1924 = vpop.permute.xlu0 %1923
    %1925 = vrot.lane.b32.xlu0 %v1914, 126
    %v1926 = vpop.permute.xlu0 %1925
    %v1931 = vadd.f32 %v1827, %v1920
    %v1932 = vadd.f32 %v1828, %v1922
    %v1933 = vadd.f32 %v1829, %v1924
    %v1934 = vadd.f32 %v1830, %v1926
    %s1935 = sld [smem:[#allocation2 + $0x5b]]
    %v1936 = vstv %s1935
    %v1937 = vmul.f32 %v1936, %v1145
    %v1938 = vmul.f32 %v1936, %v1146
    %v1939 = vmul.f32 %v1936, %v1147
    %v1940 = vmul.f32 %v1936, %v1148
    %1945 = vrot.lane.b32.xlu0 %v1937, 126
    %v1946 = vpop.permute.xlu0 %1945
    %1947 = vrot.lane.b32.xlu0 %v1938, 126
    %v1948 = vpop.permute.xlu0 %1947
    %1949 = vrot.lane.b32.xlu0 %v1939, 126
    %v1950 = vpop.permute.xlu0 %1949
    %1951 = vrot.lane.b32.xlu0 %v1940, 126
    %v1952 = vpop.permute.xlu0 %1951
    %v1957 = vadd.f32 %v1853, %v1946
    %v1958 = vadd.f32 %v1854, %v1948
    %v1959 = vadd.f32 %v1855, %v1950
    %v1960 = vadd.f32 %v1856, %v1952
    %s1961 = sld [smem:[#allocation2 + $0x5c]]
    %v1962 = vstv %s1961
    %v1963 = vmul.f32 %v1962, %v1189
    %v1964 = vmul.f32 %v1962, %v1190
    %v1965 = vmul.f32 %v1962, %v1191
    %v1966 = vmul.f32 %v1962, %v1192
    %1971 = vrot.lane.b32.xlu0 %v1963, 126
    %v1972 = vpop.permute.xlu0 %1971
    %1973 = vrot.lane.b32.xlu0 %v1964, 126
    %v1974 = vpop.permute.xlu0 %1973
    %1975 = vrot.lane.b32.xlu0 %v1965, 126
    %v1976 = vpop.permute.xlu0 %1975
    %1977 = vrot.lane.b32.xlu0 %v1966, 126
    %v1978 = vpop.permute.xlu0 %1977
    %v1983 = vadd.f32 %v1879, %v1972
    %v1984 = vadd.f32 %v1880, %v1974
    %v1985 = vadd.f32 %v1881, %v1976
    %v1986 = vadd.f32 %v1882, %v1978
    %s1987 = sld [smem:[#allocation2 + $0x5d]]
    %v1988 = vstv %s1987
    %v1989 = vmul.f32 %v1988, %v1189
    %v1990 = vmul.f32 %v1988, %v1190
    %v1991 = vmul.f32 %v1988, %v1191
    %v1992 = vmul.f32 %v1988, %v1192
    %1997 = vrot.lane.b32.xlu0 %v1989, 126
    %v1998 = vpop.permute.xlu0 %1997
    %1999 = vrot.lane.b32.xlu0 %v1990, 126
    %v2000 = vpop.permute.xlu0 %1999
    %2001 = vrot.lane.b32.xlu0 %v1991, 126
    %v2002 = vpop.permute.xlu0 %2001
    %2003 = vrot.lane.b32.xlu0 %v1992, 126
    %v2004 = vpop.permute.xlu0 %2003
    %v2009 = vadd.f32 %v1905, %v1998
    %v2010 = vadd.f32 %v1906, %v2000
    %v2011 = vadd.f32 %v1907, %v2002
    %v2012 = vadd.f32 %v1908, %v2004
    %s2013 = sld [smem:[#allocation2 + $0x5e]]
    %v2014 = vstv %s2013
    %v2015 = vmul.f32 %v2014, %v1189
    %v2016 = vmul.f32 %v2014, %v1190
    %v2017 = vmul.f32 %v2014, %v1191
    %v2018 = vmul.f32 %v2014, %v1192
    %2023 = vrot.lane.b32.xlu0 %v2015, 126
    %v2024 = vpop.permute.xlu0 %2023
    %2025 = vrot.lane.b32.xlu0 %v2016, 126
    %v2026 = vpop.permute.xlu0 %2025
    %2027 = vrot.lane.b32.xlu0 %v2017, 126
    %v2028 = vpop.permute.xlu0 %2027
    %2029 = vrot.lane.b32.xlu0 %v2018, 126
    %v2030 = vpop.permute.xlu0 %2029
    %v2035 = vadd.f32 %v1931, %v2024
    %v2036 = vadd.f32 %v1932, %v2026
    %v2037 = vadd.f32 %v1933, %v2028
    %v2038 = vadd.f32 %v1934, %v2030
    %s2039 = sld [smem:[#allocation2 + $0x5f]]
    %v2040 = vstv %s2039
    %v2041 = vmul.f32 %v2040, %v1189
    %v2042 = vmul.f32 %v2040, %v1190
    %v2043 = vmul.f32 %v2040, %v1191
    %v2044 = vmul.f32 %v2040, %v1192
    %2049 = vrot.lane.b32.xlu0 %v2041, 126
    %v2050 = vpop.permute.xlu0 %2049
    %2051 = vrot.lane.b32.xlu0 %v2042, 126
    %v2052 = vpop.permute.xlu0 %2051
    %2053 = vrot.lane.b32.xlu0 %v2043, 126
    %v2054 = vpop.permute.xlu0 %2053
    %2055 = vrot.lane.b32.xlu0 %v2044, 126
    %v2056 = vpop.permute.xlu0 %2055
    %v2061 = vadd.f32 %v1957, %v2050
    %v2062 = vadd.f32 %v1958, %v2052
    %v2063 = vadd.f32 %v1959, %v2054
    %v2064 = vadd.f32 %v1960, %v2056
    %v2065 = vld [vmem:[%s0 + $0x2] sm:$0xff]
    %v2066 = vld [vmem:[%s0 + $0xa] sm:$0xff]
    %v2067 = vld [vmem:[%s0 + $0x62] sm:$0xff]
    %v2068 = vld [vmem:[%s0 + $0x6a] sm:$0xff]
    %s2069 = sld [smem:[#allocation2 + $0x60]]
    %v2070 = vstv %s2069
    %v2071 = vmul.f32 %v2070, %v2065
    %v2072 = vmul.f32 %v2070, %v2066
    %v2073 = vmul.f32 %v2070, %v2067
    %v2074 = vmul.f32 %v2070, %v2068
    %v2075 = vadd.f32 %v1983, %v2071
    %v2076 = vadd.f32 %v1984, %v2072
    %v2077 = vadd.f32 %v1985, %v2073
    %v2078 = vadd.f32 %v1986, %v2074
    %s2079 = sld [smem:[#allocation2 + $0x61]]
    %v2080 = vstv %s2079
    %v2081 = vmul.f32 %v2080, %v2065
    %v2082 = vmul.f32 %v2080, %v2066
    %v2083 = vmul.f32 %v2080, %v2067
    %v2084 = vmul.f32 %v2080, %v2068
    %v2085 = vadd.f32 %v2009, %v2081
    %v2086 = vadd.f32 %v2010, %v2082
    %v2087 = vadd.f32 %v2011, %v2083
    %v2088 = vadd.f32 %v2012, %v2084
    %s2089 = sld [smem:[#allocation2 + $0x62]]
    %v2090 = vstv %s2089
    %v2091 = vmul.f32 %v2090, %v2065
    %v2092 = vmul.f32 %v2090, %v2066
    %v2093 = vmul.f32 %v2090, %v2067
    %v2094 = vmul.f32 %v2090, %v2068
    %v2095 = vadd.f32 %v2035, %v2091
    %v2096 = vadd.f32 %v2036, %v2092
    %v2097 = vadd.f32 %v2037, %v2093
    %v2098 = vadd.f32 %v2038, %v2094
    %s2099 = sld [smem:[#allocation2 + $0x63]]
    %v2100 = vstv %s2099
    %v2101 = vmul.f32 %v2100, %v2065
    %v2102 = vmul.f32 %v2100, %v2066
    %v2103 = vmul.f32 %v2100, %v2067
    %v2104 = vmul.f32 %v2100, %v2068
    %v2105 = vadd.f32 %v2061, %v2101
    %v2106 = vadd.f32 %v2062, %v2102
    %v2107 = vadd.f32 %v2063, %v2103
    %v2108 = vadd.f32 %v2064, %v2104
    %v2109 = vld [vmem:[%s90 + $0x2] sm:$0xff]
    %v2110 = vld [vmem:[%s90 + $0xa] sm:$0xff]
    %v2111 = vld [vmem:[%s90 + $0x62] sm:$0xff]
    %v2112 = vld [vmem:[%s90 + $0x6a] sm:$0xff]
    %s2113 = sld [smem:[#allocation2 + $0x64]]
    %v2114 = vstv %s2113
    %v2115 = vmul.f32 %v2114, %v2109
    %v2116 = vmul.f32 %v2114, %v2110
    %v2117 = vmul.f32 %v2114, %v2111
    %v2118 = vmul.f32 %v2114, %v2112
    %v2119 = vadd.f32 %v2075, %v2115
    %v2120 = vadd.f32 %v2076, %v2116
    %v2121 = vadd.f32 %v2077, %v2117
    %v2122 = vadd.f32 %v2078, %v2118
    %s2123 = sld [smem:[#allocation2 + $0x65]]
    %v2124 = vstv %s2123
    %v2125 = vmul.f32 %v2124, %v2109
    %v2126 = vmul.f32 %v2124, %v2110
    %v2127 = vmul.f32 %v2124, %v2111
    %v2128 = vmul.f32 %v2124, %v2112
    %v2129 = vadd.f32 %v2085, %v2125
    %v2130 = vadd.f32 %v2086, %v2126
    %v2131 = vadd.f32 %v2087, %v2127
    %v2132 = vadd.f32 %v2088, %v2128
    %s2133 = sld [smem:[#allocation2 + $0x66]]
    %v2134 = vstv %s2133
    %v2135 = vmul.f32 %v2134, %v2109
    %v2136 = vmul.f32 %v2134, %v2110
    %v2137 = vmul.f32 %v2134, %v2111
    %v2138 = vmul.f32 %v2134, %v2112
    %v2139 = vadd.f32 %v2095, %v2135
    %v2140 = vadd.f32 %v2096, %v2136
    %v2141 = vadd.f32 %v2097, %v2137
    %v2142 = vadd.f32 %v2098, %v2138
    %s2143 = sld [smem:[#allocation2 + $0x67]]
    %v2144 = vstv %s2143
    %v2145 = vmul.f32 %v2144, %v2109
    %v2146 = vmul.f32 %v2144, %v2110
    %v2147 = vmul.f32 %v2144, %v2111
    %v2148 = vmul.f32 %v2144, %v2112
    %v2149 = vadd.f32 %v2105, %v2145
    %v2150 = vadd.f32 %v2106, %v2146
    %v2151 = vadd.f32 %v2107, %v2147
    %v2152 = vadd.f32 %v2108, %v2148
    %v2153 = vld [vmem:[%s135 + $0x2] sm:$0xff]
    %v2154 = vld [vmem:[%s135 + $0xa] sm:$0xff]
    %v2155 = vld [vmem:[%s135 + $0x62] sm:$0xff]
    %v2156 = vld [vmem:[%s135 + $0x6a] sm:$0xff]
    %s2157 = sld [smem:[#allocation2 + $0x68]]
    %v2158 = vstv %s2157
    %v2159 = vmul.f32 %v2158, %v2153
    %v2160 = vmul.f32 %v2158, %v2154
    %v2161 = vmul.f32 %v2158, %v2155
    %v2162 = vmul.f32 %v2158, %v2156
    %v2163 = vadd.f32 %v2119, %v2159
    %v2164 = vadd.f32 %v2120, %v2160
    %v2165 = vadd.f32 %v2121, %v2161
    %v2166 = vadd.f32 %v2122, %v2162
    %s2167 = sld [smem:[#allocation2 + $0x69]]
    %v2168 = vstv %s2167
    %v2169 = vmul.f32 %v2168, %v2153
    %v2170 = vmul.f32 %v2168, %v2154
    %v2171 = vmul.f32 %v2168, %v2155
    %v2172 = vmul.f32 %v2168, %v2156
    %v2173 = vadd.f32 %v2129, %v2169
    %v2174 = vadd.f32 %v2130, %v2170
    %v2175 = vadd.f32 %v2131, %v2171
    %v2176 = vadd.f32 %v2132, %v2172
    %s2177 = sld [smem:[#allocation2 + $0x6a]]
    %v2178 = vstv %s2177
    %v2179 = vmul.f32 %v2178, %v2153
    %v2180 = vmul.f32 %v2178, %v2154
    %v2181 = vmul.f32 %v2178, %v2155
    %v2182 = vmul.f32 %v2178, %v2156
    %v2183 = vadd.f32 %v2139, %v2179
    %v2184 = vadd.f32 %v2140, %v2180
    %v2185 = vadd.f32 %v2141, %v2181
    %v2186 = vadd.f32 %v2142, %v2182
    %s2187 = sld [smem:[#allocation2 + $0x6b]]
    %v2188 = vstv %s2187
    %v2189 = vmul.f32 %v2188, %v2153
    %v2190 = vmul.f32 %v2188, %v2154
    %v2191 = vmul.f32 %v2188, %v2155
    %v2192 = vmul.f32 %v2188, %v2156
    %v2193 = vadd.f32 %v2149, %v2189
    %v2194 = vadd.f32 %v2150, %v2190
    %v2195 = vadd.f32 %v2151, %v2191
    %v2196 = vadd.f32 %v2152, %v2192
    %v2197 = vld [vmem:[%s180 + $0x2] sm:$0xff]
    %v2198 = vld [vmem:[%s180 + $0xa] sm:$0xff]
    %v2199 = vld [vmem:[%s180 + $0x62] sm:$0xff]
    %v2200 = vld [vmem:[%s180 + $0x6a] sm:$0xff]
    %s2201 = sld [smem:[#allocation2 + $0x6c]]
    %v2202 = vstv %s2201
    %v2203 = vmul.f32 %v2202, %v2197
    %v2204 = vmul.f32 %v2202, %v2198
    %v2205 = vmul.f32 %v2202, %v2199
    %v2206 = vmul.f32 %v2202, %v2200
    %v2207 = vadd.f32 %v2163, %v2203
    %v2208 = vadd.f32 %v2164, %v2204
    %v2209 = vadd.f32 %v2165, %v2205
    %v2210 = vadd.f32 %v2166, %v2206
    %s2211 = sld [smem:[#allocation2 + $0x6d]]
    %v2212 = vstv %s2211
    %v2213 = vmul.f32 %v2212, %v2197
    %v2214 = vmul.f32 %v2212, %v2198
    %v2215 = vmul.f32 %v2212, %v2199
    %v2216 = vmul.f32 %v2212, %v2200
    %v2217 = vadd.f32 %v2173, %v2213
    %v2218 = vadd.f32 %v2174, %v2214
    %v2219 = vadd.f32 %v2175, %v2215
    %v2220 = vadd.f32 %v2176, %v2216
    %s2221 = sld [smem:[#allocation2 + $0x6e]]
    %v2222 = vstv %s2221
    %v2223 = vmul.f32 %v2222, %v2197
    %v2224 = vmul.f32 %v2222, %v2198
    %v2225 = vmul.f32 %v2222, %v2199
    %v2226 = vmul.f32 %v2222, %v2200
    %v2227 = vadd.f32 %v2183, %v2223
    %v2228 = vadd.f32 %v2184, %v2224
    %v2229 = vadd.f32 %v2185, %v2225
    %v2230 = vadd.f32 %v2186, %v2226
    %s2231 = sld [smem:[#allocation2 + $0x6f]]
    %v2232 = vstv %s2231
    %v2233 = vmul.f32 %v2232, %v2197
    %v2234 = vmul.f32 %v2232, %v2198
    %v2235 = vmul.f32 %v2232, %v2199
    %v2236 = vmul.f32 %v2232, %v2200
    %v2237 = vadd.f32 %v2193, %v2233
    %v2238 = vadd.f32 %v2194, %v2234
    %v2239 = vadd.f32 %v2195, %v2235
    %v2240 = vadd.f32 %v2196, %v2236
    %s2241 = sld [smem:[#allocation2 + $0x70]]
    %v2242 = vstv %s2241
    %v2243 = vmul.f32 %v2242, %v2065
    %v2244 = vmul.f32 %v2242, %v2066
    %v2245 = vmul.f32 %v2242, %v2067
    %v2246 = vmul.f32 %v2242, %v2068
    %2251 = vrot.lane.b32.xlu0 %v2243, 127
    %v2252 = vpop.permute.xlu0 %2251
    %2253 = vrot.lane.b32.xlu0 %v2244, 127
    %v2254 = vpop.permute.xlu0 %2253
    %2255 = vrot.lane.b32.xlu0 %v2245, 127
    %v2256 = vpop.permute.xlu0 %2255
    %2257 = vrot.lane.b32.xlu0 %v2246, 127
    %v2258 = vpop.permute.xlu0 %2257
    %v2263 = vadd.f32 %v2207, %v2252
    %v2264 = vadd.f32 %v2208, %v2254
    %v2265 = vadd.f32 %v2209, %v2256
    %v2266 = vadd.f32 %v2210, %v2258
    %s2267 = sld [smem:[#allocation2 + $0x71]]
    %v2268 = vstv %s2267
    %v2269 = vmul.f32 %v2268, %v2065
    %v2270 = vmul.f32 %v2268, %v2066
    %v2271 = vmul.f32 %v2268, %v2067
    %v2272 = vmul.f32 %v2268, %v2068
    %2277 = vrot.lane.b32.xlu0 %v2269, 127
    %v2278 = vpop.permute.xlu0 %2277
    %2279 = vrot.lane.b32.xlu0 %v2270, 127
    %v2280 = vpop.permute.xlu0 %2279
    %2281 = vrot.lane.b32.xlu0 %v2271, 127
    %v2282 = vpop.permute.xlu0 %2281
    %2283 = vrot.lane.b32.xlu0 %v2272, 127
    %v2284 = vpop.permute.xlu0 %2283
    %v2289 = vadd.f32 %v2217, %v2278
    %v2290 = vadd.f32 %v2218, %v2280
    %v2291 = vadd.f32 %v2219, %v2282
    %v2292 = vadd.f32 %v2220, %v2284
    %s2293 = sld [smem:[#allocation2 + $0x72]]
    %v2294 = vstv %s2293
    %v2295 = vmul.f32 %v2294, %v2065
    %v2296 = vmul.f32 %v2294, %v2066
    %v2297 = vmul.f32 %v2294, %v2067
    %v2298 = vmul.f32 %v2294, %v2068
    %2303 = vrot.lane.b32.xlu0 %v2295, 127
    %v2304 = vpop.permute.xlu0 %2303
    %2305 = vrot.lane.b32.xlu0 %v2296, 127
    %v2306 = vpop.permute.xlu0 %2305
    %2307 = vrot.lane.b32.xlu0 %v2297, 127
    %v2308 = vpop.permute.xlu0 %2307
    %2309 = vrot.lane.b32.xlu0 %v2298, 127
    %v2310 = vpop.permute.xlu0 %2309
    %v2315 = vadd.f32 %v2227, %v2304
    %v2316 = vadd.f32 %v2228, %v2306
    %v2317 = vadd.f32 %v2229, %v2308
    %v2318 = vadd.f32 %v2230, %v2310
    %s2319 = sld [smem:[#allocation2 + $0x73]]
    %v2320 = vstv %s2319
    %v2321 = vmul.f32 %v2320, %v2065
    %v2322 = vmul.f32 %v2320, %v2066
    %v2323 = vmul.f32 %v2320, %v2067
    %v2324 = vmul.f32 %v2320, %v2068
    %2329 = vrot.lane.b32.xlu0 %v2321, 127
    %v2330 = vpop.permute.xlu0 %2329
    %2331 = vrot.lane.b32.xlu0 %v2322, 127
    %v2332 = vpop.permute.xlu0 %2331
    %2333 = vrot.lane.b32.xlu0 %v2323, 127
    %v2334 = vpop.permute.xlu0 %2333
    %2335 = vrot.lane.b32.xlu0 %v2324, 127
    %v2336 = vpop.permute.xlu0 %2335
    %v2341 = vadd.f32 %v2237, %v2330
    %v2342 = vadd.f32 %v2238, %v2332
    %v2343 = vadd.f32 %v2239, %v2334
    %v2344 = vadd.f32 %v2240, %v2336
    %s2345 = sld [smem:[#allocation2 + $0x74]]
    %v2346 = vstv %s2345
    %v2347 = vmul.f32 %v2346, %v2109
    %v2348 = vmul.f32 %v2346, %v2110
    %v2349 = vmul.f32 %v2346, %v2111
    %v2350 = vmul.f32 %v2346, %v2112
    %2355 = vrot.lane.b32.xlu0 %v2347, 127
    %v2356 = vpop.permute.xlu0 %2355
    %2357 = vrot.lane.b32.xlu0 %v2348, 127
    %v2358 = vpop.permute.xlu0 %2357
    %2359 = vrot.lane.b32.xlu0 %v2349, 127
    %v2360 = vpop.permute.xlu0 %2359
    %2361 = vrot.lane.b32.xlu0 %v2350, 127
    %v2362 = vpop.permute.xlu0 %2361
    %v2367 = vadd.f32 %v2263, %v2356
    %v2368 = vadd.f32 %v2264, %v2358
    %v2369 = vadd.f32 %v2265, %v2360
    %v2370 = vadd.f32 %v2266, %v2362
    %s2371 = sld [smem:[#allocation2 + $0x75]]
    %v2372 = vstv %s2371
    %v2373 = vmul.f32 %v2372, %v2109
    %v2374 = vmul.f32 %v2372, %v2110
    %v2375 = vmul.f32 %v2372, %v2111
    %v2376 = vmul.f32 %v2372, %v2112
    %2381 = vrot.lane.b32.xlu0 %v2373, 127
    %v2382 = vpop.permute.xlu0 %2381
    %2383 = vrot.lane.b32.xlu0 %v2374, 127
    %v2384 = vpop.permute.xlu0 %2383
    %2385 = vrot.lane.b32.xlu0 %v2375, 127
    %v2386 = vpop.permute.xlu0 %2385
    %2387 = vrot.lane.b32.xlu0 %v2376, 127
    %v2388 = vpop.permute.xlu0 %2387
    %v2393 = vadd.f32 %v2289, %v2382
    %v2394 = vadd.f32 %v2290, %v2384
    %v2395 = vadd.f32 %v2291, %v2386
    %v2396 = vadd.f32 %v2292, %v2388
    %s2397 = sld [smem:[#allocation2 + $0x76]]
    %v2398 = vstv %s2397
    %v2399 = vmul.f32 %v2398, %v2109
    %v2400 = vmul.f32 %v2398, %v2110
    %v2401 = vmul.f32 %v2398, %v2111
    %v2402 = vmul.f32 %v2398, %v2112
    %2407 = vrot.lane.b32.xlu0 %v2399, 127
    %v2408 = vpop.permute.xlu0 %2407
    %2409 = vrot.lane.b32.xlu0 %v2400, 127
    %v2410 = vpop.permute.xlu0 %2409
    %2411 = vrot.lane.b32.xlu0 %v2401, 127
    %v2412 = vpop.permute.xlu0 %2411
    %2413 = vrot.lane.b32.xlu0 %v2402, 127
    %v2414 = vpop.permute.xlu0 %2413
    %v2419 = vadd.f32 %v2315, %v2408
    %v2420 = vadd.f32 %v2316, %v2410
    %v2421 = vadd.f32 %v2317, %v2412
    %v2422 = vadd.f32 %v2318, %v2414
    %s2423 = sld [smem:[#allocation2 + $0x77]]
    %v2424 = vstv %s2423
    %v2425 = vmul.f32 %v2424, %v2109
    %v2426 = vmul.f32 %v2424, %v2110
    %v2427 = vmul.f32 %v2424, %v2111
    %v2428 = vmul.f32 %v2424, %v2112
    %2433 = vrot.lane.b32.xlu0 %v2425, 127
    %v2434 = vpop.permute.xlu0 %2433
    %2435 = vrot.lane.b32.xlu0 %v2426, 127
    %v2436 = vpop.permute.xlu0 %2435
    %2437 = vrot.lane.b32.xlu0 %v2427, 127
    %v2438 = vpop.permute.xlu0 %2437
    %2439 = vrot.lane.b32.xlu0 %v2428, 127
    %v2440 = vpop.permute.xlu0 %2439
    %v2445 = vadd.f32 %v2341, %v2434
    %v2446 = vadd.f32 %v2342, %v2436
    %v2447 = vadd.f32 %v2343, %v2438
    %v2448 = vadd.f32 %v2344, %v2440
    %s2449 = sld [smem:[#allocation2 + $0x78]]
    %v2450 = vstv %s2449
    %v2451 = vmul.f32 %v2450, %v2153
    %v2452 = vmul.f32 %v2450, %v2154
    %v2453 = vmul.f32 %v2450, %v2155
    %v2454 = vmul.f32 %v2450, %v2156
    %2459 = vrot.lane.b32.xlu0 %v2451, 127
    %v2460 = vpop.permute.xlu0 %2459
    %2461 = vrot.lane.b32.xlu0 %v2452, 127
    %v2462 = vpop.permute.xlu0 %2461
    %2463 = vrot.lane.b32.xlu0 %v2453, 127
    %v2464 = vpop.permute.xlu0 %2463
    %2465 = vrot.lane.b32.xlu0 %v2454, 127
    %v2466 = vpop.permute.xlu0 %2465
    %v2471 = vadd.f32 %v2367, %v2460
    %v2472 = vadd.f32 %v2368, %v2462
    %v2473 = vadd.f32 %v2369, %v2464
    %v2474 = vadd.f32 %v2370, %v2466
    %s2475 = sld [smem:[#allocation2 + $0x79]]
    %v2476 = vstv %s2475
    %v2477 = vmul.f32 %v2476, %v2153
    %v2478 = vmul.f32 %v2476, %v2154
    %v2479 = vmul.f32 %v2476, %v2155
    %v2480 = vmul.f32 %v2476, %v2156
    %2485 = vrot.lane.b32.xlu0 %v2477, 127
    %v2486 = vpop.permute.xlu0 %2485
    %2487 = vrot.lane.b32.xlu0 %v2478, 127
    %v2488 = vpop.permute.xlu0 %2487
    %2489 = vrot.lane.b32.xlu0 %v2479, 127
    %v2490 = vpop.permute.xlu0 %2489
    %2491 = vrot.lane.b32.xlu0 %v2480, 127
    %v2492 = vpop.permute.xlu0 %2491
    %v2497 = vadd.f32 %v2393, %v2486
    %v2498 = vadd.f32 %v2394, %v2488
    %v2499 = vadd.f32 %v2395, %v2490
    %v2500 = vadd.f32 %v2396, %v2492
    %s2501 = sld [smem:[#allocation2 + $0x7a]]
    %v2502 = vstv %s2501
    %v2503 = vmul.f32 %v2502, %v2153
    %v2504 = vmul.f32 %v2502, %v2154
    %v2505 = vmul.f32 %v2502, %v2155
    %v2506 = vmul.f32 %v2502, %v2156
    %2511 = vrot.lane.b32.xlu0 %v2503, 127
    %v2512 = vpop.permute.xlu0 %2511
    %2513 = vrot.lane.b32.xlu0 %v2504, 127
    %v2514 = vpop.permute.xlu0 %2513
    %2515 = vrot.lane.b32.xlu0 %v2505, 127
    %v2516 = vpop.permute.xlu0 %2515
    %2517 = vrot.lane.b32.xlu0 %v2506, 127
    %v2518 = vpop.permute.xlu0 %2517
    %v2523 = vadd.f32 %v2419, %v2512
    %v2524 = vadd.f32 %v2420, %v2514
    %v2525 = vadd.f32 %v2421, %v2516
    %v2526 = vadd.f32 %v2422, %v2518
    %s2527 = sld [smem:[#allocation2 + $0x7b]]
    %v2528 = vstv %s2527
    %v2529 = vmul.f32 %v2528, %v2153
    %v2530 = vmul.f32 %v2528, %v2154
    %v2531 = vmul.f32 %v2528, %v2155
    %v2532 = vmul.f32 %v2528, %v2156
    %2537 = vrot.lane.b32.xlu0 %v2529, 127
    %v2538 = vpop.permute.xlu0 %2537
    %2539 = vrot.lane.b32.xlu0 %v2530, 127
    %v2540 = vpop.permute.xlu0 %2539
    %2541 = vrot.lane.b32.xlu0 %v2531, 127
    %v2542 = vpop.permute.xlu0 %2541
    %2543 = vrot.lane.b32.xlu0 %v2532, 127
    %v2544 = vpop.permute.xlu0 %2543
    %v2549 = vadd.f32 %v2445, %v2538
    %v2550 = vadd.f32 %v2446, %v2540
    %v2551 = vadd.f32 %v2447, %v2542
    %v2552 = vadd.f32 %v2448, %v2544
    %s2553 = sld [smem:[#allocation2 + $0x7c]]
    %v2554 = vstv %s2553
    %v2555 = vmul.f32 %v2554, %v2197
    %v2556 = vmul.f32 %v2554, %v2198
    %v2557 = vmul.f32 %v2554, %v2199
    %v2558 = vmul.f32 %v2554, %v2200
    %2563 = vrot.lane.b32.xlu0 %v2555, 127
    %v2564 = vpop.permute.xlu0 %2563
    %2565 = vrot.lane.b32.xlu0 %v2556, 127
    %v2566 = vpop.permute.xlu0 %2565
    %2567 = vrot.lane.b32.xlu0 %v2557, 127
    %v2568 = vpop.permute.xlu0 %2567
    %2569 = vrot.lane.b32.xlu0 %v2558, 127
    %v2570 = vpop.permute.xlu0 %2569
    %v2575 = vadd.f32 %v2471, %v2564
    %v2576 = vadd.f32 %v2472, %v2566
    %v2577 = vadd.f32 %v2473, %v2568
    %v2578 = vadd.f32 %v2474, %v2570
    %s2579 = sld [smem:[#allocation2 + $0x7d]]
    %v2580 = vstv %s2579
    %v2581 = vmul.f32 %v2580, %v2197
    %v2582 = vmul.f32 %v2580, %v2198
    %v2583 = vmul.f32 %v2580, %v2199
    %v2584 = vmul.f32 %v2580, %v2200
    %2589 = vrot.lane.b32.xlu0 %v2581, 127
    %v2590 = vpop.permute.xlu0 %2589
    %2591 = vrot.lane.b32.xlu0 %v2582, 127
    %v2592 = vpop.permute.xlu0 %2591
    %2593 = vrot.lane.b32.xlu0 %v2583, 127
    %v2594 = vpop.permute.xlu0 %2593
    %2595 = vrot.lane.b32.xlu0 %v2584, 127
    %v2596 = vpop.permute.xlu0 %2595
    %v2601 = vadd.f32 %v2497, %v2590
    %v2602 = vadd.f32 %v2498, %v2592
    %v2603 = vadd.f32 %v2499, %v2594
    %v2604 = vadd.f32 %v2500, %v2596
    %s2605 = sld [smem:[#allocation2 + $0x7e]]
    %v2606 = vstv %s2605
    %v2607 = vmul.f32 %v2606, %v2197
    %v2608 = vmul.f32 %v2606, %v2198
    %v2609 = vmul.f32 %v2606, %v2199
    %v2610 = vmul.f32 %v2606, %v2200
    %2615 = vrot.lane.b32.xlu0 %v2607, 127
    %v2616 = vpop.permute.xlu0 %2615
    %2617 = vrot.lane.b32.xlu0 %v2608, 127
    %v2618 = vpop.permute.xlu0 %2617
    %2619 = vrot.lane.b32.xlu0 %v2609, 127
    %v2620 = vpop.permute.xlu0 %2619
    %2621 = vrot.lane.b32.xlu0 %v2610, 127
    %v2622 = vpop.permute.xlu0 %2621
    %v2627 = vadd.f32 %v2523, %v2616
    %v2628 = vadd.f32 %v2524, %v2618
    %v2629 = vadd.f32 %v2525, %v2620
    %v2630 = vadd.f32 %v2526, %v2622
    %s2631 = sld [smem:[#allocation2 + $0x7f]]
    %v2632 = vstv %s2631
    %v2633 = vmul.f32 %v2632, %v2197
    %v2634 = vmul.f32 %v2632, %v2198
    %v2635 = vmul.f32 %v2632, %v2199
    %v2636 = vmul.f32 %v2632, %v2200
    %2641 = vrot.lane.b32.xlu0 %v2633, 127
    %v2642 = vpop.permute.xlu0 %2641
    %2643 = vrot.lane.b32.xlu0 %v2634, 127
    %v2644 = vpop.permute.xlu0 %2643
    %2645 = vrot.lane.b32.xlu0 %v2635, 127
    %v2646 = vpop.permute.xlu0 %2645
    %2647 = vrot.lane.b32.xlu0 %v2636, 127
    %v2648 = vpop.permute.xlu0 %2647
    %v2653 = vadd.f32 %v2549, %v2642
    %v2654 = vadd.f32 %v2550, %v2644
    %v2655 = vadd.f32 %v2551, %v2646
    %v2656 = vadd.f32 %v2552, %v2648
    %s2657 = sld [smem:[#allocation2 + $0x80]]
    %v2658 = vstv %s2657
    %v2659 = vmul.f32 %v2658, %v2065
    %v2660 = vmul.f32 %v2658, %v2066
    %v2661 = vmul.f32 %v2658, %v2067
    %v2662 = vmul.f32 %v2658, %v2068
    %2667 = vrot.lane.b32.xlu0 %v2659, 126
    %v2668 = vpop.permute.xlu0 %2667
    %2669 = vrot.lane.b32.xlu0 %v2660, 126
    %v2670 = vpop.permute.xlu0 %2669
    %2671 = vrot.lane.b32.xlu0 %v2661, 126
    %v2672 = vpop.permute.xlu0 %2671
    %2673 = vrot.lane.b32.xlu0 %v2662, 126
    %v2674 = vpop.permute.xlu0 %2673
    %v2679 = vadd.f32 %v2575, %v2668
    %v2680 = vadd.f32 %v2576, %v2670
    %v2681 = vadd.f32 %v2577, %v2672
    %v2682 = vadd.f32 %v2578, %v2674
    %s2683 = sld [smem:[#allocation2 + $0x81]]
    %v2684 = vstv %s2683
    %v2685 = vmul.f32 %v2684, %v2065
    %v2686 = vmul.f32 %v2684, %v2066
    %v2687 = vmul.f32 %v2684, %v2067
    %v2688 = vmul.f32 %v2684, %v2068
    %2693 = vrot.lane.b32.xlu0 %v2685, 126
    %v2694 = vpop.permute.xlu0 %2693
    %2695 = vrot.lane.b32.xlu0 %v2686, 126
    %v2696 = vpop.permute.xlu0 %2695
    %2697 = vrot.lane.b32.xlu0 %v2687, 126
    %v2698 = vpop.permute.xlu0 %2697
    %2699 = vrot.lane.b32.xlu0 %v2688, 126
    %v2700 = vpop.permute.xlu0 %2699
    %v2705 = vadd.f32 %v2601, %v2694
    %v2706 = vadd.f32 %v2602, %v2696
    %v2707 = vadd.f32 %v2603, %v2698
    %v2708 = vadd.f32 %v2604, %v2700
    %s2709 = sld [smem:[#allocation2 + $0x82]]
    %v2710 = vstv %s2709
    %v2711 = vmul.f32 %v2710, %v2065
    %v2712 = vmul.f32 %v2710, %v2066
    %v2713 = vmul.f32 %v2710, %v2067
    %v2714 = vmul.f32 %v2710, %v2068
    %2719 = vrot.lane.b32.xlu0 %v2711, 126
    %v2720 = vpop.permute.xlu0 %2719
    %2721 = vrot.lane.b32.xlu0 %v2712, 126
    %v2722 = vpop.permute.xlu0 %2721
    %2723 = vrot.lane.b32.xlu0 %v2713, 126
    %v2724 = vpop.permute.xlu0 %2723
    %2725 = vrot.lane.b32.xlu0 %v2714, 126
    %v2726 = vpop.permute.xlu0 %2725
    %v2731 = vadd.f32 %v2627, %v2720
    %v2732 = vadd.f32 %v2628, %v2722
    %v2733 = vadd.f32 %v2629, %v2724
    %v2734 = vadd.f32 %v2630, %v2726
    %s2735 = sld [smem:[#allocation2 + $0x83]]
    %v2736 = vstv %s2735
    %v2737 = vmul.f32 %v2736, %v2065
    %v2738 = vmul.f32 %v2736, %v2066
    %v2739 = vmul.f32 %v2736, %v2067
    %v2740 = vmul.f32 %v2736, %v2068
    %2745 = vrot.lane.b32.xlu0 %v2737, 126
    %v2746 = vpop.permute.xlu0 %2745
    %2747 = vrot.lane.b32.xlu0 %v2738, 126
    %v2748 = vpop.permute.xlu0 %2747
    %2749 = vrot.lane.b32.xlu0 %v2739, 126
    %v2750 = vpop.permute.xlu0 %2749
    %2751 = vrot.lane.b32.xlu0 %v2740, 126
    %v2752 = vpop.permute.xlu0 %2751
    %v2757 = vadd.f32 %v2653, %v2746
    %v2758 = vadd.f32 %v2654, %v2748
    %v2759 = vadd.f32 %v2655, %v2750
    %v2760 = vadd.f32 %v2656, %v2752
    %s2761 = sld [smem:[#allocation2 + $0x84]]
    %v2762 = vstv %s2761
    %v2763 = vmul.f32 %v2762, %v2109
    %v2764 = vmul.f32 %v2762, %v2110
    %v2765 = vmul.f32 %v2762, %v2111
    %v2766 = vmul.f32 %v2762, %v2112
    %2771 = vrot.lane.b32.xlu0 %v2763, 126
    %v2772 = vpop.permute.xlu0 %2771
    %2773 = vrot.lane.b32.xlu0 %v2764, 126
    %v2774 = vpop.permute.xlu0 %2773
    %2775 = vrot.lane.b32.xlu0 %v2765, 126
    %v2776 = vpop.permute.xlu0 %2775
    %2777 = vrot.lane.b32.xlu0 %v2766, 126
    %v2778 = vpop.permute.xlu0 %2777
    %v2783 = vadd.f32 %v2679, %v2772
    %v2784 = vadd.f32 %v2680, %v2774
    %v2785 = vadd.f32 %v2681, %v2776
    %v2786 = vadd.f32 %v2682, %v2778
    %s2787 = sld [smem:[#allocation2 + $0x85]]
    %v2788 = vstv %s2787
    %v2789 = vmul.f32 %v2788, %v2109
    %v2790 = vmul.f32 %v2788, %v2110
    %v2791 = vmul.f32 %v2788, %v2111
    %v2792 = vmul.f32 %v2788, %v2112
    %2797 = vrot.lane.b32.xlu0 %v2789, 126
    %v2798 = vpop.permute.xlu0 %2797
    %2799 = vrot.lane.b32.xlu0 %v2790, 126
    %v2800 = vpop.permute.xlu0 %2799
    %2801 = vrot.lane.b32.xlu0 %v2791, 126
    %v2802 = vpop.permute.xlu0 %2801
    %2803 = vrot.lane.b32.xlu0 %v2792, 126
    %v2804 = vpop.permute.xlu0 %2803
    %v2809 = vadd.f32 %v2705, %v2798
    %v2810 = vadd.f32 %v2706, %v2800
    %v2811 = vadd.f32 %v2707, %v2802
    %v2812 = vadd.f32 %v2708, %v2804
    %s2813 = sld [smem:[#allocation2 + $0x86]]
    %v2814 = vstv %s2813
    %v2815 = vmul.f32 %v2814, %v2109
    %v2816 = vmul.f32 %v2814, %v2110
    %v2817 = vmul.f32 %v2814, %v2111
    %v2818 = vmul.f32 %v2814, %v2112
    %2823 = vrot.lane.b32.xlu0 %v2815, 126
    %v2824 = vpop.permute.xlu0 %2823
    %2825 = vrot.lane.b32.xlu0 %v2816, 126
    %v2826 = vpop.permute.xlu0 %2825
    %2827 = vrot.lane.b32.xlu0 %v2817, 126
    %v2828 = vpop.permute.xlu0 %2827
    %2829 = vrot.lane.b32.xlu0 %v2818, 126
    %v2830 = vpop.permute.xlu0 %2829
    %v2835 = vadd.f32 %v2731, %v2824
    %v2836 = vadd.f32 %v2732, %v2826
    %v2837 = vadd.f32 %v2733, %v2828
    %v2838 = vadd.f32 %v2734, %v2830
    %s2839 = sld [smem:[#allocation2 + $0x87]]
    %v2840 = vstv %s2839
    %v2841 = vmul.f32 %v2840, %v2109
    %v2842 = vmul.f32 %v2840, %v2110
    %v2843 = vmul.f32 %v2840, %v2111
    %v2844 = vmul.f32 %v2840, %v2112
    %2849 = vrot.lane.b32.xlu0 %v2841, 126
    %v2850 = vpop.permute.xlu0 %2849
    %2851 = vrot.lane.b32.xlu0 %v2842, 126
    %v2852 = vpop.permute.xlu0 %2851
    %2853 = vrot.lane.b32.xlu0 %v2843, 126
    %v2854 = vpop.permute.xlu0 %2853
    %2855 = vrot.lane.b32.xlu0 %v2844, 126
    %v2856 = vpop.permute.xlu0 %2855
    %v2861 = vadd.f32 %v2757, %v2850
    %v2862 = vadd.f32 %v2758, %v2852
    %v2863 = vadd.f32 %v2759, %v2854
    %v2864 = vadd.f32 %v2760, %v2856
    %s2865 = sld [smem:[#allocation2 + $0x88]]
    %v2866 = vstv %s2865
    %v2867 = vmul.f32 %v2866, %v2153
    %v2868 = vmul.f32 %v2866, %v2154
    %v2869 = vmul.f32 %v2866, %v2155
    %v2870 = vmul.f32 %v2866, %v2156
    %2875 = vrot.lane.b32.xlu0 %v2867, 126
    %v2876 = vpop.permute.xlu0 %2875
    %2877 = vrot.lane.b32.xlu0 %v2868, 126
    %v2878 = vpop.permute.xlu0 %2877
    %2879 = vrot.lane.b32.xlu0 %v2869, 126
    %v2880 = vpop.permute.xlu0 %2879
    %2881 = vrot.lane.b32.xlu0 %v2870, 126
    %v2882 = vpop.permute.xlu0 %2881
    %v2887 = vadd.f32 %v2783, %v2876
    %v2888 = vadd.f32 %v2784, %v2878
    %v2889 = vadd.f32 %v2785, %v2880
    %v2890 = vadd.f32 %v2786, %v2882
    %s2891 = sld [smem:[#allocation2 + $0x89]]
    %v2892 = vstv %s2891
    %v2893 = vmul.f32 %v2892, %v2153
    %v2894 = vmul.f32 %v2892, %v2154
    %v2895 = vmul.f32 %v2892, %v2155
    %v2896 = vmul.f32 %v2892, %v2156
    %2901 = vrot.lane.b32.xlu0 %v2893, 126
    %v2902 = vpop.permute.xlu0 %2901
    %2903 = vrot.lane.b32.xlu0 %v2894, 126
    %v2904 = vpop.permute.xlu0 %2903
    %2905 = vrot.lane.b32.xlu0 %v2895, 126
    %v2906 = vpop.permute.xlu0 %2905
    %2907 = vrot.lane.b32.xlu0 %v2896, 126
    %v2908 = vpop.permute.xlu0 %2907
    %v2913 = vadd.f32 %v2809, %v2902
    %v2914 = vadd.f32 %v2810, %v2904
    %v2915 = vadd.f32 %v2811, %v2906
    %v2916 = vadd.f32 %v2812, %v2908
    %s2917 = sld [smem:[#allocation2 + $0x8a]]
    %v2918 = vstv %s2917
    %v2919 = vmul.f32 %v2918, %v2153
    %v2920 = vmul.f32 %v2918, %v2154
    %v2921 = vmul.f32 %v2918, %v2155
    %v2922 = vmul.f32 %v2918, %v2156
    %2927 = vrot.lane.b32.xlu0 %v2919, 126
    %v2928 = vpop.permute.xlu0 %2927
    %2929 = vrot.lane.b32.xlu0 %v2920, 126
    %v2930 = vpop.permute.xlu0 %2929
    %2931 = vrot.lane.b32.xlu0 %v2921, 126
    %v2932 = vpop.permute.xlu0 %2931
    %2933 = vrot.lane.b32.xlu0 %v2922, 126
    %v2934 = vpop.permute.xlu0 %2933
    %v2939 = vadd.f32 %v2835, %v2928
    %v2940 = vadd.f32 %v2836, %v2930
    %v2941 = vadd.f32 %v2837, %v2932
    %v2942 = vadd.f32 %v2838, %v2934
    %s2943 = sld [smem:[#allocation2 + $0x8b]]
    %v2944 = vstv %s2943
    %v2945 = vmul.f32 %v2944, %v2153
    %v2946 = vmul.f32 %v2944, %v2154
    %v2947 = vmul.f32 %v2944, %v2155
    %v2948 = vmul.f32 %v2944, %v2156
    %2953 = vrot.lane.b32.xlu0 %v2945, 126
    %v2954 = vpop.permute.xlu0 %2953
    %2955 = vrot.lane.b32.xlu0 %v2946, 126
    %v2956 = vpop.permute.xlu0 %2955
    %2957 = vrot.lane.b32.xlu0 %v2947, 126
    %v2958 = vpop.permute.xlu0 %2957
    %2959 = vrot.lane.b32.xlu0 %v2948, 126
    %v2960 = vpop.permute.xlu0 %2959
    %v2965 = vadd.f32 %v2861, %v2954
    %v2966 = vadd.f32 %v2862, %v2956
    %v2967 = vadd.f32 %v2863, %v2958
    %v2968 = vadd.f32 %v2864, %v2960
    %s2969 = sld [smem:[#allocation2 + $0x8c]]
    %v2970 = vstv %s2969
    %v2971 = vmul.f32 %v2970, %v2197
    %v2972 = vmul.f32 %v2970, %v2198
    %v2973 = vmul.f32 %v2970, %v2199
    %v2974 = vmul.f32 %v2970, %v2200
    %2979 = vrot.lane.b32.xlu0 %v2971, 126
    %v2980 = vpop.permute.xlu0 %2979
    %2981 = vrot.lane.b32.xlu0 %v2972, 126
    %v2982 = vpop.permute.xlu0 %2981
    %2983 = vrot.lane.b32.xlu0 %v2973, 126
    %v2984 = vpop.permute.xlu0 %2983
    %2985 = vrot.lane.b32.xlu0 %v2974, 126
    %v2986 = vpop.permute.xlu0 %2985
    %v2991 = vadd.f32 %v2887, %v2980
    %v2992 = vadd.f32 %v2888, %v2982
    %v2993 = vadd.f32 %v2889, %v2984
    %v2994 = vadd.f32 %v2890, %v2986
    %s2995 = sld [smem:[#allocation2 + $0x8d]]
    %v2996 = vstv %s2995
    %v2997 = vmul.f32 %v2996, %v2197
    %v2998 = vmul.f32 %v2996, %v2198
    %v2999 = vmul.f32 %v2996, %v2199
    %v3000 = vmul.f32 %v2996, %v2200
    %3005 = vrot.lane.b32.xlu0 %v2997, 126
    %v3006 = vpop.permute.xlu0 %3005
    %3007 = vrot.lane.b32.xlu0 %v2998, 126
    %v3008 = vpop.permute.xlu0 %3007
    %3009 = vrot.lane.b32.xlu0 %v2999, 126
    %v3010 = vpop.permute.xlu0 %3009
    %3011 = vrot.lane.b32.xlu0 %v3000, 126
    %v3012 = vpop.permute.xlu0 %3011
    %v3017 = vadd.f32 %v2913, %v3006
    %v3018 = vadd.f32 %v2914, %v3008
    %v3019 = vadd.f32 %v2915, %v3010
    %v3020 = vadd.f32 %v2916, %v3012
    %s3021 = sld [smem:[#allocation2 + $0x8e]]
    %v3022 = vstv %s3021
    %v3023 = vmul.f32 %v3022, %v2197
    %v3024 = vmul.f32 %v3022, %v2198
    %v3025 = vmul.f32 %v3022, %v2199
    %v3026 = vmul.f32 %v3022, %v2200
    %3031 = vrot.lane.b32.xlu0 %v3023, 126
    %v3032 = vpop.permute.xlu0 %3031
    %3033 = vrot.lane.b32.xlu0 %v3024, 126
    %v3034 = vpop.permute.xlu0 %3033
    %3035 = vrot.lane.b32.xlu0 %v3025, 126
    %v3036 = vpop.permute.xlu0 %3035
    %3037 = vrot.lane.b32.xlu0 %v3026, 126
    %v3038 = vpop.permute.xlu0 %3037
    %v3043 = vadd.f32 %v2939, %v3032
    %v3044 = vadd.f32 %v2940, %v3034
    %v3045 = vadd.f32 %v2941, %v3036
    %v3046 = vadd.f32 %v2942, %v3038
    %s3047 = sld [smem:[#allocation2 + $0x8f]]
    %v3048 = vstv %s3047
    %v3049 = vmul.f32 %v3048, %v2197
    %v3050 = vmul.f32 %v3048, %v2198
    %v3051 = vmul.f32 %v3048, %v2199
    %v3052 = vmul.f32 %v3048, %v2200
    %3057 = vrot.lane.b32.xlu0 %v3049, 126
    %v3058 = vpop.permute.xlu0 %3057
    %3059 = vrot.lane.b32.xlu0 %v3050, 126
    %v3060 = vpop.permute.xlu0 %3059
    %3061 = vrot.lane.b32.xlu0 %v3051, 126
    %v3062 = vpop.permute.xlu0 %3061
    %3063 = vrot.lane.b32.xlu0 %v3052, 126
    %v3064 = vpop.permute.xlu0 %3063
    %v3069 = vadd.f32 %v2965, %v3058
    %v3070 = vadd.f32 %v2966, %v3060
    %v3071 = vadd.f32 %v2967, %v3062
    %v3072 = vadd.f32 %v2968, %v3064
    %s3073 = sld [smem:[#allocation5]]
    %v3074 = vstv %s3073
    %v3075 = vadd.f32 %v2991, %v3074
    %v3076 = vadd.f32 %v2992, %v3074
    %v3077 = vadd.f32 %v2993, %v3074
    %v3078 = vadd.f32 %v2994, %v3074
    %vm3079 = vcmask 130048
    %3080 = vst.msk [vmem:[#allocation7] sm:$0xff] %vm3079, %v3075
    %3081 = vst.msk [vmem:[#allocation7 + $0x8] sm:$0xff] %vm3079, %v3076
    %3082 = vst.msk [vmem:[#allocation7 + $0x40] sm:$0xff] %vm3079, %v3077
    %3083 = vst.msk [vmem:[#allocation7 + $0x48] sm:$0xff] %vm3079, %v3078
    %v3084 = vld [vmem:[%s1] sm:$0xff]
    %v3085 = vld [vmem:[%s1 + $0x8] sm:$0xff]
    %v3086 = vld [vmem:[%s1 + $0x40] sm:$0xff]
    %v3087 = vld [vmem:[%s1 + $0x48] sm:$0xff]
    %v3088 = vsub.f32 %v3075, %v3084
    %v3089 = vsub.f32 %v3076, %v3085
    %v3090 = vsub.f32 %v3077, %v3086
    %v3091 = vsub.f32 %v3078, %v3087
    %v3092 = vand.u32 2147483647, %v3088
    %v3093 = vand.u32 2147483647, %v3089
    %v3094 = vand.u32 2147483647, %v3090
    %v3095 = vand.u32 2147483647, %v3091
    %v3096 = vsel %vm3079, %v3092, 0.0
    %v3097 = vsel %vm3079, %v3093, 0.0
    %v3098 = vadd.f32 %v3096, %v3097
    %v3099 = vsel %vm3079, %v3094, 0.0
    %v3100 = vadd.f32 %v3098, %v3099
    %v3101 = vsel %vm3079, %v3095, 0.0
    %v3102 = vadd.f32 %v3100, %v3101
    %3103 = vadd.xlane.f32.xlu0 %v3102
    %v3104 = vpop.xlane.xlu0 %3103
    %v3105 = vrot.slane %v3104, 4
    %v3106 = vadd.f32 %v3104, %v3105
    %v3107 = vrot.slane %v3106, 2
    %v3108 = vadd.f32 %v3106, %v3107
    %v3109 = vrot.slane %v3108, 1
    %v3110 = vadd.f32 %v3108, %v3109
    %s3111 = vtos %v3110
    %s3112 = sadd.f32 %s3111, 0.0
    %s3113 = sld [smem:[#allocation5 + $0x1]]
    %v3114 = vstv %s3113
    %v3115 = vadd.f32 %v3017, %v3114
    %v3116 = vadd.f32 %v3018, %v3114
    %v3117 = vadd.f32 %v3019, %v3114
    %v3118 = vadd.f32 %v3020, %v3114
    %s3119 = scalar_lea.vmem [#allocation7], 16
    %3120 = vst.msk [vmem:[%s3119] sm:$0xff] %vm3079, %v3115
    %3121 = vst.msk [vmem:[%s3119 + $0x8] sm:$0xff] %vm3079, %v3116
    %3122 = vst.msk [vmem:[%s3119 + $0x40] sm:$0xff] %vm3079, %v3117
    %3123 = vst.msk [vmem:[%s3119 + $0x48] sm:$0xff] %vm3079, %v3118
    %s3124 = scalar_lea.vmem %s1, 16
    %v3125 = vld [vmem:[%s3124] sm:$0xff]
    %v3126 = vld [vmem:[%s3124 + $0x8] sm:$0xff]
    %v3127 = vld [vmem:[%s3124 + $0x40] sm:$0xff]
    %v3128 = vld [vmem:[%s3124 + $0x48] sm:$0xff]
    %v3129 = vsub.f32 %v3115, %v3125
    %v3130 = vsub.f32 %v3116, %v3126
    %v3131 = vsub.f32 %v3117, %v3127
    %v3132 = vsub.f32 %v3118, %v3128
    %v3133 = vand.u32 2147483647, %v3129
    %v3134 = vand.u32 2147483647, %v3130
    %v3135 = vand.u32 2147483647, %v3131
    %v3136 = vand.u32 2147483647, %v3132
    %v3137 = vsel %vm3079, %v3133, 0.0
    %v3138 = vsel %vm3079, %v3134, 0.0
    %v3139 = vadd.f32 %v3137, %v3138
    %v3140 = vsel %vm3079, %v3135, 0.0
    %v3141 = vadd.f32 %v3139, %v3140
    %v3142 = vsel %vm3079, %v3136, 0.0
    %v3143 = vadd.f32 %v3141, %v3142
    %3144 = vadd.xlane.f32.xlu0 %v3143
    %v3145 = vpop.xlane.xlu0 %3144
    %v3146 = vrot.slane %v3145, 4
    %v3147 = vadd.f32 %v3145, %v3146
    %v3148 = vrot.slane %v3147, 2
    %v3149 = vadd.f32 %v3147, %v3148
    %v3150 = vrot.slane %v3149, 1
    %v3151 = vadd.f32 %v3149, %v3150
    %s3152 = vtos %v3151
    %s3153 = sadd.f32 %s3112, %s3152
    %s3154 = sld [smem:[#allocation5 + $0x2]]
    %v3155 = vstv %s3154
    %v3156 = vadd.f32 %v3043, %v3155
    %v3157 = vadd.f32 %v3044, %v3155
    %v3158 = vadd.f32 %v3045, %v3155
    %v3159 = vadd.f32 %v3046, %v3155
    %s3160 = scalar_lea.vmem [#allocation7], 32
    %3161 = vst.msk [vmem:[%s3160] sm:$0xff] %vm3079, %v3156
    %3162 = vst.msk [vmem:[%s3160 + $0x8] sm:$0xff] %vm3079, %v3157
    %3163 = vst.msk [vmem:[%s3160 + $0x40] sm:$0xff] %vm3079, %v3158
    %3164 = vst.msk [vmem:[%s3160 + $0x48] sm:$0xff] %vm3079, %v3159
    %s3165 = scalar_lea.vmem %s1, 32
    %v3166 = vld [vmem:[%s3165] sm:$0xff]
    %v3167 = vld [vmem:[%s3165 + $0x8] sm:$0xff]
    %v3168 = vld [vmem:[%s3165 + $0x40] sm:$0xff]
    %v3169 = vld [vmem:[%s3165 + $0x48] sm:$0xff]
    %v3170 = vsub.f32 %v3156, %v3166
    %v3171 = vsub.f32 %v3157, %v3167
    %v3172 = vsub.f32 %v3158, %v3168
    %v3173 = vsub.f32 %v3159, %v3169
    %v3174 = vand.u32 2147483647, %v3170
    %v3175 = vand.u32 2147483647, %v3171
    %v3176 = vand.u32 2147483647, %v3172
    %v3177 = vand.u32 2147483647, %v3173
    %v3178 = vsel %vm3079, %v3174, 0.0
    %v3179 = vsel %vm3079, %v3175, 0.0
    %v3180 = vadd.f32 %v3178, %v3179
    %v3181 = vsel %vm3079, %v3176, 0.0
    %v3182 = vadd.f32 %v3180, %v3181
    %v3183 = vsel %vm3079, %v3177, 0.0
    %v3184 = vadd.f32 %v3182, %v3183
    %3185 = vadd.xlane.f32.xlu0 %v3184
    %v3186 = vpop.xlane.xlu0 %3185
    %v3187 = vrot.slane %v3186, 4
    %v3188 = vadd.f32 %v3186, %v3187
    %v3189 = vrot.slane %v3188, 2
    %v3190 = vadd.f32 %v3188, %v3189
    %v3191 = vrot.slane %v3190, 1
    %v3192 = vadd.f32 %v3190, %v3191
    %s3193 = vtos %v3192
    %s3194 = sadd.f32 %s3153, %s3193
    %s3195 = sld [smem:[#allocation5 + $0x3]]
    %v3196 = vstv %s3195
    %v3197 = vadd.f32 %v3069, %v3196
    %v3198 = vadd.f32 %v3070, %v3196
    %v3199 = vadd.f32 %v3071, %v3196
    %v3200 = vadd.f32 %v3072, %v3196
    %s3201 = scalar_lea.vmem [#allocation7], 48
    %3202 = vst.msk [vmem:[%s3201] sm:$0xff] %vm3079, %v3197
    %3203 = vst.msk [vmem:[%s3201 + $0x8] sm:$0xff] %vm3079, %v3198
    %3204 = vst.msk [vmem:[%s3201 + $0x40] sm:$0xff] %vm3079, %v3199
    %3205 = vst.msk [vmem:[%s3201 + $0x48] sm:$0xff] %vm3079, %v3200
    %s3206 = scalar_lea.vmem %s1, 48
    %v3207 = vld [vmem:[%s3206] sm:$0xff]
    %v3208 = vld [vmem:[%s3206 + $0x8] sm:$0xff]
    %v3209 = vld [vmem:[%s3206 + $0x40] sm:$0xff]
    %v3210 = vld [vmem:[%s3206 + $0x48] sm:$0xff]
    %v3211 = vsub.f32 %v3197, %v3207
    %v3212 = vsub.f32 %v3198, %v3208
    %v3213 = vsub.f32 %v3199, %v3209
    %v3214 = vsub.f32 %v3200, %v3210
    %v3215 = vand.u32 2147483647, %v3211
    %v3216 = vand.u32 2147483647, %v3212
    %v3217 = vand.u32 2147483647, %v3213
    %v3218 = vand.u32 2147483647, %v3214
    %v3219 = vsel %vm3079, %v3215, 0.0
    %v3220 = vsel %vm3079, %v3216, 0.0
    %v3221 = vadd.f32 %v3219, %v3220
    %v3222 = vsel %vm3079, %v3217, 0.0
    %v3223 = vadd.f32 %v3221, %v3222
    %v3224 = vsel %vm3079, %v3218, 0.0
    %v3225 = vadd.f32 %v3223, %v3224
    %3226 = vadd.xlane.f32.xlu0 %v3225
    %v3227 = vpop.xlane.xlu0 %3226
    %v3228 = vrot.slane %v3227, 4
    %v3229 = vadd.f32 %v3227, %v3228
    %v3230 = vrot.slane %v3229, 2
    %v3231 = vadd.f32 %v3229, %v3230
    %v3232 = vrot.slane %v3231, 1
    %v3233 = vadd.f32 %v3231, %v3232
    %s3234 = vtos %v3233
    %s3235 = sadd.f32 %s3194, %s3234
    %s3236 = smul.f32 %s3235, 0.00048828125
    %v3237 = vstv %s3236
    %v3238 = vadd.f32 %v3237, 0.0
    %vm3239 = vcmask 0
    %3240 = vst.msk [vmem:[#allocation8] sm:$0x1] %vm3239, %v3238
    // Predicated region
    $region26: #{conv_l1_forward.1} parent=1 // pred_check
      _
    $region27: #{conv_l1_forward.1} parent=1 // pred_check_branch
      %3242 = sbr.rel (0) target = $region29
    $region28: #{conv_l1_forward.1} parent=1 // pred_region
      %s3244 = ssub.s32 2048, 2048
      %3245 = vsyncadd [#allocation3], %s3244
      %s3246 = sshll.u32 [#allocation7], 4
      %s3247 = int_to_ptr.vmem [resolvable:$true] %s3246
      %3252 = dma.vmem_to_hbm [thread:$0]  %s3247, 2048, %s4, [#allocation3], 128, 128, 8
    $region29: #{conv_l1_forward.1} parent=1 // pred_fallthru
      _
    // Predicated region
    $region30: #{conv_l1_forward.1} parent=1 // pred_check
      _
    $region31: #{conv_l1_forward.1} parent=1 // pred_check_branch
      %3254 = sbr.rel (0) target = $region33
    $region32: #{conv_l1_forward.1} parent=1 // pred_region
      %s3256 = ssub.s32 16, 16
      %3257 = vsyncadd [#allocation9], %s3256
      %s3259 = sshll.u32 [#allocation8], 4
      %s3260 = int_to_ptr.vmem [resolvable:$true] %s3259
      %3262 = dma.vmem_to_hbm [thread:$0]  %s3260, 16, %s5, [#allocation9]
    $region33: #{conv_l1_forward.1} parent=1 // pred_fallthru
      _
    // Predicated region
    $region34: #{conv_l1_forward.1} parent=1 // pred_check
      _
    $region35: #{conv_l1_forward.1} parent=1 // pred_check_branch
      %3264 = sbr.rel (0) target = $region37
    $region36: #{conv_l1_forward.1} parent=1 // pred_region
      %3265 = dma.done [#allocation3], 2048
    $region37: #{conv_l1_forward.1} parent=1 // pred_fallthru
      _
    // Predicated region
    $region38: #{conv_l1_forward.1} parent=1 // pred_check
      _
    $region39: #{conv_l1_forward.1} parent=1 // pred_check_branch
      %3267 = sbr.rel (0) target = $region41
    $region40: #{conv_l1_forward.1} parent=1 // pred_region
      %3268 = dma.done [#allocation9], 16
    $region41: #{conv_l1_forward.1} parent=1 // pred_fallthru
      _
    %3269 = vsyncpa [#allocation3], 1
    %3270 = vsyncpa [#allocation9], 1
    %3271 = vsyncpa [#allocation4], 1
    %3272 = vsyncpa [#allocation6], 1

</llo_original>
